<compile_context>
chip_gen: v5e
topology: v5e:2x2
jax: 0.10.0
libtpu: 0.0.40
codegen_flags: <defaults>
</compile_context>

<pallas_src>
import functools

import jax
import jax.numpy as jnp
from jax.experimental import pallas as pl
from jax.experimental.pallas import tpu as pltpu


# ----------------------------------------------------------------------------
# Static layout of the packed channel-mix weight slab (shared wrapper <-> kernel)
# ----------------------------------------------------------------------------
def _cmix_layout(cin_b, c_b, mip_b, use_short):
    names = ["w_mid", "w11_1", "w11_2", "wh1", "ww1", "wh2", "ww2"]
    sizes = [cin_b, c_b, c_b, mip_b, mip_b, mip_b, mip_b]
    if use_short:
        names.append("short")
        sizes.append(cin_b)
    lay, off = {}, 0
    for n, s in zip(names, sizes):
        lay[n] = (off, s)
        off += s
    return lay


# bias slab column order
_B_IDX = {"b11_1": 0, "b11_2": 1, "bh1": 2, "bw1": 3, "bh2": 4, "bw2": 5, "bsh": 6}


# ----------------------------------------------------------------------------
# Fused Pallas kernel: one grid step = B images, everything resident in VMEM.
# Activation layout: (C*B, H*W) -- rows ordered (channel, image), lanes = space.
# ----------------------------------------------------------------------------
def _double_conv_kernel(x_ref, w_cmix, b_cmix, w_se, w_casc, sel_pool, sel_bcast,
                        msk, o_ref, xc_scr, *,
                        c_b, cin_b, mip_b, m_b, H, W, use_short, mxu_bf16):
    f32 = jnp.float32
    L = H * W
    lay = _cmix_layout(cin_b, c_b, mip_b, use_short)

    def wseg(name):                       # static column view into the weight slab
        off, size = lay[name]
        return w_cmix[:, off:off + size]

    def bcol(name):                       # static column view into the bias slab
        j = _B_IDX[name]
        return b_cmix[:, j:j + 1]

    def mm(a, b, low=True):
        if low and mxu_bf16:              # bf16 MXU operands, f32 accumulation
            a = a.astype(jnp.bfloat16)
            b = b.astype(jnp.bfloat16)
        return jax.lax.dot_general(a, b, (((1,), (0,)), ((), ())),
                                   preferred_element_type=f32)

    def inorm(y):                         # InstanceNorm(affine=False), one pass
        mu = jnp.mean(y, axis=-1, keepdims=True)
        ex2 = jnp.mean(y * y, axis=-1, keepdims=True)
        return (y - mu) * jax.lax.rsqrt(ex2 - mu * mu + 1e-5)

    x_in = x_ref[...]                                                 # (Cin*B, L)

    # conv1x1_mid + InstanceNorm + ReLU (bias is a no-op before InstanceNorm)
    xx = jnp.maximum(inorm(mm(wseg("w_mid"), x_in)), 0.0)             # (C*B, L)

    # host-built selectors (loaded once per grid step)
    Eh = sel_bcast[0:H, :]                                            # (H, L)
    Ew = sel_bcast[H:H + W, :]                                        # (W, L)
    Ppool = sel_pool[...]                                             # (L, H+W)

    def cascade(src, casc_idx, along_w):
        """Serial 5-conv chain; branch outputs go to VMEM scratch via slice stores."""
        if along_w:                       # [1,3] conv: taps along W
            m_lo, m_hi, shift = msk[0:1, :], msk[1:2, :], 1
        else:                             # [3,1] conv: taps along H
            m_lo, m_hi, shift = msk[2:3, :], msk[3:4, :], W
        xc_scr[0:m_b, :] = src[0:m_b, :]
        prev = None
        for i in range(5):
            xi = src[(i + 1) * m_b:(i + 2) * m_b, :]
            if prev is not None:
                xi = xi + prev
            xm = pltpu.roll(xi, shift, 1) * m_lo        # tap at (pos-1), zero padded
            xp = pltpu.roll(xi, L - shift, 1) * m_hi    # tap at (pos+1), zero padded
            base = (casc_idx * 5 + i) * 3 * m_b
            y = (mm(w_casc[:, base:base + m_b], xm)
                 + mm(w_casc[:, base + m_b:base + 2 * m_b], xi)
                 + mm(w_casc[:, base + 2 * m_b:base + 3 * m_b], xp))
            y = jnp.maximum(inorm(y), 0.0)
            xc_scr[(i + 1) * m_b:(i + 2) * m_b, :] = y
            prev = y
        return xc_scr[...]                                            # (C*B, L)

    def coord_att(x, w1, wh, bh, ww, bw):
        yp = mm(x, Ppool)                                 # (C*B, H+W) pooled means
        y = inorm(mm(w1, yp))                             # (mip*B, H+W); bias dropped
        y = y * jnp.clip(y + 3.0, 0.0, 6.0) * (1.0 / 6.0)              # h_swish
        a_h = jax.nn.sigmoid(mm(wh, y[:, :H]) + bh)       # (C*B, H)
        a_w = jax.nn.sigmoid(mm(ww, y[:, H:]) + bw)       # (C*B, W)
        return x * mm(a_w, Ew) * mm(a_h, Eh) + x          # (C*B, L)

    # first cascade ([1,3]) + CoordAtt + conv1x1_1 (residual path -> f32 matmul)
    xc1 = cascade(xx, 0, along_w=True)
    xxx = coord_att(xc1, w_se[:, 0:c_b],
                    wseg("wh1"), bcol("bh1"), wseg("ww1"), bcol("bw1"))
    xxx = mm(wseg("w11_1"), xxx, low=False) + bcol("b11_1")

    # second cascade ([3,1]) + CoordAtt + conv1x1_2 (residual path -> f32 matmul)
    xc2 = cascade(xxx, 1, along_w=False)
    xxxx = coord_att(xc2, w_se[:, c_b:2 * c_b],
                     wseg("wh2"), bcol("bh2"), wseg("ww2"), bcol("bw2"))
    xxxx = mm(wseg("w11_2"), xxxx, low=False) + bcol("b11_2")

    if use_short:
        shortcut = mm(wseg("short"), x_in, low=False) + bcol("bsh")
    else:
        shortcut = x_in

    o_ref[...] = jnp.maximum(xxxx + shortcut + xxx, 0.0).astype(o_ref.dtype)


# ----------------------------------------------------------------------------
# Wrapper: host-side weight / selector packing + a single pallas_call.
# ----------------------------------------------------------------------------
def _compiler_params():
    try:
        return pltpu.CompilerParams(dimension_semantics=("parallel",))
    except Exception:
        return None


def double_conv_forward(x, p, in_ch, out_ch, images_per_step=None, mxu_bf16=True):
    N, Cin, H, W = x.shape
    assert Cin == in_ch
    assert out_ch % 6 == 0
    use_short = in_ch > out_ch
    if not use_short:
        # residual `xxxx + x + xxx` needs matching channels (as in the nn.Module)
        assert in_ch == out_ch, "Double_conv requires in_ch == out_ch or in_ch > out_ch"

    mid = out_ch // 6
    C = out_ch
    L = H * W
    mip = p["se1"]["w1"].shape[0]

    if images_per_step is None:
        images_per_step = 1
        if N >= 4:
            for b in (8, 4, 2):        # fatten the MXU M dim but keep grid >= 2 (v7x)
                if N % b == 0 and N // b >= 2:
                    images_per_step = b
                    break
    B = images_per_step
    assert N % B == 0
    G = N // B

    c_b, cin_b, mip_b, m_b = C * B, Cin * B, mip * B, mid * B
    f32 = jnp.float32

    # ---- host-side weight packing (tiny reshapes, traced once) -------------
    def kr(w):
        """kron(w, I_B): block-diagonal weight for rows ordered (channel, image)."""
        w = w.astype(f32)
        if B == 1:
            return w
        o, i = w.shape
        eye = jnp.eye(B, dtype=f32)
        return (w[:, None, :, None] * eye[None, :, None, :]).reshape(o * B, i * B)

    def krb(b):
        return jnp.repeat(b.astype(f32).reshape(-1), B).reshape(-1, 1)

    def w2(name):
        w = p[name + "_w"]
        return w.reshape(w.shape[0], w.shape[1])

    lay = _cmix_layout(cin_b, c_b, mip_b, use_short)
    segs = {
        "w_mid": kr(w2("conv1x1_mid")),
        "w11_1": kr(w2("conv1x1_1")),
        "w11_2": kr(w2("conv1x1_2")),
        "wh1": kr(p["se1"]["wh"].reshape(C, mip)),
        "ww1": kr(p["se1"]["ww"].reshape(C, mip)),
        "wh2": kr(p["se2"]["wh"].reshape(C, mip)),
        "ww2": kr(p["se2"]["ww"].reshape(C, mip)),
    }
    if use_short:
        segs["short"] = kr(w2("short"))
    for n, (off, sz) in lay.items():
        assert segs[n].shape == (c_b, sz)
    w_cmix = jnp.concatenate([segs[n] for n in lay], axis=1)

    bias_cols = [krb(p["conv1x1_1_b"]), krb(p["conv1x1_2_b"]),
                 krb(p["se1"]["bh"]), krb(p["se1"]["bw"]),
                 krb(p["se2"]["bh"]), krb(p["se2"]["bw"])]
    if use_short:
        bias_cols.append(krb(p["short_b"]))
    b_cmix = jnp.concatenate(bias_cols, axis=1)

    w_se = jnp.concatenate([kr(p["se1"]["w1"].reshape(mip, C)),
                            kr(p["se2"]["w1"].reshape(mip, C))], axis=1)

    c1_names = ["conv1x3_1", "conv3x1_1", "conv3x3_1", "conv3x3_1_1", "conv3x3_2_1"]
    c2_names = ["conv1x3_2", "conv3x1_2", "conv3x3_2", "conv3x3_1_2", "conv3x3_2_2"]
    casc_blocks = []
    for names, one_by_three in ((c1_names, True), (c2_names, False)):
        for nm in names:
            w4 = p[nm + "_w"]
            for t in range(3):
                wt = w4[:, :, 0, t] if one_by_three else w4[:, :, t, 0]
                casc_blocks.append(kr(wt))
    w_casc = jnp.concatenate(casc_blocks, axis=1)           # (mid*B, 30*mid*B)

    # ---- host-side selectors / boundary masks (replicated constants) -------
    pos = jnp.arange(L, dtype=jnp.int32)
    rr, cc = pos // W, pos % W
    ph = (rr[:, None] == jnp.arange(H)[None, :]).astype(f32) * (1.0 / W)
    pw = (cc[:, None] == jnp.arange(W)[None, :]).astype(f32) * (1.0 / H)
    sel_pool = jnp.concatenate([ph, pw], axis=1)             # (L, H+W), scales folded
    eh = (jnp.arange(H)[:, None] == rr[None, :]).astype(f32)
    ew = (jnp.arange(W)[:, None] == cc[None, :]).astype(f32)
    sel_bcast = jnp.concatenate([eh, ew], axis=0)            # (H+W, L)
    msk = jnp.stack([cc >= 1, cc <= W - 2, rr >= 1, rr <= H - 2]).astype(f32)

    # ---- activation layout: (grid, C*B, H*W); rows ordered (channel, image) -
    x_packed = (x.astype(f32).reshape(G, B, Cin, L)
                .transpose(0, 2, 1, 3).reshape(G, cin_b, L))

    params = [w_cmix, b_cmix, w_se, w_casc, sel_pool, sel_bcast, msk]

    in_specs = [pl.BlockSpec((None, cin_b, L), lambda g: (g, 0, 0))]
    in_specs += [pl.BlockSpec(q.shape, lambda g: (0, 0)) for q in params]

    kernel = functools.partial(
        _double_conv_kernel, c_b=c_b, cin_b=cin_b, mip_b=mip_b, m_b=m_b,
        H=H, W=W, use_short=use_short, mxu_bf16=mxu_bf16)

    cp = _compiler_params()
    extra = {} if cp is None else {"compiler_params": cp}
    # NOTE(v7x): at these shapes the fully-fused layer is far under the 64 MiB
    # VMEM budget; set vmem_limit_bytes and re-audit before instantiating with
    # much larger H*W / out_ch.
    out = pl.pallas_call(
        kernel,
        out_shape=jax.ShapeDtypeStruct((G, c_b, L), f32),
        grid=(G,),
        in_specs=in_specs,
        out_specs=pl.BlockSpec((None, c_b, L), lambda g: (g, 0, 0)),
        scratch_shapes=[pltpu.VMEM((c_b, L), f32)],
        **extra,
    )(x_packed, *params)

    return (out.reshape(G, C, B, L).transpose(0, 2, 1, 3).reshape(N, C, H, W))


# ----------------------------------------------------------------------------
# Pure-JAX reference (mirrors the PyTorch forward) for correctness checking.
# ----------------------------------------------------------------------------
def _conv2d_ref(x, w, b, pad):
    out = jax.lax.conv_general_dilated(
        x, w, (1, 1), ((pad[0], pad[0]), (pad[1], pad[1])),
        dimension_numbers=("NCHW", "OIHW", "NCHW"),
        precision=jax.lax.Precision.HIGHEST)
    return out + b.reshape(1, -1, 1, 1)


def _inorm_ref(x):
    mu = jnp.mean(x, axis=(2, 3), keepdims=True)
    var = jnp.mean((x - mu) ** 2, axis=(2, 3), keepdims=True)
    return (x - mu) * jax.lax.rsqrt(var + 1e-5)


def _conv_block_ref(x, w, b, size):
    pad = ((size[0] - 1) // 2, (size[1] - 1) // 2)
    return jnp.maximum(_inorm_ref(_conv2d_ref(x, w, b, pad)), 0.0)


def _coordatt_ref(x, q):
    N, C, H, W = x.shape
    x_h = jnp.mean(x, axis=3, keepdims=True)                               # (N,C,H,1)
    x_w = jnp.transpose(jnp.mean(x, axis=2, keepdims=True), (0, 1, 3, 2))  # (N,C,W,1)
    y = jnp.concatenate([x_h, x_w], axis=2)                                # (N,C,H+W,1)
    y = _inorm_ref(_conv2d_ref(y, q["w1"], q["b1"], (0, 0)))
    y = y * jnp.clip(y + 3.0, 0.0, 6.0) / 6.0
    yh = y[:, :, :H, :]
    yw = jnp.transpose(y[:, :, H:, :], (0, 1, 3, 2))
    a_h = jax.nn.sigmoid(_conv2d_ref(yh, q["wh"], q["bh"], (0, 0)))        # (N,C,H,1)
    a_w = jax.nn.sigmoid(_conv2d_ref(yw, q["ww"], q["bw"], (0, 0)))        # (N,C,1,W)
    return x * a_w * a_h + x


def double_conv_ref(x, p, in_ch, out_ch):
    mid = out_ch // 6

    def run_cascade(src, names, size):
        xs = [src[:, i * mid:(i + 1) * mid] for i in range(6)]
        outs, prev = [xs[0]], None
        for i, nm in enumerate(names):
            xi = xs[i + 1] if prev is None else xs[i + 1] + prev
            y = _conv_block_ref(xi, p[nm + "_w"], p[nm + "_b"], size)
            outs.append(y)
            prev = y
        return jnp.concatenate(outs, axis=1)

    xx = _conv_block_ref(x, p["conv1x1_mid_w"], p["conv1x1_mid_b"], (1, 1))
    xc1 = run_cascade(xx, ["conv1x3_1", "conv3x1_1", "conv3x3_1",
                           "conv3x3_1_1", "conv3x3_2_1"], (1, 3))
    xxx = _coordatt_ref(xc1, p["se1"])
    xxx = _conv2d_ref(xxx, p["conv1x1_1_w"], p["conv1x1_1_b"], (0, 0))
    xc2 = run_cascade(xxx, ["conv1x3_2", "conv3x1_2", "conv3x3_2",
                            "conv3x3_1_2", "conv3x3_2_2"], (3, 1))
    xxxx = _coordatt_ref(xc2, p["se2"])
    xxxx = _conv2d_ref(xxxx, p["conv1x1_2_w"], p["conv1x1_2_b"], (0, 0))
    if in_ch > out_ch:
        x = _conv2d_ref(x, p["short_w"], p["short_b"], (0, 0))
    return jnp.maximum(xxxx + x + xxx, 0.0)


# ----------------------------------------------------------------------------
# Deterministic synthetic parameters (shapes follow the nn.Module).
# ----------------------------------------------------------------------------
def init_params(key, in_ch, out_ch):
    mid = out_ch // 6
    keys = iter(jax.random.split(key, 64))

    def conv_p(cout, cin, kh, kw):
        kw_, kb_ = jax.random.split(next(keys))
        scale = 1.0 / float(cin * kh * kw) ** 0.5
        w = jax.random.normal(kw_, (cout, cin, kh, kw), jnp.float32) * scale
        b = jax.random.normal(kb_, (cout,), jnp.float32) * 0.05
        return w, b

    p = {}
    p["conv1x1_mid_w"], p["conv1x1_mid_b"] = conv_p(out_ch, in_ch, 1, 1)
    p["conv1x1_1_w"], p["conv1x1_1_b"] = conv_p(out_ch, out_ch, 1, 1)
    p["conv1x1_2_w"], p["conv1x1_2_b"] = conv_p(out_ch, out_ch, 1, 1)
    for name in ["conv1x3_1", "conv3x1_1", "conv3x3_1", "conv3x3_1_1", "conv3x3_2_1"]:
        p[name + "_w"], p[name + "_b"] = conv_p(mid, mid, 1, 3)
    for name in ["conv1x3_2", "conv3x1_2", "conv3x3_2", "conv3x3_1_2", "conv3x3_2_2"]:
        p[name + "_w"], p[name + "_b"] = conv_p(mid, mid, 3, 1)
    if in_ch > out_ch:
        p["short_w"], p["short_b"] = conv_p(out_ch, in_ch, 1, 1)

    mip = max(16, out_ch // 32)
    for se in ["se1", "se2"]:
        w1, b1 = conv_p(mip, out_ch, 1, 1)
        wh, bh = conv_p(out_ch, mip, 1, 1)
        ww, bw = conv_p(out_ch, mip, 1, 1)
        p[se] = {"w1": w1, "b1": b1, "wh": wh, "bh": bh, "ww": ww, "bw": bw}
    return p


# ----------------------------------------------------------------------------
if __name__ == "__main__":
    IN_CH, OUT_CH = 12, 12          # out_ch divisible by 6 (mid_mid = 2)
    H, W = 16, 16

    key = jax.random.PRNGKey(0)
    k_x1, k_x2, k_p = jax.random.split(key, 3)
    params = init_params(k_p, IN_CH, OUT_CH)

    # --- check 1: single image per step (grid=2), f32 MXU operands ----------
    #     proves exact semantics against the high-precision reference.
    x1 = jax.random.normal(k_x1, (2, IN_CH, H, W), jnp.float32)
    fwd_f32 = jax.jit(functools.partial(double_conv_forward, in_ch=IN_CH,
                                        out_ch=OUT_CH, images_per_step=1,
                                        mxu_bf16=False))
    out1 = jax.block_until_ready(fwd_f32(x1, params))
    ref1 = jax.block_until_ready(
        jax.jit(functools.partial(double_conv_ref, in_ch=IN_CH, out_ch=OUT_CH))(x1, params))
    assert out1.shape == (2, OUT_CH, H, W)
    assert bool(jnp.all(jnp.isfinite(out1)))
    assert bool(jnp.all(out1 >= 0.0))                   # final ReLU
    err1 = float(jnp.max(jnp.abs(out1 - ref1)))
    assert err1 < 5e-2, f"f32 path: max abs error vs reference = {err1}"

    # --- check 2: batched path (2 images / grid step, grid=2), bf16 MXU -----
    #     tolerance sized for bf16 matmul operands with f32 accumulation.
    x2 = jax.random.normal(k_x2, (4, IN_CH, H, W), jnp.float32)
    fwd_bf16 = jax.jit(functools.partial(double_conv_forward, in_ch=IN_CH,
                                         out_ch=OUT_CH, mxu_bf16=True))
    out2 = jax.block_until_ready(fwd_bf16(x2, params))
    ref2 = jax.block_until_ready(
        jax.jit(functools.partial(double_conv_ref, in_ch=IN_CH, out_ch=OUT_CH))(x2, params))
    assert out2.shape == (4, OUT_CH, H, W)
    assert bool(jnp.all(jnp.isfinite(out2)))
    assert bool(jnp.all(out2 >= 0.0))
    diff = out2 - ref2
    rel_f = float(jnp.sqrt(jnp.sum(diff * diff)) / (jnp.sqrt(jnp.sum(ref2 * ref2)) + 1e-6))
    max_abs = float(jnp.max(jnp.abs(diff)))
    assert rel_f < 5e-2 and max_abs < 3e-1, \
        f"bf16 path: rel_F={rel_f}, max_abs={max_abs}"

    print("KERNEL_OK")
</pallas_src>

<mosaic_0001>
module attributes {stable_mosaic.version = 11 : i64} {
  func.func @_double_conv_kernel(%arg0: i32, %arg1: memref<1x12x256xf32, #tpu.memory_space<vmem>>, %arg2: memref<12x100xf32, #tpu.memory_space<vmem>>, %arg3: memref<12x6xf32, #tpu.memory_space<vmem>>, %arg4: memref<16x24xf32, #tpu.memory_space<vmem>>, %arg5: memref<2x60xf32, #tpu.memory_space<vmem>>, %arg6: memref<256x32xf32, #tpu.memory_space<vmem>>, %arg7: memref<32x256xf32, #tpu.memory_space<vmem>>, %arg8: memref<4x256xf32, #tpu.memory_space<vmem>>, %arg9: memref<1x12x256xf32, #tpu.memory_space<vmem>>, %arg10: memref<12x256xf32, #tpu.memory_space<vmem>>) attributes {dimension_semantics = [#tpu.dimension_semantics<parallel>], iteration_bounds = array<i64: 2>, scalar_prefetch = 0 : i64, scratch_operands = 1 : i64, tpu.core_type = #tpu.core_type<tc>, window_params = [{transform_indices = @transform_0, window_bounds = array<i64: 1, 12, 256>}, {pipeline_mode = #tpu.pipeline_mode<synchronous>, transform_indices = @transform_1, window_bounds = array<i64: 12, 100>}, {pipeline_mode = #tpu.pipeline_mode<synchronous>, transform_indices = @transform_2, window_bounds = array<i64: 12, 6>}, {pipeline_mode = #tpu.pipeline_mode<synchronous>, transform_indices = @transform_3, window_bounds = array<i64: 16, 24>}, {pipeline_mode = #tpu.pipeline_mode<synchronous>, transform_indices = @transform_4, window_bounds = array<i64: 2, 60>}, {pipeline_mode = #tpu.pipeline_mode<synchronous>, transform_indices = @transform_5, window_bounds = array<i64: 256, 32>}, {pipeline_mode = #tpu.pipeline_mode<synchronous>, transform_indices = @transform_6, window_bounds = array<i64: 32, 256>}, {pipeline_mode = #tpu.pipeline_mode<synchronous>, transform_indices = @transform_7, window_bounds = array<i64: 4, 256>}, {transform_indices = @transform_8, window_bounds = array<i64: 1, 12, 256>}]} {
    %c0 = arith.constant 0 : index
    %c0_0 = arith.constant 0 : index
    %c0_1 = arith.constant 0 : index
    %0 = vector.load %arg1[%c0, %c0_0, %c0_1] : memref<1x12x256xf32, #tpu.memory_space<vmem>>, vector<1x12x256xf32>
    %1 = vector.shape_cast %0 : vector<1x12x256xf32> to vector<12x256xf32>
    %c0_2 = arith.constant 0 : index
    %c0_3 = arith.constant 0 : index
    %2 = vector.load %arg2[%c0_2, %c0_3] : memref<12x100xf32, #tpu.memory_space<vmem>>, vector<12x12xf32>
    %cst = arith.constant dense<0.000000e+00> : vector<12x256xf32>
    %3 = tpu.matmul %2, %1, %cst {dimension_numbers = #tpu.dot_dimension_numbers<[1], [0], [0], [1], [0, 0, 1, 1], [], []>} : vector<12x12xf32>, vector<12x256xf32>, vector<12x256xf32> -> vector<12x256xf32>
    %cst_4 = arith.constant dense<0.000000e+00> : vector<12xf32>
    %4 = vector.multi_reduction <add>, %3, %cst_4 [1] : vector<12x256xf32> to vector<12xf32>
    %5 = vector.shape_cast %4 : vector<12xf32> to vector<12x1xf32>
    %cst_5 = arith.constant 2.560000e+02 : f32
    %6 = vector.broadcast %cst_5 : f32 to vector<12x1xf32>
    %7 = arith.divf %5, %6 : vector<12x1xf32>
    %8 = arith.mulf %3, %3 : vector<12x256xf32>
    %cst_6 = arith.constant dense<0.000000e+00> : vector<12xf32>
    %9 = vector.multi_reduction <add>, %8, %cst_6 [1] : vector<12x256xf32> to vector<12xf32>
    %10 = vector.shape_cast %9 : vector<12xf32> to vector<12x1xf32>
    %cst_7 = arith.constant 2.560000e+02 : f32
    %11 = vector.broadcast %cst_7 : f32 to vector<12x1xf32>
    %12 = arith.divf %10, %11 : vector<12x1xf32>
    %13 = vector.broadcast %7 : vector<12x1xf32> to vector<12x256xf32>
    %14 = arith.subf %3, %13 : vector<12x256xf32>
    %15 = arith.mulf %7, %7 : vector<12x1xf32>
    %16 = arith.subf %12, %15 : vector<12x1xf32>
    %cst_8 = arith.constant 9.99999974E-6 : f32
    %17 = vector.broadcast %cst_8 : f32 to vector<12x1xf32>
    %18 = arith.addf %16, %17 : vector<12x1xf32>
    %19 = math.rsqrt %18 : vector<12x1xf32>
    %20 = vector.broadcast %19 : vector<12x1xf32> to vector<12x256xf32>
    %21 = arith.mulf %14, %20 : vector<12x256xf32>
    %cst_9 = arith.constant 0.000000e+00 : f32
    %22 = vector.broadcast %cst_9 : f32 to vector<12x256xf32>
    %23 = arith.maximumf %21, %22 : vector<12x256xf32>
    %c0_10 = arith.constant 0 : index
    %c0_11 = arith.constant 0 : index
    %24 = vector.load %arg7[%c0_10, %c0_11] : memref<32x256xf32, #tpu.memory_space<vmem>>, vector<16x256xf32>
    %c16 = arith.constant 16 : index
    %c0_12 = arith.constant 0 : index
    %25 = vector.load %arg7[%c16, %c0_12] : memref<32x256xf32, #tpu.memory_space<vmem>>, vector<16x256xf32>
    %c0_13 = arith.constant 0 : index
    %c0_14 = arith.constant 0 : index
    %26 = vector.load %arg6[%c0_13, %c0_14] : memref<256x32xf32, #tpu.memory_space<vmem>>, vector<256x32xf32>
    %c0_15 = arith.constant 0 : index
    %c0_16 = arith.constant 0 : index
    %27 = vector.load %arg8[%c0_15, %c0_16] : memref<4x256xf32, #tpu.memory_space<vmem>>, vector<1x256xf32>
    %c1 = arith.constant 1 : index
    %c0_17 = arith.constant 0 : index
    %28 = vector.load %arg8[%c1, %c0_17] : memref<4x256xf32, #tpu.memory_space<vmem>>, vector<1x256xf32>
    %29 = vector.extract_strided_slice %23 {offsets = [0, 0], sizes = [2, 256], strides = [1, 1]} : vector<12x256xf32> to vector<2x256xf32>
    %c0_18 = arith.constant 0 : index
    %c0_19 = arith.constant 0 : index
    %30 = vector.load %arg10[%c0_18, %c0_19] : memref<12x256xf32, #tpu.memory_space<vmem>>, vector<2x256xf32>
    tpu.vector_store %arg10[%c0_18, %c0_19], %29 {strides = array<i32>} : memref<12x256xf32, #tpu.memory_space<vmem>>, vector<2x256xf32>,
    %31 = vector.extract_strided_slice %23 {offsets = [2, 0], sizes = [2, 256], strides = [1, 1]} : vector<12x256xf32> to vector<2x256xf32>
    %c1_i32 = arith.constant 1 : i32
    %32 = tpu.dynamic_rotate %31 by %c1_i32 dim 1 : vector<2x256xf32>, i32 -> vector<2x256xf32>
    %33 = vector.broadcast %27 : vector<1x256xf32> to vector<2x256xf32>
    %34 = arith.mulf %32, %33 : vector<2x256xf32>
    %c255_i32 = arith.constant 255 : i32
    %35 = tpu.dynamic_rotate %31 by %c255_i32 dim 1 : vector<2x256xf32>, i32 -> vector<2x256xf32>
    %36 = vector.broadcast %28 : vector<1x256xf32> to vector<2x256xf32>
    %37 = arith.mulf %35, %36 : vector<2x256xf32>
    %c0_20 = arith.constant 0 : index
    %c0_21 = arith.constant 0 : index
    %38 = vector.load %arg5[%c0_20, %c0_21] : memref<2x60xf32, #tpu.memory_space<vmem>>, vector<2x2xf32>
    %cst_22 = arith.constant dense<0.000000e+00> : vector<2x256xf32>
    %39 = tpu.matmul %38, %34, %cst_22 {dimension_numbers = #tpu.dot_dimension_numbers<[1], [0], [0], [1], [0, 0, 1, 1], [], []>} : vector<2x2xf32>, vector<2x256xf32>, vector<2x256xf32> -> vector<2x256xf32>
    %c0_23 = arith.constant 0 : index
    %c2 = arith.constant 2 : index
    %40 = vector.load %arg5[%c0_23, %c2] : memref<2x60xf32, #tpu.memory_space<vmem>>, vector<2x2xf32>
    %cst_24 = arith.constant dense<0.000000e+00> : vector<2x256xf32>
    %41 = tpu.matmul %40, %31, %cst_24 {dimension_numbers = #tpu.dot_dimension_numbers<[1], [0], [0], [1], [0, 0, 1, 1], [], []>} : vector<2x2xf32>, vector<2x256xf32>, vector<2x256xf32> -> vector<2x256xf32>
    %42 = arith.addf %39, %41 : vector<2x256xf32>
    %c0_25 = arith.constant 0 : index
    %c4 = arith.constant 4 : index
    %43 = vector.load %arg5[%c0_25, %c4] : memref<2x60xf32, #tpu.memory_space<vmem>>, vector<2x2xf32>
    %cst_26 = arith.constant dense<0.000000e+00> : vector<2x256xf32>
    %44 = tpu.matmul %43, %37, %cst_26 {dimension_numbers = #tpu.dot_dimension_numbers<[1], [0], [0], [1], [0, 0, 1, 1], [], []>} : vector<2x2xf32>, vector<2x256xf32>, vector<2x256xf32> -> vector<2x256xf32>
    %45 = arith.addf %42, %44 : vector<2x256xf32>
    %cst_27 = arith.constant dense<0.000000e+00> : vector<2xf32>
    %46 = vector.multi_reduction <add>, %45, %cst_27 [1] : vector<2x256xf32> to vector<2xf32>
    %47 = vector.shape_cast %46 : vector<2xf32> to vector<2x1xf32>
    %cst_28 = arith.constant 2.560000e+02 : f32
    %48 = vector.broadcast %cst_28 : f32 to vector<2x1xf32>
    %49 = arith.divf %47, %48 : vector<2x1xf32>
    %50 = arith.mulf %45, %45 : vector<2x256xf32>
    %cst_29 = arith.constant dense<0.000000e+00> : vector<2xf32>
    %51 = vector.multi_reduction <add>, %50, %cst_29 [1] : vector<2x256xf32> to vector<2xf32>
    %52 = vector.shape_cast %51 : vector<2xf32> to vector<2x1xf32>
    %cst_30 = arith.constant 2.560000e+02 : f32
    %53 = vector.broadcast %cst_30 : f32 to vector<2x1xf32>
    %54 = arith.divf %52, %53 : vector<2x1xf32>
    %55 = vector.broadcast %49 : vector<2x1xf32> to vector<2x256xf32>
    %56 = arith.subf %45, %55 : vector<2x256xf32>
    %57 = arith.mulf %49, %49 : vector<2x1xf32>
    %58 = arith.subf %54, %57 : vector<2x1xf32>
    %cst_31 = arith.constant 9.99999974E-6 : f32
    %59 = vector.broadcast %cst_31 : f32 to vector<2x1xf32>
    %60 = arith.addf %58, %59 : vector<2x1xf32>
    %61 = math.rsqrt %60 : vector<2x1xf32>
    %62 = vector.broadcast %61 : vector<2x1xf32> to vector<2x256xf32>
    %63 = arith.mulf %56, %62 : vector<2x256xf32>
    %cst_32 = arith.constant 0.000000e+00 : f32
    %64 = vector.broadcast %cst_32 : f32 to vector<2x256xf32>
    %65 = arith.maximumf %63, %64 : vector<2x256xf32>
    %c2_33 = arith.constant 2 : index
    %c0_34 = arith.constant 0 : index
    %66 = vector.load %arg10[%c2_33, %c0_34] : memref<12x256xf32, #tpu.memory_space<vmem>>, vector<2x256xf32>
    tpu.vector_store %arg10[%c2_33, %c0_34], %65 {strides = array<i32>} : memref<12x256xf32, #tpu.memory_space<vmem>>, vector<2x256xf32>,
    %67 = vector.extract_strided_slice %23 {offsets = [4, 0], sizes = [2, 256], strides = [1, 1]} : vector<12x256xf32> to vector<2x256xf32>
    %68 = arith.addf %67, %65 : vector<2x256xf32>
    %c1_i32_35 = arith.constant 1 : i32
    %69 = tpu.dynamic_rotate %68 by %c1_i32_35 dim 1 : vector<2x256xf32>, i32 -> vector<2x256xf32>
    %70 = vector.broadcast %27 : vector<1x256xf32> to vector<2x256xf32>
    %71 = arith.mulf %69, %70 : vector<2x256xf32>
    %c255_i32_36 = arith.constant 255 : i32
    %72 = tpu.dynamic_rotate %68 by %c255_i32_36 dim 1 : vector<2x256xf32>, i32 -> vector<2x256xf32>
    %73 = vector.broadcast %28 : vector<1x256xf32> to vector<2x256xf32>
    %74 = arith.mulf %72, %73 : vector<2x256xf32>
    %c0_37 = arith.constant 0 : index
    %c6 = arith.constant 6 : index
    %75 = vector.load %arg5[%c0_37, %c6] : memref<2x60xf32, #tpu.memory_space<vmem>>, vector<2x2xf32>
    %cst_38 = arith.constant dense<0.000000e+00> : vector<2x256xf32>
    %76 = tpu.matmul %75, %71, %cst_38 {dimension_numbers = #tpu.dot_dimension_numbers<[1], [0], [0], [1], [0, 0, 1, 1], [], []>} : vector<2x2xf32>, vector<2x256xf32>, vector<2x256xf32> -> vector<2x256xf32>
    %c0_39 = arith.constant 0 : index
    %c8 = arith.constant 8 : index
    %77 = vector.load %arg5[%c0_39, %c8] : memref<2x60xf32, #tpu.memory_space<vmem>>, vector<2x2xf32>
    %cst_40 = arith.constant dense<0.000000e+00> : vector<2x256xf32>
    %78 = tpu.matmul %77, %68, %cst_40 {dimension_numbers = #tpu.dot_dimension_numbers<[1], [0], [0], [1], [0, 0, 1, 1], [], []>} : vector<2x2xf32>, vector<2x256xf32>, vector<2x256xf32> -> vector<2x256xf32>
    %79 = arith.addf %76, %78 : vector<2x256xf32>
    %c0_41 = arith.constant 0 : index
    %c10 = arith.constant 10 : index
    %80 = vector.load %arg5[%c0_41, %c10] : memref<2x60xf32, #tpu.memory_space<vmem>>, vector<2x2xf32>
    %cst_42 = arith.constant dense<0.000000e+00> : vector<2x256xf32>
    %81 = tpu.matmul %80, %74, %cst_42 {dimension_numbers = #tpu.dot_dimension_numbers<[1], [0], [0], [1], [0, 0, 1, 1], [], []>} : vector<2x2xf32>, vector<2x256xf32>, vector<2x256xf32> -> vector<2x256xf32>
    %82 = arith.addf %79, %81 : vector<2x256xf32>
    %cst_43 = arith.constant dense<0.000000e+00> : vector<2xf32>
    %83 = vector.multi_reduction <add>, %82, %cst_43 [1] : vector<2x256xf32> to vector<2xf32>
    %84 = vector.shape_cast %83 : vector<2xf32> to vector<2x1xf32>
    %cst_44 = arith.constant 2.560000e+02 : f32
    %85 = vector.broadcast %cst_44 : f32 to vector<2x1xf32>
    %86 = arith.divf %84, %85 : vector<2x1xf32>
    %87 = arith.mulf %82, %82 : vector<2x256xf32>
    %cst_45 = arith.constant dense<0.000000e+00> : vector<2xf32>
    %88 = vector.multi_reduction <add>, %87, %cst_45 [1] : vector<2x256xf32> to vector<2xf32>
    %89 = vector.shape_cast %88 : vector<2xf32> to vector<2x1xf32>
    %cst_46 = arith.constant 2.560000e+02 : f32
    %90 = vector.broadcast %cst_46 : f32 to vector<2x1xf32>
    %91 = arith.divf %89, %90 : vector<2x1xf32>
    %92 = vector.broadcast %86 : vector<2x1xf32> to vector<2x256xf32>
    %93 = arith.subf %82, %92 : vector<2x256xf32>
    %94 = arith.mulf %86, %86 : vector<2x1xf32>
    %95 = arith.subf %91, %94 : vector<2x1xf32>
    %cst_47 = arith.constant 9.99999974E-6 : f32
    %96 = vector.broadcast %cst_47 : f32 to vector<2x1xf32>
    %97 = arith.addf %95, %96 : vector<2x1xf32>
    %98 = math.rsqrt %97 : vector<2x1xf32>
    %99 = vector.broadcast %98 : vector<2x1xf32> to vector<2x256xf32>
    %100 = arith.mulf %93, %99 : vector<2x256xf32>
    %cst_48 = arith.constant 0.000000e+00 : f32
    %101 = vector.broadcast %cst_48 : f32 to vector<2x256xf32>
    %102 = arith.maximumf %100, %101 : vector<2x256xf32>
    %c4_49 = arith.constant 4 : index
    %c0_50 = arith.constant 0 : index
    %103 = vector.load %arg10[%c4_49, %c0_50] : memref<12x256xf32, #tpu.memory_space<vmem>>, vector<2x256xf32>
    tpu.vector_store %arg10[%c4_49, %c0_50], %102 {strides = array<i32>} : memref<12x256xf32, #tpu.memory_space<vmem>>, vector<2x256xf32>,
    %104 = vector.extract_strided_slice %23 {offsets = [6, 0], sizes = [2, 256], strides = [1, 1]} : vector<12x256xf32> to vector<2x256xf32>
    %105 = arith.addf %104, %102 : vector<2x256xf32>
    %c1_i32_51 = arith.constant 1 : i32
    %106 = tpu.dynamic_rotate %105 by %c1_i32_51 dim 1 : vector<2x256xf32>, i32 -> vector<2x256xf32>
    %107 = vector.broadcast %27 : vector<1x256xf32> to vector<2x256xf32>
    %108 = arith.mulf %106, %107 : vector<2x256xf32>
    %c255_i32_52 = arith.constant 255 : i32
    %109 = tpu.dynamic_rotate %105 by %c255_i32_52 dim 1 : vector<2x256xf32>, i32 -> vector<2x256xf32>
    %110 = vector.broadcast %28 : vector<1x256xf32> to vector<2x256xf32>
    %111 = arith.mulf %109, %110 : vector<2x256xf32>
    %c0_53 = arith.constant 0 : index
    %c12 = arith.constant 12 : index
    %112 = vector.load %arg5[%c0_53, %c12] : memref<2x60xf32, #tpu.memory_space<vmem>>, vector<2x2xf32>
    %cst_54 = arith.constant dense<0.000000e+00> : vector<2x256xf32>
    %113 = tpu.matmul %112, %108, %cst_54 {dimension_numbers = #tpu.dot_dimension_numbers<[1], [0], [0], [1], [0, 0, 1, 1], [], []>} : vector<2x2xf32>, vector<2x256xf32>, vector<2x256xf32> -> vector<2x256xf32>
    %c0_55 = arith.constant 0 : index
    %c14 = arith.constant 14 : index
    %114 = vector.load %arg5[%c0_55, %c14] : memref<2x60xf32, #tpu.memory_space<vmem>>, vector<2x2xf32>
    %cst_56 = arith.constant dense<0.000000e+00> : vector<2x256xf32>
    %115 = tpu.matmul %114, %105, %cst_56 {dimension_numbers = #tpu.dot_dimension_numbers<[1], [0], [0], [1], [0, 0, 1, 1], [], []>} : vector<2x2xf32>, vector<2x256xf32>, vector<2x256xf32> -> vector<2x256xf32>
    %116 = arith.addf %113, %115 : vector<2x256xf32>
    %c0_57 = arith.constant 0 : index
    %c16_58 = arith.constant 16 : index
    %117 = vector.load %arg5[%c0_57, %c16_58] : memref<2x60xf32, #tpu.memory_space<vmem>>, vector<2x2xf32>
    %cst_59 = arith.constant dense<0.000000e+00> : vector<2x256xf32>
    %118 = tpu.matmul %117, %111, %cst_59 {dimension_numbers = #tpu.dot_dimension_numbers<[1], [0], [0], [1], [0, 0, 1, 1], [], []>} : vector<2x2xf32>, vector<2x256xf32>, vector<2x256xf32> -> vector<2x256xf32>
    %119 = arith.addf %116, %118 : vector<2x256xf32>
    %cst_60 = arith.constant dense<0.000000e+00> : vector<2xf32>
    %120 = vector.multi_reduction <add>, %119, %cst_60 [1] : vector<2x256xf32> to vector<2xf32>
    %121 = vector.shape_cast %120 : vector<2xf32> to vector<2x1xf32>
    %cst_61 = arith.constant 2.560000e+02 : f32
    %122 = vector.broadcast %cst_61 : f32 to vector<2x1xf32>
    %123 = arith.divf %121, %122 : vector<2x1xf32>
    %124 = arith.mulf %119, %119 : vector<2x256xf32>
    %cst_62 = arith.constant dense<0.000000e+00> : vector<2xf32>
    %125 = vector.multi_reduction <add>, %124, %cst_62 [1] : vector<2x256xf32> to vector<2xf32>
    %126 = vector.shape_cast %125 : vector<2xf32> to vector<2x1xf32>
    %cst_63 = arith.constant 2.560000e+02 : f32
    %127 = vector.broadcast %cst_63 : f32 to vector<2x1xf32>
    %128 = arith.divf %126, %127 : vector<2x1xf32>
    %129 = vector.broadcast %123 : vector<2x1xf32> to vector<2x256xf32>
    %130 = arith.subf %119, %129 : vector<2x256xf32>
    %131 = arith.mulf %123, %123 : vector<2x1xf32>
    %132 = arith.subf %128, %131 : vector<2x1xf32>
    %cst_64 = arith.constant 9.99999974E-6 : f32
    %133 = vector.broadcast %cst_64 : f32 to vector<2x1xf32>
    %134 = arith.addf %132, %133 : vector<2x1xf32>
    %135 = math.rsqrt %134 : vector<2x1xf32>
    %136 = vector.broadcast %135 : vector<2x1xf32> to vector<2x256xf32>
    %137 = arith.mulf %130, %136 : vector<2x256xf32>
    %cst_65 = arith.constant 0.000000e+00 : f32
    %138 = vector.broadcast %cst_65 : f32 to vector<2x256xf32>
    %139 = arith.maximumf %137, %138 : vector<2x256xf32>
    %c6_66 = arith.constant 6 : index
    %c0_67 = arith.constant 0 : index
    %140 = vector.load %arg10[%c6_66, %c0_67] : memref<12x256xf32, #tpu.memory_space<vmem>>, vector<2x256xf32>
    tpu.vector_store %arg10[%c6_66, %c0_67], %139 {strides = array<i32>} : memref<12x256xf32, #tpu.memory_space<vmem>>, vector<2x256xf32>,
    %141 = vector.extract_strided_slice %23 {offsets = [8, 0], sizes = [2, 256], strides = [1, 1]} : vector<12x256xf32> to vector<2x256xf32>
    %142 = arith.addf %141, %139 : vector<2x256xf32>
    %c1_i32_68 = arith.constant 1 : i32
    %143 = tpu.dynamic_rotate %142 by %c1_i32_68 dim 1 : vector<2x256xf32>, i32 -> vector<2x256xf32>
    %144 = vector.broadcast %27 : vector<1x256xf32> to vector<2x256xf32>
    %145 = arith.mulf %143, %144 : vector<2x256xf32>
    %c255_i32_69 = arith.constant 255 : i32
    %146 = tpu.dynamic_rotate %142 by %c255_i32_69 dim 1 : vector<2x256xf32>, i32 -> vector<2x256xf32>
    %147 = vector.broadcast %28 : vector<1x256xf32> to vector<2x256xf32>
    %148 = arith.mulf %146, %147 : vector<2x256xf32>
    %c0_70 = arith.constant 0 : index
    %c18 = arith.constant 18 : index
    %149 = vector.load %arg5[%c0_70, %c18] : memref<2x60xf32, #tpu.memory_space<vmem>>, vector<2x2xf32>
    %cst_71 = arith.constant dense<0.000000e+00> : vector<2x256xf32>
    %150 = tpu.matmul %149, %145, %cst_71 {dimension_numbers = #tpu.dot_dimension_numbers<[1], [0], [0], [1], [0, 0, 1, 1], [], []>} : vector<2x2xf32>, vector<2x256xf32>, vector<2x256xf32> -> vector<2x256xf32>
    %c0_72 = arith.constant 0 : index
    %c20 = arith.constant 20 : index
    %151 = vector.load %arg5[%c0_72, %c20] : memref<2x60xf32, #tpu.memory_space<vmem>>, vector<2x2xf32>
    %cst_73 = arith.constant dense<0.000000e+00> : vector<2x256xf32>
    %152 = tpu.matmul %151, %142, %cst_73 {dimension_numbers = #tpu.dot_dimension_numbers<[1], [0], [0], [1], [0, 0, 1, 1], [], []>} : vector<2x2xf32>, vector<2x256xf32>, vector<2x256xf32> -> vector<2x256xf32>
    %153 = arith.addf %150, %152 : vector<2x256xf32>
    %c0_74 = arith.constant 0 : index
    %c22 = arith.constant 22 : index
    %154 = vector.load %arg5[%c0_74, %c22] : memref<2x60xf32, #tpu.memory_space<vmem>>, vector<2x2xf32>
    %cst_75 = arith.constant dense<0.000000e+00> : vector<2x256xf32>
    %155 = tpu.matmul %154, %148, %cst_75 {dimension_numbers = #tpu.dot_dimension_numbers<[1], [0], [0], [1], [0, 0, 1, 1], [], []>} : vector<2x2xf32>, vector<2x256xf32>, vector<2x256xf32> -> vector<2x256xf32>
    %156 = arith.addf %153, %155 : vector<2x256xf32>
    %cst_76 = arith.constant dense<0.000000e+00> : vector<2xf32>
    %157 = vector.multi_reduction <add>, %156, %cst_76 [1] : vector<2x256xf32> to vector<2xf32>
    %158 = vector.shape_cast %157 : vector<2xf32> to vector<2x1xf32>
    %cst_77 = arith.constant 2.560000e+02 : f32
    %159 = vector.broadcast %cst_77 : f32 to vector<2x1xf32>
    %160 = arith.divf %158, %159 : vector<2x1xf32>
    %161 = arith.mulf %156, %156 : vector<2x256xf32>
    %cst_78 = arith.constant dense<0.000000e+00> : vector<2xf32>
    %162 = vector.multi_reduction <add>, %161, %cst_78 [1] : vector<2x256xf32> to vector<2xf32>
    %163 = vector.shape_cast %162 : vector<2xf32> to vector<2x1xf32>
    %cst_79 = arith.constant 2.560000e+02 : f32
    %164 = vector.broadcast %cst_79 : f32 to vector<2x1xf32>
    %165 = arith.divf %163, %164 : vector<2x1xf32>
    %166 = vector.broadcast %160 : vector<2x1xf32> to vector<2x256xf32>
    %167 = arith.subf %156, %166 : vector<2x256xf32>
    %168 = arith.mulf %160, %160 : vector<2x1xf32>
    %169 = arith.subf %165, %168 : vector<2x1xf32>
    %cst_80 = arith.constant 9.99999974E-6 : f32
    %170 = vector.broadcast %cst_80 : f32 to vector<2x1xf32>
    %171 = arith.addf %169, %170 : vector<2x1xf32>
    %172 = math.rsqrt %171 : vector<2x1xf32>
    %173 = vector.broadcast %172 : vector<2x1xf32> to vector<2x256xf32>
    %174 = arith.mulf %167, %173 : vector<2x256xf32>
    %cst_81 = arith.constant 0.000000e+00 : f32
    %175 = vector.broadcast %cst_81 : f32 to vector<2x256xf32>
    %176 = arith.maximumf %174, %175 : vector<2x256xf32>
    %c8_82 = arith.constant 8 : index
    %c0_83 = arith.constant 0 : index
    %177 = vector.load %arg10[%c8_82, %c0_83] : memref<12x256xf32, #tpu.memory_space<vmem>>, vector<2x256xf32>
    tpu.vector_store %arg10[%c8_82, %c0_83], %176 {strides = array<i32>} : memref<12x256xf32, #tpu.memory_space<vmem>>, vector<2x256xf32>,
    %178 = vector.extract_strided_slice %23 {offsets = [10, 0], sizes = [2, 256], strides = [1, 1]} : vector<12x256xf32> to vector<2x256xf32>
    %179 = arith.addf %178, %176 : vector<2x256xf32>
    %c1_i32_84 = arith.constant 1 : i32
    %180 = tpu.dynamic_rotate %179 by %c1_i32_84 dim 1 : vector<2x256xf32>, i32 -> vector<2x256xf32>
    %181 = vector.broadcast %27 : vector<1x256xf32> to vector<2x256xf32>
    %182 = arith.mulf %180, %181 : vector<2x256xf32>
    %c255_i32_85 = arith.constant 255 : i32
    %183 = tpu.dynamic_rotate %179 by %c255_i32_85 dim 1 : vector<2x256xf32>, i32 -> vector<2x256xf32>
    %184 = vector.broadcast %28 : vector<1x256xf32> to vector<2x256xf32>
    %185 = arith.mulf %183, %184 : vector<2x256xf32>
    %c0_86 = arith.constant 0 : index
    %c24 = arith.constant 24 : index
    %186 = vector.load %arg5[%c0_86, %c24] : memref<2x60xf32, #tpu.memory_space<vmem>>, vector<2x2xf32>
    %cst_87 = arith.constant dense<0.000000e+00> : vector<2x256xf32>
    %187 = tpu.matmul %186, %182, %cst_87 {dimension_numbers = #tpu.dot_dimension_numbers<[1], [0], [0], [1], [0, 0, 1, 1], [], []>} : vector<2x2xf32>, vector<2x256xf32>, vector<2x256xf32> -> vector<2x256xf32>
    %c0_88 = arith.constant 0 : index
    %c26 = arith.constant 26 : index
    %188 = vector.load %arg5[%c0_88, %c26] : memref<2x60xf32, #tpu.memory_space<vmem>>, vector<2x2xf32>
    %cst_89 = arith.constant dense<0.000000e+00> : vector<2x256xf32>
    %189 = tpu.matmul %188, %179, %cst_89 {dimension_numbers = #tpu.dot_dimension_numbers<[1], [0], [0], [1], [0, 0, 1, 1], [], []>} : vector<2x2xf32>, vector<2x256xf32>, vector<2x256xf32> -> vector<2x256xf32>
    %190 = arith.addf %187, %189 : vector<2x256xf32>
    %c0_90 = arith.constant 0 : index
    %c28 = arith.constant 28 : index
    %191 = vector.load %arg5[%c0_90, %c28] : memref<2x60xf32, #tpu.memory_space<vmem>>, vector<2x2xf32>
    %cst_91 = arith.constant dense<0.000000e+00> : vector<2x256xf32>
    %192 = tpu.matmul %191, %185, %cst_91 {dimension_numbers = #tpu.dot_dimension_numbers<[1], [0], [0], [1], [0, 0, 1, 1], [], []>} : vector<2x2xf32>, vector<2x256xf32>, vector<2x256xf32> -> vector<2x256xf32>
    %193 = arith.addf %190, %192 : vector<2x256xf32>
    %cst_92 = arith.constant dense<0.000000e+00> : vector<2xf32>
    %194 = vector.multi_reduction <add>, %193, %cst_92 [1] : vector<2x256xf32> to vector<2xf32>
    %195 = vector.shape_cast %194 : vector<2xf32> to vector<2x1xf32>
    %cst_93 = arith.constant 2.560000e+02 : f32
    %196 = vector.broadcast %cst_93 : f32 to vector<2x1xf32>
    %197 = arith.divf %195, %196 : vector<2x1xf32>
    %198 = arith.mulf %193, %193 : vector<2x256xf32>
    %cst_94 = arith.constant dense<0.000000e+00> : vector<2xf32>
    %199 = vector.multi_reduction <add>, %198, %cst_94 [1] : vector<2x256xf32> to vector<2xf32>
    %200 = vector.shape_cast %199 : vector<2xf32> to vector<2x1xf32>
    %cst_95 = arith.constant 2.560000e+02 : f32
    %201 = vector.broadcast %cst_95 : f32 to vector<2x1xf32>
    %202 = arith.divf %200, %201 : vector<2x1xf32>
    %203 = vector.broadcast %197 : vector<2x1xf32> to vector<2x256xf32>
    %204 = arith.subf %193, %203 : vector<2x256xf32>
    %205 = arith.mulf %197, %197 : vector<2x1xf32>
    %206 = arith.subf %202, %205 : vector<2x1xf32>
    %cst_96 = arith.constant 9.99999974E-6 : f32
    %207 = vector.broadcast %cst_96 : f32 to vector<2x1xf32>
    %208 = arith.addf %206, %207 : vector<2x1xf32>
    %209 = math.rsqrt %208 : vector<2x1xf32>
    %210 = vector.broadcast %209 : vector<2x1xf32> to vector<2x256xf32>
    %211 = arith.mulf %204, %210 : vector<2x256xf32>
    %cst_97 = arith.constant 0.000000e+00 : f32
    %212 = vector.broadcast %cst_97 : f32 to vector<2x256xf32>
    %213 = arith.maximumf %211, %212 : vector<2x256xf32>
    %c10_98 = arith.constant 10 : index
    %c0_99 = arith.constant 0 : index
    %214 = vector.load %arg10[%c10_98, %c0_99] : memref<12x256xf32, #tpu.memory_space<vmem>>, vector<2x256xf32>
    tpu.vector_store %arg10[%c10_98, %c0_99], %213 {strides = array<i32>} : memref<12x256xf32, #tpu.memory_space<vmem>>, vector<2x256xf32>,
    %c0_100 = arith.constant 0 : index
    %c0_101 = arith.constant 0 : index
    %215 = vector.load %arg10[%c0_100, %c0_101] : memref<12x256xf32, #tpu.memory_space<vmem>>, vector<12x256xf32>
    %c0_102 = arith.constant 0 : index
    %c0_103 = arith.constant 0 : index
    %216 = vector.load %arg4[%c0_102, %c0_103] : memref<16x24xf32, #tpu.memory_space<vmem>>, vector<16x12xf32>
    %c0_104 = arith.constant 0 : index
    %c36 = arith.constant 36 : index
    %217 = vector.load %arg2[%c0_104, %c36] : memref<12x100xf32, #tpu.memory_space<vmem>>, vector<12x16xf32>
    %c0_105 = arith.constant 0 : index
    %c2_106 = arith.constant 2 : index
    %218 = vector.load %arg3[%c0_105, %c2_106] : memref<12x6xf32, #tpu.memory_space<vmem>>, vector<12x1xf32>
    %c0_107 = arith.constant 0 : index
    %c52 = arith.constant 52 : index
    %219 = vector.load %arg2[%c0_107, %c52] : memref<12x100xf32, #tpu.memory_space<vmem>>, vector<12x16xf32>
    %c0_108 = arith.constant 0 : index
    %c3 = arith.constant 3 : index
    %220 = vector.load %arg3[%c0_108, %c3] : memref<12x6xf32, #tpu.memory_space<vmem>>, vector<12x1xf32>
    %cst_109 = arith.constant dense<0.000000e+00> : vector<12x32xf32>
    %221 = tpu.matmul %215, %26, %cst_109 {dimension_numbers = #tpu.dot_dimension_numbers<[1], [0], [0], [1], [0, 0, 1, 1], [], []>} : vector<12x256xf32>, vector<256x32xf32>, vector<12x32xf32> -> vector<12x32xf32>
    %cst_110 = arith.constant dense<0.000000e+00> : vector<16x32xf32>
    %222 = tpu.matmul %216, %221, %cst_110 {dimension_numbers = #tpu.dot_dimension_numbers<[1], [0], [0], [1], [0, 0, 1, 1], [], []>} : vector<16x12xf32>, vector<12x32xf32>, vector<16x32xf32> -> vector<16x32xf32>
    %cst_111 = arith.constant dense<0.000000e+00> : vector<16xf32>
    %223 = vector.multi_reduction <add>, %222, %cst_111 [1] : vector<16x32xf32> to vector<16xf32>
    %224 = vector.shape_cast %223 : vector<16xf32> to vector<16x1xf32>
    %cst_112 = arith.constant 3.200000e+01 : f32
    %225 = vector.broadcast %cst_112 : f32 to vector<16x1xf32>
    %226 = arith.divf %224, %225 : vector<16x1xf32>
    %227 = arith.mulf %222, %222 : vector<16x32xf32>
    %cst_113 = arith.constant dense<0.000000e+00> : vector<16xf32>
    %228 = vector.multi_reduction <add>, %227, %cst_113 [1] : vector<16x32xf32> to vector<16xf32>
    %229 = vector.shape_cast %228 : vector<16xf32> to vector<16x1xf32>
    %cst_114 = arith.constant 3.200000e+01 : f32
    %230 = vector.broadcast %cst_114 : f32 to vector<16x1xf32>
    %231 = arith.divf %229, %230 : vector<16x1xf32>
    %232 = vector.broadcast %226 : vector<16x1xf32> to vector<16x32xf32>
    %233 = arith.subf %222, %232 : vector<16x32xf32>
    %234 = arith.mulf %226, %226 : vector<16x1xf32>
    %235 = arith.subf %231, %234 : vector<16x1xf32>
    %cst_115 = arith.constant 9.99999974E-6 : f32
    %236 = vector.broadcast %cst_115 : f32 to vector<16x1xf32>
    %237 = arith.addf %235, %236 : vector<16x1xf32>
    %238 = math.rsqrt %237 : vector<16x1xf32>
    %239 = vector.broadcast %238 : vector<16x1xf32> to vector<16x32xf32>
    %240 = arith.mulf %233, %239 : vector<16x32xf32>
    %cst_116 = arith.constant 3.000000e+00 : f32
    %241 = vector.broadcast %cst_116 : f32 to vector<16x32xf32>
    %242 = arith.addf %240, %241 : vector<16x32xf32>
    %cst_117 = arith.constant 0.000000e+00 : f32
    %cst_118 = arith.constant 6.000000e+00 : f32
    %243 = vector.broadcast %cst_117 : f32 to vector<16x32xf32>
    %244 = arith.maximumf %243, %242 : vector<16x32xf32>
    %245 = vector.broadcast %cst_118 : f32 to vector<16x32xf32>
    %246 = arith.minimumf %245, %244 : vector<16x32xf32>
    %247 = arith.mulf %240, %246 : vector<16x32xf32>
    %cst_119 = arith.constant 0.166666672 : f32
    %248 = vector.broadcast %cst_119 : f32 to vector<16x32xf32>
    %249 = arith.mulf %247, %248 : vector<16x32xf32>
    %250 = vector.extract_strided_slice %249 {offsets = [0, 0], sizes = [16, 16], strides = [1, 1]} : vector<16x32xf32> to vector<16x16xf32>
    %cst_120 = arith.constant dense<0.000000e+00> : vector<12x16xf32>
    %251 = tpu.matmul %217, %250, %cst_120 {dimension_numbers = #tpu.dot_dimension_numbers<[1], [0], [0], [1], [0, 0, 1, 1], [], []>} : vector<12x16xf32>, vector<16x16xf32>, vector<12x16xf32> -> vector<12x16xf32>
    %252 = vector.broadcast %218 : vector<12x1xf32> to vector<12x16xf32>
    %253 = arith.addf %251, %252 : vector<12x16xf32>
    %254 = arith.negf %253 : vector<12x16xf32>
    %255 = math.exp %254 : vector<12x16xf32>
    %cst_121 = arith.constant 1.000000e+00 : f32
    %256 = vector.broadcast %cst_121 : f32 to vector<12x16xf32>
    %257 = arith.addf %256, %255 : vector<12x16xf32>
    %258 = arith.divf %256, %257 : vector<12x16xf32>
    %259 = vector.extract_strided_slice %249 {offsets = [0, 16], sizes = [16, 16], strides = [1, 1]} : vector<16x32xf32> to vector<16x16xf32>
    %cst_122 = arith.constant dense<0.000000e+00> : vector<12x16xf32>
    %260 = tpu.matmul %219, %259, %cst_122 {dimension_numbers = #tpu.dot_dimension_numbers<[1], [0], [0], [1], [0, 0, 1, 1], [], []>} : vector<12x16xf32>, vector<16x16xf32>, vector<12x16xf32> -> vector<12x16xf32>
    %261 = vector.broadcast %220 : vector<12x1xf32> to vector<12x16xf32>
    %262 = arith.addf %260, %261 : vector<12x16xf32>
    %263 = arith.negf %262 : vector<12x16xf32>
    %264 = math.exp %263 : vector<12x16xf32>
    %cst_123 = arith.constant 1.000000e+00 : f32
    %265 = vector.broadcast %cst_123 : f32 to vector<12x16xf32>
    %266 = arith.addf %265, %264 : vector<12x16xf32>
    %267 = arith.divf %265, %266 : vector<12x16xf32>
    %cst_124 = arith.constant dense<0.000000e+00> : vector<12x256xf32>
    %268 = tpu.matmul %267, %25, %cst_124 {dimension_numbers = #tpu.dot_dimension_numbers<[1], [0], [0], [1], [0, 0, 1, 1], [], []>} : vector<12x16xf32>, vector<16x256xf32>, vector<12x256xf32> -> vector<12x256xf32>
    %269 = arith.mulf %215, %268 : vector<12x256xf32>
    %cst_125 = arith.constant dense<0.000000e+00> : vector<12x256xf32>
    %270 = tpu.matmul %258, %24, %cst_125 {dimension_numbers = #tpu.dot_dimension_numbers<[1], [0], [0], [1], [0, 0, 1, 1], [], []>} : vector<12x16xf32>, vector<16x256xf32>, vector<12x256xf32> -> vector<12x256xf32>
    %271 = arith.mulf %269, %270 : vector<12x256xf32>
    %272 = arith.addf %271, %215 : vector<12x256xf32>
    %c0_126 = arith.constant 0 : index
    %c12_127 = arith.constant 12 : index
    %273 = vector.load %arg2[%c0_126, %c12_127] : memref<12x100xf32, #tpu.memory_space<vmem>>, vector<12x12xf32>
    %cst_128 = arith.constant dense<0.000000e+00> : vector<12x256xf32>
    %274 = tpu.matmul %273, %272, %cst_128 {dimension_numbers = #tpu.dot_dimension_numbers<[1], [0], [0], [1], [0, 0, 1, 1], [], []>} : vector<12x12xf32>, vector<12x256xf32>, vector<12x256xf32> -> vector<12x256xf32>
    %c0_129 = arith.constant 0 : index
    %c0_130 = arith.constant 0 : index
    %275 = vector.load %arg3[%c0_129, %c0_130] : memref<12x6xf32, #tpu.memory_space<vmem>>, vector<12x1xf32>
    %276 = vector.broadcast %275 : vector<12x1xf32> to vector<12x256xf32>
    %277 = arith.addf %274, %276 : vector<12x256xf32>
    %c2_131 = arith.constant 2 : index
    %c0_132 = arith.constant 0 : index
    %278 = vector.load %arg8[%c2_131, %c0_132] : memref<4x256xf32, #tpu.memory_space<vmem>>, vector<1x256xf32>
    %c3_133 = arith.constant 3 : index
    %c0_134 = arith.constant 0 : index
    %279 = vector.load %arg8[%c3_133, %c0_134] : memref<4x256xf32, #tpu.memory_space<vmem>>, vector<1x256xf32>
    %280 = vector.extract_strided_slice %277 {offsets = [0, 0], sizes = [2, 256], strides = [1, 1]} : vector<12x256xf32> to vector<2x256xf32>
    %c0_135 = arith.constant 0 : index
    %c0_136 = arith.constant 0 : index
    %281 = vector.load %arg10[%c0_135, %c0_136] : memref<12x256xf32, #tpu.memory_space<vmem>>, vector<2x256xf32>
    tpu.vector_store %arg10[%c0_135, %c0_136], %280 {strides = array<i32>} : memref<12x256xf32, #tpu.memory_space<vmem>>, vector<2x256xf32>,
    %282 = vector.extract_strided_slice %277 {offsets = [2, 0], sizes = [2, 256], strides = [1, 1]} : vector<12x256xf32> to vector<2x256xf32>
    %c16_i32 = arith.constant 16 : i32
    %283 = tpu.dynamic_rotate %282 by %c16_i32 dim 1 : vector<2x256xf32>, i32 -> vector<2x256xf32>
    %284 = vector.broadcast %278 : vector<1x256xf32> to vector<2x256xf32>
    %285 = arith.mulf %283, %284 : vector<2x256xf32>
    %c240_i32 = arith.constant 240 : i32
    %286 = tpu.dynamic_rotate %282 by %c240_i32 dim 1 : vector<2x256xf32>, i32 -> vector<2x256xf32>
    %287 = vector.broadcast %279 : vector<1x256xf32> to vector<2x256xf32>
    %288 = arith.mulf %286, %287 : vector<2x256xf32>
    %c0_137 = arith.constant 0 : index
    %c30 = arith.constant 30 : index
    %289 = vector.load %arg5[%c0_137, %c30] : memref<2x60xf32, #tpu.memory_space<vmem>>, vector<2x2xf32>
    %cst_138 = arith.constant dense<0.000000e+00> : vector<2x256xf32>
    %290 = tpu.matmul %289, %285, %cst_138 {dimension_numbers = #tpu.dot_dimension_numbers<[1], [0], [0], [1], [0, 0, 1, 1], [], []>} : vector<2x2xf32>, vector<2x256xf32>, vector<2x256xf32> -> vector<2x256xf32>
    %c0_139 = arith.constant 0 : index
    %c32 = arith.constant 32 : index
    %291 = vector.load %arg5[%c0_139, %c32] : memref<2x60xf32, #tpu.memory_space<vmem>>, vector<2x2xf32>
    %cst_140 = arith.constant dense<0.000000e+00> : vector<2x256xf32>
    %292 = tpu.matmul %291, %282, %cst_140 {dimension_numbers = #tpu.dot_dimension_numbers<[1], [0], [0], [1], [0, 0, 1, 1], [], []>} : vector<2x2xf32>, vector<2x256xf32>, vector<2x256xf32> -> vector<2x256xf32>
    %293 = arith.addf %290, %292 : vector<2x256xf32>
    %c0_141 = arith.constant 0 : index
    %c34 = arith.constant 34 : index
    %294 = vector.load %arg5[%c0_141, %c34] : memref<2x60xf32, #tpu.memory_space<vmem>>, vector<2x2xf32>
    %cst_142 = arith.constant dense<0.000000e+00> : vector<2x256xf32>
    %295 = tpu.matmul %294, %288, %cst_142 {dimension_numbers = #tpu.dot_dimension_numbers<[1], [0], [0], [1], [0, 0, 1, 1], [], []>} : vector<2x2xf32>, vector<2x256xf32>, vector<2x256xf32> -> vector<2x256xf32>
    %296 = arith.addf %293, %295 : vector<2x256xf32>
    %cst_143 = arith.constant dense<0.000000e+00> : vector<2xf32>
    %297 = vector.multi_reduction <add>, %296, %cst_143 [1] : vector<2x256xf32> to vector<2xf32>
    %298 = vector.shape_cast %297 : vector<2xf32> to vector<2x1xf32>
    %cst_144 = arith.constant 2.560000e+02 : f32
    %299 = vector.broadcast %cst_144 : f32 to vector<2x1xf32>
    %300 = arith.divf %298, %299 : vector<2x1xf32>
    %301 = arith.mulf %296, %296 : vector<2x256xf32>
    %cst_145 = arith.constant dense<0.000000e+00> : vector<2xf32>
    %302 = vector.multi_reduction <add>, %301, %cst_145 [1] : vector<2x256xf32> to vector<2xf32>
    %303 = vector.shape_cast %302 : vector<2xf32> to vector<2x1xf32>
    %cst_146 = arith.constant 2.560000e+02 : f32
    %304 = vector.broadcast %cst_146 : f32 to vector<2x1xf32>
    %305 = arith.divf %303, %304 : vector<2x1xf32>
    %306 = vector.broadcast %300 : vector<2x1xf32> to vector<2x256xf32>
    %307 = arith.subf %296, %306 : vector<2x256xf32>
    %308 = arith.mulf %300, %300 : vector<2x1xf32>
    %309 = arith.subf %305, %308 : vector<2x1xf32>
    %cst_147 = arith.constant 9.99999974E-6 : f32
    %310 = vector.broadcast %cst_147 : f32 to vector<2x1xf32>
    %311 = arith.addf %309, %310 : vector<2x1xf32>
    %312 = math.rsqrt %311 : vector<2x1xf32>
    %313 = vector.broadcast %312 : vector<2x1xf32> to vector<2x256xf32>
    %314 = arith.mulf %307, %313 : vector<2x256xf32>
    %cst_148 = arith.constant 0.000000e+00 : f32
    %315 = vector.broadcast %cst_148 : f32 to vector<2x256xf32>
    %316 = arith.maximumf %314, %315 : vector<2x256xf32>
    %c2_149 = arith.constant 2 : index
    %c0_150 = arith.constant 0 : index
    %317 = vector.load %arg10[%c2_149, %c0_150] : memref<12x256xf32, #tpu.memory_space<vmem>>, vector<2x256xf32>
    tpu.vector_store %arg10[%c2_149, %c0_150], %316 {strides = array<i32>} : memref<12x256xf32, #tpu.memory_space<vmem>>, vector<2x256xf32>,
    %318 = vector.extract_strided_slice %277 {offsets = [4, 0], sizes = [2, 256], strides = [1, 1]} : vector<12x256xf32> to vector<2x256xf32>
    %319 = arith.addf %318, %316 : vector<2x256xf32>
    %c16_i32_151 = arith.constant 16 : i32
    %320 = tpu.dynamic_rotate %319 by %c16_i32_151 dim 1 : vector<2x256xf32>, i32 -> vector<2x256xf32>
    %321 = vector.broadcast %278 : vector<1x256xf32> to vector<2x256xf32>
    %322 = arith.mulf %320, %321 : vector<2x256xf32>
    %c240_i32_152 = arith.constant 240 : i32
    %323 = tpu.dynamic_rotate %319 by %c240_i32_152 dim 1 : vector<2x256xf32>, i32 -> vector<2x256xf32>
    %324 = vector.broadcast %279 : vector<1x256xf32> to vector<2x256xf32>
    %325 = arith.mulf %323, %324 : vector<2x256xf32>
    %c0_153 = arith.constant 0 : index
    %c36_154 = arith.constant 36 : index
    %326 = vector.load %arg5[%c0_153, %c36_154] : memref<2x60xf32, #tpu.memory_space<vmem>>, vector<2x2xf32>
    %cst_155 = arith.constant dense<0.000000e+00> : vector<2x256xf32>
    %327 = tpu.matmul %326, %322, %cst_155 {dimension_numbers = #tpu.dot_dimension_numbers<[1], [0], [0], [1], [0, 0, 1, 1], [], []>} : vector<2x2xf32>, vector<2x256xf32>, vector<2x256xf32> -> vector<2x256xf32>
    %c0_156 = arith.constant 0 : index
    %c38 = arith.constant 38 : index
    %328 = vector.load %arg5[%c0_156, %c38] : memref<2x60xf32, #tpu.memory_space<vmem>>, vector<2x2xf32>
    %cst_157 = arith.constant dense<0.000000e+00> : vector<2x256xf32>
    %329 = tpu.matmul %328, %319, %cst_157 {dimension_numbers = #tpu.dot_dimension_numbers<[1], [0], [0], [1], [0, 0, 1, 1], [], []>} : vector<2x2xf32>, vector<2x256xf32>, vector<2x256xf32> -> vector<2x256xf32>
    %330 = arith.addf %327, %329 : vector<2x256xf32>
    %c0_158 = arith.constant 0 : index
    %c40 = arith.constant 40 : index
    %331 = vector.load %arg5[%c0_158, %c40] : memref<2x60xf32, #tpu.memory_space<vmem>>, vector<2x2xf32>
    %cst_159 = arith.constant dense<0.000000e+00> : vector<2x256xf32>
    %332 = tpu.matmul %331, %325, %cst_159 {dimension_numbers = #tpu.dot_dimension_numbers<[1], [0], [0], [1], [0, 0, 1, 1], [], []>} : vector<2x2xf32>, vector<2x256xf32>, vector<2x256xf32> -> vector<2x256xf32>
    %333 = arith.addf %330, %332 : vector<2x256xf32>
    %cst_160 = arith.constant dense<0.000000e+00> : vector<2xf32>
    %334 = vector.multi_reduction <add>, %333, %cst_160 [1] : vector<2x256xf32> to vector<2xf32>
    %335 = vector.shape_cast %334 : vector<2xf32> to vector<2x1xf32>
    %cst_161 = arith.constant 2.560000e+02 : f32
    %336 = vector.broadcast %cst_161 : f32 to vector<2x1xf32>
    %337 = arith.divf %335, %336 : vector<2x1xf32>
    %338 = arith.mulf %333, %333 : vector<2x256xf32>
    %cst_162 = arith.constant dense<0.000000e+00> : vector<2xf32>
    %339 = vector.multi_reduction <add>, %338, %cst_162 [1] : vector<2x256xf32> to vector<2xf32>
    %340 = vector.shape_cast %339 : vector<2xf32> to vector<2x1xf32>
    %cst_163 = arith.constant 2.560000e+02 : f32
    %341 = vector.broadcast %cst_163 : f32 to vector<2x1xf32>
    %342 = arith.divf %340, %341 : vector<2x1xf32>
    %343 = vector.broadcast %337 : vector<2x1xf32> to vector<2x256xf32>
    %344 = arith.subf %333, %343 : vector<2x256xf32>
    %345 = arith.mulf %337, %337 : vector<2x1xf32>
    %346 = arith.subf %342, %345 : vector<2x1xf32>
    %cst_164 = arith.constant 9.99999974E-6 : f32
    %347 = vector.broadcast %cst_164 : f32 to vector<2x1xf32>
    %348 = arith.addf %346, %347 : vector<2x1xf32>
    %349 = math.rsqrt %348 : vector<2x1xf32>
    %350 = vector.broadcast %349 : vector<2x1xf32> to vector<2x256xf32>
    %351 = arith.mulf %344, %350 : vector<2x256xf32>
    %cst_165 = arith.constant 0.000000e+00 : f32
    %352 = vector.broadcast %cst_165 : f32 to vector<2x256xf32>
    %353 = arith.maximumf %351, %352 : vector<2x256xf32>
    %c4_166 = arith.constant 4 : index
    %c0_167 = arith.constant 0 : index
    %354 = vector.load %arg10[%c4_166, %c0_167] : memref<12x256xf32, #tpu.memory_space<vmem>>, vector<2x256xf32>
    tpu.vector_store %arg10[%c4_166, %c0_167], %353 {strides = array<i32>} : memref<12x256xf32, #tpu.memory_space<vmem>>, vector<2x256xf32>,
    %355 = vector.extract_strided_slice %277 {offsets = [6, 0], sizes = [2, 256], strides = [1, 1]} : vector<12x256xf32> to vector<2x256xf32>
    %356 = arith.addf %355, %353 : vector<2x256xf32>
    %c16_i32_168 = arith.constant 16 : i32
    %357 = tpu.dynamic_rotate %356 by %c16_i32_168 dim 1 : vector<2x256xf32>, i32 -> vector<2x256xf32>
    %358 = vector.broadcast %278 : vector<1x256xf32> to vector<2x256xf32>
    %359 = arith.mulf %357, %358 : vector<2x256xf32>
    %c240_i32_169 = arith.constant 240 : i32
    %360 = tpu.dynamic_rotate %356 by %c240_i32_169 dim 1 : vector<2x256xf32>, i32 -> vector<2x256xf32>
    %361 = vector.broadcast %279 : vector<1x256xf32> to vector<2x256xf32>
    %362 = arith.mulf %360, %361 : vector<2x256xf32>
    %c0_170 = arith.constant 0 : index
    %c42 = arith.constant 42 : index
    %363 = vector.load %arg5[%c0_170, %c42] : memref<2x60xf32, #tpu.memory_space<vmem>>, vector<2x2xf32>
    %cst_171 = arith.constant dense<0.000000e+00> : vector<2x256xf32>
    %364 = tpu.matmul %363, %359, %cst_171 {dimension_numbers = #tpu.dot_dimension_numbers<[1], [0], [0], [1], [0, 0, 1, 1], [], []>} : vector<2x2xf32>, vector<2x256xf32>, vector<2x256xf32> -> vector<2x256xf32>
    %c0_172 = arith.constant 0 : index
    %c44 = arith.constant 44 : index
    %365 = vector.load %arg5[%c0_172, %c44] : memref<2x60xf32, #tpu.memory_space<vmem>>, vector<2x2xf32>
    %cst_173 = arith.constant dense<0.000000e+00> : vector<2x256xf32>
    %366 = tpu.matmul %365, %356, %cst_173 {dimension_numbers = #tpu.dot_dimension_numbers<[1], [0], [0], [1], [0, 0, 1, 1], [], []>} : vector<2x2xf32>, vector<2x256xf32>, vector<2x256xf32> -> vector<2x256xf32>
    %367 = arith.addf %364, %366 : vector<2x256xf32>
    %c0_174 = arith.constant 0 : index
    %c46 = arith.constant 46 : index
    %368 = vector.load %arg5[%c0_174, %c46] : memref<2x60xf32, #tpu.memory_space<vmem>>, vector<2x2xf32>
    %cst_175 = arith.constant dense<0.000000e+00> : vector<2x256xf32>
    %369 = tpu.matmul %368, %362, %cst_175 {dimension_numbers = #tpu.dot_dimension_numbers<[1], [0], [0], [1], [0, 0, 1, 1], [], []>} : vector<2x2xf32>, vector<2x256xf32>, vector<2x256xf32> -> vector<2x256xf32>
    %370 = arith.addf %367, %369 : vector<2x256xf32>
    %cst_176 = arith.constant dense<0.000000e+00> : vector<2xf32>
    %371 = vector.multi_reduction <add>, %370, %cst_176 [1] : vector<2x256xf32> to vector<2xf32>
    %372 = vector.shape_cast %371 : vector<2xf32> to vector<2x1xf32>
    %cst_177 = arith.constant 2.560000e+02 : f32
    %373 = vector.broadcast %cst_177 : f32 to vector<2x1xf32>
    %374 = arith.divf %372, %373 : vector<2x1xf32>
    %375 = arith.mulf %370, %370 : vector<2x256xf32>
    %cst_178 = arith.constant dense<0.000000e+00> : vector<2xf32>
    %376 = vector.multi_reduction <add>, %375, %cst_178 [1] : vector<2x256xf32> to vector<2xf32>
    %377 = vector.shape_cast %376 : vector<2xf32> to vector<2x1xf32>
    %cst_179 = arith.constant 2.560000e+02 : f32
    %378 = vector.broadcast %cst_179 : f32 to vector<2x1xf32>
    %379 = arith.divf %377, %378 : vector<2x1xf32>
    %380 = vector.broadcast %374 : vector<2x1xf32> to vector<2x256xf32>
    %381 = arith.subf %370, %380 : vector<2x256xf32>
    %382 = arith.mulf %374, %374 : vector<2x1xf32>
    %383 = arith.subf %379, %382 : vector<2x1xf32>
    %cst_180 = arith.constant 9.99999974E-6 : f32
    %384 = vector.broadcast %cst_180 : f32 to vector<2x1xf32>
    %385 = arith.addf %383, %384 : vector<2x1xf32>
    %386 = math.rsqrt %385 : vector<2x1xf32>
    %387 = vector.broadcast %386 : vector<2x1xf32> to vector<2x256xf32>
    %388 = arith.mulf %381, %387 : vector<2x256xf32>
    %cst_181 = arith.constant 0.000000e+00 : f32
    %389 = vector.broadcast %cst_181 : f32 to vector<2x256xf32>
    %390 = arith.maximumf %388, %389 : vector<2x256xf32>
    %c6_182 = arith.constant 6 : index
    %c0_183 = arith.constant 0 : index
    %391 = vector.load %arg10[%c6_182, %c0_183] : memref<12x256xf32, #tpu.memory_space<vmem>>, vector<2x256xf32>
    tpu.vector_store %arg10[%c6_182, %c0_183], %390 {strides = array<i32>} : memref<12x256xf32, #tpu.memory_space<vmem>>, vector<2x256xf32>,
    %392 = vector.extract_strided_slice %277 {offsets = [8, 0], sizes = [2, 256], strides = [1, 1]} : vector<12x256xf32> to vector<2x256xf32>
    %393 = arith.addf %392, %390 : vector<2x256xf32>
    %c16_i32_184 = arith.constant 16 : i32
    %394 = tpu.dynamic_rotate %393 by %c16_i32_184 dim 1 : vector<2x256xf32>, i32 -> vector<2x256xf32>
    %395 = vector.broadcast %278 : vector<1x256xf32> to vector<2x256xf32>
    %396 = arith.mulf %394, %395 : vector<2x256xf32>
    %c240_i32_185 = arith.constant 240 : i32
    %397 = tpu.dynamic_rotate %393 by %c240_i32_185 dim 1 : vector<2x256xf32>, i32 -> vector<2x256xf32>
    %398 = vector.broadcast %279 : vector<1x256xf32> to vector<2x256xf32>
    %399 = arith.mulf %397, %398 : vector<2x256xf32>
    %c0_186 = arith.constant 0 : index
    %c48 = arith.constant 48 : index
    %400 = vector.load %arg5[%c0_186, %c48] : memref<2x60xf32, #tpu.memory_space<vmem>>, vector<2x2xf32>
    %cst_187 = arith.constant dense<0.000000e+00> : vector<2x256xf32>
    %401 = tpu.matmul %400, %396, %cst_187 {dimension_numbers = #tpu.dot_dimension_numbers<[1], [0], [0], [1], [0, 0, 1, 1], [], []>} : vector<2x2xf32>, vector<2x256xf32>, vector<2x256xf32> -> vector<2x256xf32>
    %c0_188 = arith.constant 0 : index
    %c50 = arith.constant 50 : index
    %402 = vector.load %arg5[%c0_188, %c50] : memref<2x60xf32, #tpu.memory_space<vmem>>, vector<2x2xf32>
    %cst_189 = arith.constant dense<0.000000e+00> : vector<2x256xf32>
    %403 = tpu.matmul %402, %393, %cst_189 {dimension_numbers = #tpu.dot_dimension_numbers<[1], [0], [0], [1], [0, 0, 1, 1], [], []>} : vector<2x2xf32>, vector<2x256xf32>, vector<2x256xf32> -> vector<2x256xf32>
    %404 = arith.addf %401, %403 : vector<2x256xf32>
    %c0_190 = arith.constant 0 : index
    %c52_191 = arith.constant 52 : index
    %405 = vector.load %arg5[%c0_190, %c52_191] : memref<2x60xf32, #tpu.memory_space<vmem>>, vector<2x2xf32>
    %cst_192 = arith.constant dense<0.000000e+00> : vector<2x256xf32>
    %406 = tpu.matmul %405, %399, %cst_192 {dimension_numbers = #tpu.dot_dimension_numbers<[1], [0], [0], [1], [0, 0, 1, 1], [], []>} : vector<2x2xf32>, vector<2x256xf32>, vector<2x256xf32> -> vector<2x256xf32>
    %407 = arith.addf %404, %406 : vector<2x256xf32>
    %cst_193 = arith.constant dense<0.000000e+00> : vector<2xf32>
    %408 = vector.multi_reduction <add>, %407, %cst_193 [1] : vector<2x256xf32> to vector<2xf32>
    %409 = vector.shape_cast %408 : vector<2xf32> to vector<2x1xf32>
    %cst_194 = arith.constant 2.560000e+02 : f32
    %410 = vector.broadcast %cst_194 : f32 to vector<2x1xf32>
    %411 = arith.divf %409, %410 : vector<2x1xf32>
    %412 = arith.mulf %407, %407 : vector<2x256xf32>
    %cst_195 = arith.constant dense<0.000000e+00> : vector<2xf32>
    %413 = vector.multi_reduction <add>, %412, %cst_195 [1] : vector<2x256xf32> to vector<2xf32>
    %414 = vector.shape_cast %413 : vector<2xf32> to vector<2x1xf32>
    %cst_196 = arith.constant 2.560000e+02 : f32
    %415 = vector.broadcast %cst_196 : f32 to vector<2x1xf32>
    %416 = arith.divf %414, %415 : vector<2x1xf32>
    %417 = vector.broadcast %411 : vector<2x1xf32> to vector<2x256xf32>
    %418 = arith.subf %407, %417 : vector<2x256xf32>
    %419 = arith.mulf %411, %411 : vector<2x1xf32>
    %420 = arith.subf %416, %419 : vector<2x1xf32>
    %cst_197 = arith.constant 9.99999974E-6 : f32
    %421 = vector.broadcast %cst_197 : f32 to vector<2x1xf32>
    %422 = arith.addf %420, %421 : vector<2x1xf32>
    %423 = math.rsqrt %422 : vector<2x1xf32>
    %424 = vector.broadcast %423 : vector<2x1xf32> to vector<2x256xf32>
    %425 = arith.mulf %418, %424 : vector<2x256xf32>
    %cst_198 = arith.constant 0.000000e+00 : f32
    %426 = vector.broadcast %cst_198 : f32 to vector<2x256xf32>
    %427 = arith.maximumf %425, %426 : vector<2x256xf32>
    %c8_199 = arith.constant 8 : index
    %c0_200 = arith.constant 0 : index
    %428 = vector.load %arg10[%c8_199, %c0_200] : memref<12x256xf32, #tpu.memory_space<vmem>>, vector<2x256xf32>
    tpu.vector_store %arg10[%c8_199, %c0_200], %427 {strides = array<i32>} : memref<12x256xf32, #tpu.memory_space<vmem>>, vector<2x256xf32>,
    %429 = vector.extract_strided_slice %277 {offsets = [10, 0], sizes = [2, 256], strides = [1, 1]} : vector<12x256xf32> to vector<2x256xf32>
    %430 = arith.addf %429, %427 : vector<2x256xf32>
    %c16_i32_201 = arith.constant 16 : i32
    %431 = tpu.dynamic_rotate %430 by %c16_i32_201 dim 1 : vector<2x256xf32>, i32 -> vector<2x256xf32>
    %432 = vector.broadcast %278 : vector<1x256xf32> to vector<2x256xf32>
    %433 = arith.mulf %431, %432 : vector<2x256xf32>
    %c240_i32_202 = arith.constant 240 : i32
    %434 = tpu.dynamic_rotate %430 by %c240_i32_202 dim 1 : vector<2x256xf32>, i32 -> vector<2x256xf32>
    %435 = vector.broadcast %279 : vector<1x256xf32> to vector<2x256xf32>
    %436 = arith.mulf %434, %435 : vector<2x256xf32>
    %c0_203 = arith.constant 0 : index
    %c54 = arith.constant 54 : index
    %437 = vector.load %arg5[%c0_203, %c54] : memref<2x60xf32, #tpu.memory_space<vmem>>, vector<2x2xf32>
    %cst_204 = arith.constant dense<0.000000e+00> : vector<2x256xf32>
    %438 = tpu.matmul %437, %433, %cst_204 {dimension_numbers = #tpu.dot_dimension_numbers<[1], [0], [0], [1], [0, 0, 1, 1], [], []>} : vector<2x2xf32>, vector<2x256xf32>, vector<2x256xf32> -> vector<2x256xf32>
    %c0_205 = arith.constant 0 : index
    %c56 = arith.constant 56 : index
    %439 = vector.load %arg5[%c0_205, %c56] : memref<2x60xf32, #tpu.memory_space<vmem>>, vector<2x2xf32>
    %cst_206 = arith.constant dense<0.000000e+00> : vector<2x256xf32>
    %440 = tpu.matmul %439, %430, %cst_206 {dimension_numbers = #tpu.dot_dimension_numbers<[1], [0], [0], [1], [0, 0, 1, 1], [], []>} : vector<2x2xf32>, vector<2x256xf32>, vector<2x256xf32> -> vector<2x256xf32>
    %441 = arith.addf %438, %440 : vector<2x256xf32>
    %c0_207 = arith.constant 0 : index
    %c58 = arith.constant 58 : index
    %442 = vector.load %arg5[%c0_207, %c58] : memref<2x60xf32, #tpu.memory_space<vmem>>, vector<2x2xf32>
    %cst_208 = arith.constant dense<0.000000e+00> : vector<2x256xf32>
    %443 = tpu.matmul %442, %436, %cst_208 {dimension_numbers = #tpu.dot_dimension_numbers<[1], [0], [0], [1], [0, 0, 1, 1], [], []>} : vector<2x2xf32>, vector<2x256xf32>, vector<2x256xf32> -> vector<2x256xf32>
    %444 = arith.addf %441, %443 : vector<2x256xf32>
    %cst_209 = arith.constant dense<0.000000e+00> : vector<2xf32>
    %445 = vector.multi_reduction <add>, %444, %cst_209 [1] : vector<2x256xf32> to vector<2xf32>
    %446 = vector.shape_cast %445 : vector<2xf32> to vector<2x1xf32>
    %cst_210 = arith.constant 2.560000e+02 : f32
    %447 = vector.broadcast %cst_210 : f32 to vector<2x1xf32>
    %448 = arith.divf %446, %447 : vector<2x1xf32>
    %449 = arith.mulf %444, %444 : vector<2x256xf32>
    %cst_211 = arith.constant dense<0.000000e+00> : vector<2xf32>
    %450 = vector.multi_reduction <add>, %449, %cst_211 [1] : vector<2x256xf32> to vector<2xf32>
    %451 = vector.shape_cast %450 : vector<2xf32> to vector<2x1xf32>
    %cst_212 = arith.constant 2.560000e+02 : f32
    %452 = vector.broadcast %cst_212 : f32 to vector<2x1xf32>
    %453 = arith.divf %451, %452 : vector<2x1xf32>
    %454 = vector.broadcast %448 : vector<2x1xf32> to vector<2x256xf32>
    %455 = arith.subf %444, %454 : vector<2x256xf32>
    %456 = arith.mulf %448, %448 : vector<2x1xf32>
    %457 = arith.subf %453, %456 : vector<2x1xf32>
    %cst_213 = arith.constant 9.99999974E-6 : f32
    %458 = vector.broadcast %cst_213 : f32 to vector<2x1xf32>
    %459 = arith.addf %457, %458 : vector<2x1xf32>
    %460 = math.rsqrt %459 : vector<2x1xf32>
    %461 = vector.broadcast %460 : vector<2x1xf32> to vector<2x256xf32>
    %462 = arith.mulf %455, %461 : vector<2x256xf32>
    %cst_214 = arith.constant 0.000000e+00 : f32
    %463 = vector.broadcast %cst_214 : f32 to vector<2x256xf32>
    %464 = arith.maximumf %462, %463 : vector<2x256xf32>
    %c10_215 = arith.constant 10 : index
    %c0_216 = arith.constant 0 : index
    %465 = vector.load %arg10[%c10_215, %c0_216] : memref<12x256xf32, #tpu.memory_space<vmem>>, vector<2x256xf32>
    tpu.vector_store %arg10[%c10_215, %c0_216], %464 {strides = array<i32>} : memref<12x256xf32, #tpu.memory_space<vmem>>, vector<2x256xf32>,
    %c0_217 = arith.constant 0 : index
    %c0_218 = arith.constant 0 : index
    %466 = vector.load %arg10[%c0_217, %c0_218] : memref<12x256xf32, #tpu.memory_space<vmem>>, vector<12x256xf32>
    %c0_219 = arith.constant 0 : index
    %c12_220 = arith.constant 12 : index
    %467 = vector.load %arg4[%c0_219, %c12_220] : memref<16x24xf32, #tpu.memory_space<vmem>>, vector<16x12xf32>
    %c0_221 = arith.constant 0 : index
    %c68 = arith.constant 68 : index
    %468 = vector.load %arg2[%c0_221, %c68] : memref<12x100xf32, #tpu.memory_space<vmem>>, vector<12x16xf32>
    %c0_222 = arith.constant 0 : index
    %c4_223 = arith.constant 4 : index
    %469 = vector.load %arg3[%c0_222, %c4_223] : memref<12x6xf32, #tpu.memory_space<vmem>>, vector<12x1xf32>
    %c0_224 = arith.constant 0 : index
    %c84 = arith.constant 84 : index
    %470 = vector.load %arg2[%c0_224, %c84] : memref<12x100xf32, #tpu.memory_space<vmem>>, vector<12x16xf32>
    %c0_225 = arith.constant 0 : index
    %c5 = arith.constant 5 : index
    %471 = vector.load %arg3[%c0_225, %c5] : memref<12x6xf32, #tpu.memory_space<vmem>>, vector<12x1xf32>
    %cst_226 = arith.constant dense<0.000000e+00> : vector<12x32xf32>
    %472 = tpu.matmul %466, %26, %cst_226 {dimension_numbers = #tpu.dot_dimension_numbers<[1], [0], [0], [1], [0, 0, 1, 1], [], []>} : vector<12x256xf32>, vector<256x32xf32>, vector<12x32xf32> -> vector<12x32xf32>
    %cst_227 = arith.constant dense<0.000000e+00> : vector<16x32xf32>
    %473 = tpu.matmul %467, %472, %cst_227 {dimension_numbers = #tpu.dot_dimension_numbers<[1], [0], [0], [1], [0, 0, 1, 1], [], []>} : vector<16x12xf32>, vector<12x32xf32>, vector<16x32xf32> -> vector<16x32xf32>
    %cst_228 = arith.constant dense<0.000000e+00> : vector<16xf32>
    %474 = vector.multi_reduction <add>, %473, %cst_228 [1] : vector<16x32xf32> to vector<16xf32>
    %475 = vector.shape_cast %474 : vector<16xf32> to vector<16x1xf32>
    %cst_229 = arith.constant 3.200000e+01 : f32
    %476 = vector.broadcast %cst_229 : f32 to vector<16x1xf32>
    %477 = arith.divf %475, %476 : vector<16x1xf32>
    %478 = arith.mulf %473, %473 : vector<16x32xf32>
    %cst_230 = arith.constant dense<0.000000e+00> : vector<16xf32>
    %479 = vector.multi_reduction <add>, %478, %cst_230 [1] : vector<16x32xf32> to vector<16xf32>
    %480 = vector.shape_cast %479 : vector<16xf32> to vector<16x1xf32>
    %cst_231 = arith.constant 3.200000e+01 : f32
    %481 = vector.broadcast %cst_231 : f32 to vector<16x1xf32>
    %482 = arith.divf %480, %481 : vector<16x1xf32>
    %483 = vector.broadcast %477 : vector<16x1xf32> to vector<16x32xf32>
    %484 = arith.subf %473, %483 : vector<16x32xf32>
    %485 = arith.mulf %477, %477 : vector<16x1xf32>
    %486 = arith.subf %482, %485 : vector<16x1xf32>
    %cst_232 = arith.constant 9.99999974E-6 : f32
    %487 = vector.broadcast %cst_232 : f32 to vector<16x1xf32>
    %488 = arith.addf %486, %487 : vector<16x1xf32>
    %489 = math.rsqrt %488 : vector<16x1xf32>
    %490 = vector.broadcast %489 : vector<16x1xf32> to vector<16x32xf32>
    %491 = arith.mulf %484, %490 : vector<16x32xf32>
    %cst_233 = arith.constant 3.000000e+00 : f32
    %492 = vector.broadcast %cst_233 : f32 to vector<16x32xf32>
    %493 = arith.addf %491, %492 : vector<16x32xf32>
    %cst_234 = arith.constant 0.000000e+00 : f32
    %cst_235 = arith.constant 6.000000e+00 : f32
    %494 = vector.broadcast %cst_234 : f32 to vector<16x32xf32>
    %495 = arith.maximumf %494, %493 : vector<16x32xf32>
    %496 = vector.broadcast %cst_235 : f32 to vector<16x32xf32>
    %497 = arith.minimumf %496, %495 : vector<16x32xf32>
    %498 = arith.mulf %491, %497 : vector<16x32xf32>
    %cst_236 = arith.constant 0.166666672 : f32
    %499 = vector.broadcast %cst_236 : f32 to vector<16x32xf32>
    %500 = arith.mulf %498, %499 : vector<16x32xf32>
    %501 = vector.extract_strided_slice %500 {offsets = [0, 0], sizes = [16, 16], strides = [1, 1]} : vector<16x32xf32> to vector<16x16xf32>
    %cst_237 = arith.constant dense<0.000000e+00> : vector<12x16xf32>
    %502 = tpu.matmul %468, %501, %cst_237 {dimension_numbers = #tpu.dot_dimension_numbers<[1], [0], [0], [1], [0, 0, 1, 1], [], []>} : vector<12x16xf32>, vector<16x16xf32>, vector<12x16xf32> -> vector<12x16xf32>
    %503 = vector.broadcast %469 : vector<12x1xf32> to vector<12x16xf32>
    %504 = arith.addf %502, %503 : vector<12x16xf32>
    %505 = arith.negf %504 : vector<12x16xf32>
    %506 = math.exp %505 : vector<12x16xf32>
    %cst_238 = arith.constant 1.000000e+00 : f32
    %507 = vector.broadcast %cst_238 : f32 to vector<12x16xf32>
    %508 = arith.addf %507, %506 : vector<12x16xf32>
    %509 = arith.divf %507, %508 : vector<12x16xf32>
    %510 = vector.extract_strided_slice %500 {offsets = [0, 16], sizes = [16, 16], strides = [1, 1]} : vector<16x32xf32> to vector<16x16xf32>
    %cst_239 = arith.constant dense<0.000000e+00> : vector<12x16xf32>
    %511 = tpu.matmul %470, %510, %cst_239 {dimension_numbers = #tpu.dot_dimension_numbers<[1], [0], [0], [1], [0, 0, 1, 1], [], []>} : vector<12x16xf32>, vector<16x16xf32>, vector<12x16xf32> -> vector<12x16xf32>
    %512 = vector.broadcast %471 : vector<12x1xf32> to vector<12x16xf32>
    %513 = arith.addf %511, %512 : vector<12x16xf32>
    %514 = arith.negf %513 : vector<12x16xf32>
    %515 = math.exp %514 : vector<12x16xf32>
    %cst_240 = arith.constant 1.000000e+00 : f32
    %516 = vector.broadcast %cst_240 : f32 to vector<12x16xf32>
    %517 = arith.addf %516, %515 : vector<12x16xf32>
    %518 = arith.divf %516, %517 : vector<12x16xf32>
    %cst_241 = arith.constant dense<0.000000e+00> : vector<12x256xf32>
    %519 = tpu.matmul %518, %25, %cst_241 {dimension_numbers = #tpu.dot_dimension_numbers<[1], [0], [0], [1], [0, 0, 1, 1], [], []>} : vector<12x16xf32>, vector<16x256xf32>, vector<12x256xf32> -> vector<12x256xf32>
    %520 = arith.mulf %466, %519 : vector<12x256xf32>
    %cst_242 = arith.constant dense<0.000000e+00> : vector<12x256xf32>
    %521 = tpu.matmul %509, %24, %cst_242 {dimension_numbers = #tpu.dot_dimension_numbers<[1], [0], [0], [1], [0, 0, 1, 1], [], []>} : vector<12x16xf32>, vector<16x256xf32>, vector<12x256xf32> -> vector<12x256xf32>
    %522 = arith.mulf %520, %521 : vector<12x256xf32>
    %523 = arith.addf %522, %466 : vector<12x256xf32>
    %c0_243 = arith.constant 0 : index
    %c24_244 = arith.constant 24 : index
    %524 = vector.load %arg2[%c0_243, %c24_244] : memref<12x100xf32, #tpu.memory_space<vmem>>, vector<12x12xf32>
    %cst_245 = arith.constant dense<0.000000e+00> : vector<12x256xf32>
    %525 = tpu.matmul %524, %523, %cst_245 {dimension_numbers = #tpu.dot_dimension_numbers<[1], [0], [0], [1], [0, 0, 1, 1], [], []>} : vector<12x12xf32>, vector<12x256xf32>, vector<12x256xf32> -> vector<12x256xf32>
    %c0_246 = arith.constant 0 : index
    %c1_247 = arith.constant 1 : index
    %526 = vector.load %arg3[%c0_246, %c1_247] : memref<12x6xf32, #tpu.memory_space<vmem>>, vector<12x1xf32>
    %527 = vector.broadcast %526 : vector<12x1xf32> to vector<12x256xf32>
    %528 = arith.addf %525, %527 : vector<12x256xf32>
    %529 = arith.addf %528, %1 : vector<12x256xf32>
    %530 = arith.addf %529, %277 : vector<12x256xf32>
    %cst_248 = arith.constant 0.000000e+00 : f32
    %531 = vector.broadcast %cst_248 : f32 to vector<12x256xf32>
    %532 = arith.maximumf %530, %531 : vector<12x256xf32>
    %c0_249 = arith.constant 0 : index
    %c0_250 = arith.constant 0 : index
    %c0_251 = arith.constant 0 : index
    %533 = vector.load %arg9[%c0_249, %c0_250, %c0_251] : memref<1x12x256xf32, #tpu.memory_space<vmem>>, vector<1x12x256xf32>
    %534 = vector.shape_cast %533 : vector<1x12x256xf32> to vector<12x256xf32>
    %535 = vector.shape_cast %532 : vector<12x256xf32> to vector<1x12x256xf32>
    tpu.vector_store %arg9[%c0_249, %c0_250, %c0_251], %535 {strides = array<i32>} : memref<1x12x256xf32, #tpu.memory_space<vmem>>, vector<1x12x256xf32>,
    return
  }
  func.func @transform_0(%arg0: i32) -> (i32, i32, i32) {
    %c0_i32 = arith.constant 0 : i32
    %c0_i32_0 = arith.constant 0 : i32
    %c0_i32_1 = arith.constant 0 : i32
    return %arg0, %c0_i32, %c0_i32_0 : i32, i32, i32
  }
  func.func @transform_1(%arg0: i32) -> (i32, i32) {
    %c0_i32 = arith.constant 0 : i32
    %c0_i32_0 = arith.constant 0 : i32
    %c0_i32_1 = arith.constant 0 : i32
    return %c0_i32, %c0_i32_0 : i32, i32
  }
  func.func @transform_2(%arg0: i32) -> (i32, i32) {
    %c0_i32 = arith.constant 0 : i32
    %c0_i32_0 = arith.constant 0 : i32
    %c0_i32_1 = arith.constant 0 : i32
    return %c0_i32, %c0_i32_0 : i32, i32
  }
  func.func @transform_3(%arg0: i32) -> (i32, i32) {
    %c0_i32 = arith.constant 0 : i32
    %c0_i32_0 = arith.constant 0 : i32
    %c0_i32_1 = arith.constant 0 : i32
    return %c0_i32, %c0_i32_0 : i32, i32
  }
  func.func @transform_4(%arg0: i32) -> (i32, i32) {
    %c0_i32 = arith.constant 0 : i32
    %c0_i32_0 = arith.constant 0 : i32
    %c0_i32_1 = arith.constant 0 : i32
    return %c0_i32, %c0_i32_0 : i32, i32
  }
  func.func @transform_5(%arg0: i32) -> (i32, i32) {
    %c0_i32 = arith.constant 0 : i32
    %c0_i32_0 = arith.constant 0 : i32
    %c0_i32_1 = arith.constant 0 : i32
    return %c0_i32, %c0_i32_0 : i32, i32
  }
  func.func @transform_6(%arg0: i32) -> (i32, i32) {
    %c0_i32 = arith.constant 0 : i32
    %c0_i32_0 = arith.constant 0 : i32
    %c0_i32_1 = arith.constant 0 : i32
    return %c0_i32, %c0_i32_0 : i32, i32
  }
  func.func @transform_7(%arg0: i32) -> (i32, i32) {
    %c0_i32 = arith.constant 0 : i32
    %c0_i32_0 = arith.constant 0 : i32
    %c0_i32_1 = arith.constant 0 : i32
    return %c0_i32, %c0_i32_0 : i32, i32
  }
  func.func @transform_8(%arg0: i32) -> (i32, i32, i32) {
    %c0_i32 = arith.constant 0 : i32
    %c0_i32_0 = arith.constant 0 : i32
    %c0_i32_1 = arith.constant 0 : i32
    return %arg0, %c0_i32, %c0_i32_0 : i32, i32, i32
  }
}

</mosaic_0001>

<llo_original>
// kernel: double_conv_forward.1
$region0: #{double_conv_forward.1}
  #allocation0 [shape = 'u32[]', space=smem, size = 0x4, offset = 0x4, fixed_abs, tag = 'smem constant byte address 0x4 - core index']
  #allocation1 [shape = 'u32[72,128]{1,0:T(1,128)}', space=vmem, size = 0x9000, scoped, tag = 'internal scratch']
  #allocation2 [shape = 'f32[12,256]{1,0:T(8,128)}', space=vmem, size = 0x4000, scoped, tag = 'scratch operand']
  %s0 = inlined_call_operand.vmem [shape: f32[2,12,256], index: 0, kind: input, shape index: {}]
  %s1 = inlined_call_operand.vmem [shape: f32[12,100], index: 1, kind: input, shape index: {}]
  %s2 = inlined_call_operand.vmem [shape: f32[12,6], index: 2, kind: input, shape index: {}]
  %s3 = inlined_call_operand.vmem [shape: f32[16,24], index: 3, kind: input, shape index: {}]
  %s4 = inlined_call_operand.vmem [shape: f32[2,60], index: 4, kind: input, shape index: {}]
  %s5 = inlined_call_operand.vmem [shape: f32[256,32], index: 5, kind: input, shape index: {}]
  %s6 = inlined_call_operand.vmem [shape: f32[32,256], index: 6, kind: input, shape index: {}]
  %s7 = inlined_call_operand.vmem [shape: f32[4,256], index: 7, kind: input, shape index: {}]
  %s8 = inlined_call_operand.vmem [shape: f32[2,12,256], index: 8, kind: output, shape index: {}]
  %s9 = sld [smem:[#allocation0]]
  $region65: #{double_conv_forward.1} parent=0
    _
  %s11 = ssub.s32 1, %s9
  %s12 = scalar_select 0, %s11, %s9
  loop: start=0, step=1, limit=4
  $region2: #{double_conv_forward.1} parent=0 // loop_pre_header
    _
  $region3: #{double_conv_forward.1} parent=0 // loop_header
    %s14 = sphi 0, %s18
    %p15 = scmp.ge.s32.totalorder %s14, 4
    %s24 = sphi 0, %s26
    %s27 = sphi 0, %s24
    %s28 = sphi 0, %s27
    %s44 = sphi 0, %s28
    %s48 = sphi 0, %s48
    %s50 = sphi 0, %s48
    %s51 = sphi 0, %s50
    %s65 = sphi 0, %s51
    %s69 = sphi 0, %s69
    %s71 = sphi 0, %s69
    %s72 = sphi 0, %s71
    %s86 = sphi 0, %s72
    %s90 = sphi 0, %s90
    %s92 = sphi 0, %s90
    %s93 = sphi 0, %s92
    %s107 = sphi 0, %s93
    %s111 = sphi 0, %s111
    %s113 = sphi 0, %s111
    %s114 = sphi 0, %s113
    %s128 = sphi 0, %s114
    %s132 = sphi 0, %s132
    %s134 = sphi 0, %s132
    %s135 = sphi 0, %s134
    %s149 = sphi 0, %s135
    %s153 = sphi 0, %s153
    %s155 = sphi 0, %s153
    %s156 = sphi 0, %s155
    %s170 = sphi 0, %s156
    %s174 = sphi 0, %s174
    %s176 = sphi 0, %s174
    %s177 = sphi 0, %s176
    %s191 = sphi 0, %s177
    %s197 = sphi 0, %s199
    %s200 = sphi 0, %s197
    %s201 = sphi 0, %s200
    %s217 = sphi 0, %s201
  $region4: #{double_conv_forward.1} parent=0 // loop_header_branch
    %17 = sbr.rel (%p15) target = $region8
  $region5: #{double_conv_forward.1} parent=0 // loop_body
    %s19 = ssub.s32 %s14, 1
    %s20 = ssub.s32 %s14, 2
    %s21 = sadd.s32 %s14, 1
    %s22 = ssub.s32 %s14, %s21
    %p23 = scmp.eq.s32.totalorder %s22, 0
    %s25 = sadd.s32 %s24, 1
    %s26 = scalar_select %p23, %s24, %s25
    %p29 = pneg %p23
    %p30 = scmp.eq.s32.totalorder %s14, 1
    %p31 = por %p29, %p30
    %p32 = scmp.ne.s32.totalorder %s24, %s27
    %p33 = scmp.eq.s32.totalorder %s14, 0
    %p34 = por %p32, %p33
    %p35 = scmp.ne.s32.totalorder %s24, %s27
    %p36 = scmp.eq.s32.totalorder %s19, 1
    %p37 = por %p35, %p36
    %p38 = scmp.ne.s32.totalorder %s27, %s28
    %p39 = scmp.eq.s32.totalorder %s19, 0
    %p40 = por %p38, %p39
    %p41 = scmp.ne.s32.totalorder %s27, %s28
    %p42 = scmp.eq.s32.totalorder %s20, 1
    %p43 = por %p41, %p42
    %p45 = scmp.ne.s32.totalorder %s28, %s44
    %p46 = scmp.eq.s32.totalorder %s20, 0
    %p47 = por %p45, %p46
    %s49 = sadd.s32 %s48, 1
    %p52 = scmp.eq.s32.totalorder %s14, 1
    %p53 = scmp.ne.s32.totalorder %s48, %s50
    %p54 = scmp.eq.s32.totalorder %s14, 0
    %p55 = por %p53, %p54
    %p56 = scmp.ne.s32.totalorder %s48, %s50
    %p57 = scmp.eq.s32.totalorder %s19, 1
    %p58 = por %p56, %p57
    %p59 = scmp.ne.s32.totalorder %s50, %s51
    %p60 = scmp.eq.s32.totalorder %s19, 0
    %p61 = por %p59, %p60
    %p62 = scmp.ne.s32.totalorder %s50, %s51
    %p63 = scmp.eq.s32.totalorder %s20, 1
    %p64 = por %p62, %p63
    %p66 = scmp.ne.s32.totalorder %s51, %s65
    %p67 = scmp.eq.s32.totalorder %s20, 0
    %p68 = por %p66, %p67
    %s70 = sadd.s32 %s69, 1
    %p73 = scmp.eq.s32.totalorder %s14, 1
    %p74 = scmp.ne.s32.totalorder %s69, %s71
    %p75 = scmp.eq.s32.totalorder %s14, 0
    %p76 = por %p74, %p75
    %p77 = scmp.ne.s32.totalorder %s69, %s71
    %p78 = scmp.eq.s32.totalorder %s19, 1
    %p79 = por %p77, %p78
    %p80 = scmp.ne.s32.totalorder %s71, %s72
    %p81 = scmp.eq.s32.totalorder %s19, 0
    %p82 = por %p80, %p81
    %p83 = scmp.ne.s32.totalorder %s71, %s72
    %p84 = scmp.eq.s32.totalorder %s20, 1
    %p85 = por %p83, %p84
    %p87 = scmp.ne.s32.totalorder %s72, %s86
    %p88 = scmp.eq.s32.totalorder %s20, 0
    %p89 = por %p87, %p88
    %s91 = sadd.s32 %s90, 1
    %p94 = scmp.eq.s32.totalorder %s14, 1
    %p95 = scmp.ne.s32.totalorder %s90, %s92
    %p96 = scmp.eq.s32.totalorder %s14, 0
    %p97 = por %p95, %p96
    %p98 = scmp.ne.s32.totalorder %s90, %s92
    %p99 = scmp.eq.s32.totalorder %s19, 1
    %p100 = por %p98, %p99
    %p101 = scmp.ne.s32.totalorder %s92, %s93
    %p102 = scmp.eq.s32.totalorder %s19, 0
    %p103 = por %p101, %p102
    %p104 = scmp.ne.s32.totalorder %s92, %s93
    %p105 = scmp.eq.s32.totalorder %s20, 1
    %p106 = por %p104, %p105
    %p108 = scmp.ne.s32.totalorder %s93, %s107
    %p109 = scmp.eq.s32.totalorder %s20, 0
    %p110 = por %p108, %p109
    %s112 = sadd.s32 %s111, 1
    %p115 = scmp.eq.s32.totalorder %s14, 1
    %p116 = scmp.ne.s32.totalorder %s111, %s113
    %p117 = scmp.eq.s32.totalorder %s14, 0
    %p118 = por %p116, %p117
    %p119 = scmp.ne.s32.totalorder %s111, %s113
    %p120 = scmp.eq.s32.totalorder %s19, 1
    %p121 = por %p119, %p120
    %p122 = scmp.ne.s32.totalorder %s113, %s114
    %p123 = scmp.eq.s32.totalorder %s19, 0
    %p124 = por %p122, %p123
    %p125 = scmp.ne.s32.totalorder %s113, %s114
    %p126 = scmp.eq.s32.totalorder %s20, 1
    %p127 = por %p125, %p126
    %p129 = scmp.ne.s32.totalorder %s114, %s128
    %p130 = scmp.eq.s32.totalorder %s20, 0
    %p131 = por %p129, %p130
    %s133 = sadd.s32 %s132, 1
    %p136 = scmp.eq.s32.totalorder %s14, 1
    %p137 = scmp.ne.s32.totalorder %s132, %s134
    %p138 = scmp.eq.s32.totalorder %s14, 0
    %p139 = por %p137, %p138
    %p140 = scmp.ne.s32.totalorder %s132, %s134
    %p141 = scmp.eq.s32.totalorder %s19, 1
    %p142 = por %p140, %p141
    %p143 = scmp.ne.s32.totalorder %s134, %s135
    %p144 = scmp.eq.s32.totalorder %s19, 0
    %p145 = por %p143, %p144
    %p146 = scmp.ne.s32.totalorder %s134, %s135
    %p147 = scmp.eq.s32.totalorder %s20, 1
    %p148 = por %p146, %p147
    %p150 = scmp.ne.s32.totalorder %s135, %s149
    %p151 = scmp.eq.s32.totalorder %s20, 0
    %p152 = por %p150, %p151
    %s154 = sadd.s32 %s153, 1
    %p157 = scmp.eq.s32.totalorder %s14, 1
    %p158 = scmp.ne.s32.totalorder %s153, %s155
    %p159 = scmp.eq.s32.totalorder %s14, 0
    %p160 = por %p158, %p159
    %p161 = scmp.ne.s32.totalorder %s153, %s155
    %p162 = scmp.eq.s32.totalorder %s19, 1
    %p163 = por %p161, %p162
    %p164 = scmp.ne.s32.totalorder %s155, %s156
    %p165 = scmp.eq.s32.totalorder %s19, 0
    %p166 = por %p164, %p165
    %p167 = scmp.ne.s32.totalorder %s155, %s156
    %p168 = scmp.eq.s32.totalorder %s20, 1
    %p169 = por %p167, %p168
    %p171 = scmp.ne.s32.totalorder %s156, %s170
    %p172 = scmp.eq.s32.totalorder %s20, 0
    %p173 = por %p171, %p172
    %s175 = sadd.s32 %s174, 1
    %p178 = scmp.eq.s32.totalorder %s14, 1
    %p179 = scmp.ne.s32.totalorder %s174, %s176
    %p180 = scmp.eq.s32.totalorder %s14, 0
    %p181 = por %p179, %p180
    %p182 = scmp.ne.s32.totalorder %s174, %s176
    %p183 = scmp.eq.s32.totalorder %s19, 1
    %p184 = por %p182, %p183
    %p185 = scmp.ne.s32.totalorder %s176, %s177
    %p186 = scmp.eq.s32.totalorder %s19, 0
    %p187 = por %p185, %p186
    %p188 = scmp.ne.s32.totalorder %s176, %s177
    %p189 = scmp.eq.s32.totalorder %s20, 1
    %p190 = por %p188, %p189
    %p192 = scmp.ne.s32.totalorder %s177, %s191
    %p193 = scmp.eq.s32.totalorder %s20, 0
    %p194 = por %p192, %p193
    %s195 = ssub.s32 %s14, %s21
    %p196 = scmp.eq.s32.totalorder %s195, 0
    %s198 = sadd.s32 %s197, 1
    %s199 = scalar_select %p196, %s197, %s198
    %p202 = pneg %p196
    %p203 = scmp.eq.s32.totalorder %s14, 1
    %p204 = por %p202, %p203
    %p205 = scmp.ne.s32.totalorder %s197, %s200
    %p206 = scmp.eq.s32.totalorder %s14, 0
    %p207 = por %p205, %p206
    %p208 = scmp.ne.s32.totalorder %s197, %s200
    %p209 = scmp.eq.s32.totalorder %s19, 1
    %p210 = por %p208, %p209
    %p211 = scmp.ne.s32.totalorder %s200, %s201
    %p212 = scmp.eq.s32.totalorder %s19, 0
    %p213 = por %p211, %p212
    %p214 = scmp.ne.s32.totalorder %s200, %s201
    %p215 = scmp.eq.s32.totalorder %s20, 1
    %p216 = por %p214, %p215
    %p218 = scmp.ne.s32.totalorder %s201, %s217
    %p219 = scmp.eq.s32.totalorder %s20, 0
    %p220 = por %p218, %p219
    %p221 = scmp.le.s32.totalorder 1, %s14
    %p222 = scmp.lt.s32.totalorder %s14, 3
    %p223 = pnand %p221, %p222
    %p224 = pneg %p223
    // Predicated region
    $region9: #{double_conv_forward.1} parent=5 // pred_check
      _
    $region10: #{double_conv_forward.1} parent=5 // pred_check_branch
      %226 = sbr.rel (%p223) target = $region12
    $region11: #{double_conv_forward.1} parent=5 // pred_region
      %s227 = ssub.s32 %s14, 1
      // Predicated region
      $region13: #{double_conv_forward.1} parent=11 // pred_check
        %p228 = pneg %p61
      $region14: #{double_conv_forward.1} parent=11 // pred_check_branch
        %230 = sbr.rel (%p228) target = $region16
      $region15: #{double_conv_forward.1} parent=11 // pred_region
        _
      $region16: #{double_conv_forward.1} parent=11 // pred_fallthru
        _
      // Predicated region
      $region17: #{double_conv_forward.1} parent=11 // pred_check
        %p231 = pneg %p82
      $region18: #{double_conv_forward.1} parent=11 // pred_check_branch
        %233 = sbr.rel (%p231) target = $region20
      $region19: #{double_conv_forward.1} parent=11 // pred_region
        _
      $region20: #{double_conv_forward.1} parent=11 // pred_fallthru
        _
      // Predicated region
      $region21: #{double_conv_forward.1} parent=11 // pred_check
        %p234 = pneg %p103
      $region22: #{double_conv_forward.1} parent=11 // pred_check_branch
        %236 = sbr.rel (%p234) target = $region24
      $region23: #{double_conv_forward.1} parent=11 // pred_region
        _
      $region24: #{double_conv_forward.1} parent=11 // pred_fallthru
        _
      // Predicated region
      $region25: #{double_conv_forward.1} parent=11 // pred_check
        %p237 = pneg %p124
      $region26: #{double_conv_forward.1} parent=11 // pred_check_branch
        %239 = sbr.rel (%p237) target = $region28
      $region27: #{double_conv_forward.1} parent=11 // pred_region
        _
      $region28: #{double_conv_forward.1} parent=11 // pred_fallthru
        _
      // Predicated region
      $region29: #{double_conv_forward.1} parent=11 // pred_check
        %p240 = pneg %p145
      $region30: #{double_conv_forward.1} parent=11 // pred_check_branch
        %242 = sbr.rel (%p240) target = $region32
      $region31: #{double_conv_forward.1} parent=11 // pred_region
        _
      $region32: #{double_conv_forward.1} parent=11 // pred_fallthru
        _
      // Predicated region
      $region33: #{double_conv_forward.1} parent=11 // pred_check
        %p243 = pneg %p166
      $region34: #{double_conv_forward.1} parent=11 // pred_check_branch
        %245 = sbr.rel (%p243) target = $region36
      $region35: #{double_conv_forward.1} parent=11 // pred_region
        _
      $region36: #{double_conv_forward.1} parent=11 // pred_fallthru
        _
      // Predicated region
      $region37: #{double_conv_forward.1} parent=11 // pred_check
        %p246 = pneg %p187
      $region38: #{double_conv_forward.1} parent=11 // pred_check_branch
        %248 = sbr.rel (%p246) target = $region40
      $region39: #{double_conv_forward.1} parent=11 // pred_region
        _
      $region40: #{double_conv_forward.1} parent=11 // pred_fallthru
        _
    $region12: #{double_conv_forward.1} parent=5 // pred_fallthru
      _
    %p249 = scmp.lt.s32.totalorder %s14, 2
    // Predicated region
    $region41: #{double_conv_forward.1} parent=5 // pred_check
      %p250 = pneg %p249
    $region42: #{double_conv_forward.1} parent=5 // pred_check_branch
      %252 = sbr.rel (%p250) target = $region44
    $region43: #{double_conv_forward.1} parent=5 // pred_region
      // Predicated region
      $region45: #{double_conv_forward.1} parent=43 // pred_check
        %p253 = pneg %p34
      $region46: #{double_conv_forward.1} parent=43 // pred_check_branch
        %255 = sbr.rel (%p253) target = $region48
      $region47: #{double_conv_forward.1} parent=43 // pred_region
        %p256 = scmp.lt.s32.totalorder %s14, 1
        %s257 = scalar_select %p256, %s14, 1
        %s258 = smul.addr %s257, 4
        %s259 = smul.addr %s258, 8
        %s260 = scalar_lea.vmem %s0, %s259
      $region48: #{double_conv_forward.1} parent=43 // pred_fallthru
        _
    $region44: #{double_conv_forward.1} parent=5 // pred_fallthru
      _
    %p261 = scmp.le.s32.totalorder 1, %s14
    %p262 = scmp.lt.s32.totalorder %s14, 3
    %p263 = pnand %p261, %p262
    %p264 = pneg %p263
    // Predicated region
    $region49: #{double_conv_forward.1} parent=5 // pred_check
      _
    $region50: #{double_conv_forward.1} parent=5 // pred_check_branch
      %266 = sbr.rel (%p263) target = $region52
    $region51: #{double_conv_forward.1} parent=5 // pred_region
      %s267 = ssub.s32 %s14, 1
      %p268 = scmp.lt.s32.totalorder %s19, 1
      %s269 = scalar_select %p268, %s19, 1
      %s270 = smul.addr %s269, 4
      %s271 = smul.addr %s270, 8
      %s272 = scalar_lea.vmem %s0, %s271
      %p273 = pneg %p40
      %p274 = pneg %p37
      %p275 = pneg %p61
      %p276 = pneg %p58
      %p277 = pneg %p82
      %p278 = pneg %p79
      %p279 = pneg %p103
      %p280 = pneg %p100
      %p281 = pneg %p124
      %p282 = pneg %p121
      %p283 = pneg %p145
      %p284 = pneg %p142
      %p285 = pneg %p166
      %p286 = pneg %p163
      %p287 = pneg %p187
      %p288 = pneg %p184
      %p289 = pneg %p213
      %p290 = pneg %p210
      %p291 = scmp.lt.s32.totalorder %s19, 1
      %s292 = scalar_select %p291, %s19, 1
      %s293 = smul.addr %s292, 4
      %s294 = smul.addr %s293, 8
      %s295 = scalar_lea.vmem %s8, %s294
      %p296 = scmp.lt.s32.totalorder %s19, 1
      %s297 = scalar_select %p296, %s19, 1
      %s298 = smul.addr %s297, 4
      %s299 = smul.addr %s298, 8
      %s300 = scalar_lea.vmem %s0, %s299
      %p301 = scmp.lt.s32.totalorder %s19, 1
      %s302 = scalar_select %p301, %s19, 1
      %s303 = smul.addr %s302, 4
      %s304 = smul.addr %s303, 8
      %s305 = scalar_lea.vmem %s8, %s304
      %v306 = vld [vmem:[%s300] sm:$0xff]
      %v307 = vld [vmem:[%s300 + $0x8] sm:$0xff]
      %v308 = vld [vmem:[%s300 + $0x10] sm:$0xf]
      %v309 = vld [vmem:[%s300 + $0x18] sm:$0xf]
      %v310 = vld [vmem:[%s1] sm:$0xff]
      %v311 = vld [vmem:[%s1 + $0x8] sm:$0xf]
      %vm312 = vcmask 97280
      %v314 = vsel %vm312, %v310, 0
      %v317 = vsel %vm312, %v311, 0
      %vm319 = vcmask 1043456
      %v321 = vsel %vm319, %v308, 0
      %v324 = vsel %vm319, %v309, 0
      %326 = vmatpush.msra.mxu0 0.0
      %327 = vmatpush.msra.mxu0 0.0
      %328 = vmatpush.msra.mxu0 0.0
      %329 = vmatpush.msra.mxu0 0.0
      %330 = vmatpush.msra.mxu0 0.0
      %331 = vmatpush.msra.mxu0 0.0
      %332 = vmatpush.msra.mxu0 0.0
      %333 = vmatpush.msra.mxu0 0.0
      %334 = vmatpush.msra.mxu0 0.0
      %335 = vmatpush.msra.mxu0 0.0
      %336 = vmatpush.msra.mxu0 0.0
      %337 = vmatpush.msra.mxu0 0.0
      %338 = vmatpush.msra.mxu0 0.0
      %339 = vmatpush.msra.mxu0 0.0
      %340 = vmatpush.msra.mxu0 %v321
      %341 = vmatpush.msra.mxu0 %v306
      %342 = vmatmul.f32.gmra.mxu0 %v314
      %v343 = vpop.f32.mrf.mxu0
      %v344 = vadd.f32 0.0, %v343
      %345 = vmatmul.f32.gmra.mxu0 %v317
      %v346 = vpop.f32.mrf.mxu0
      %v347 = vadd.f32 0.0, %v346
      %348 = vdwg.mxu0
      %349 = vmatpush.msra.mxu0 0.0
      %350 = vmatpush.msra.mxu0 0.0
      %351 = vmatpush.msra.mxu0 0.0
      %352 = vmatpush.msra.mxu0 0.0
      %353 = vmatpush.msra.mxu0 0.0
      %354 = vmatpush.msra.mxu0 0.0
      %355 = vmatpush.msra.mxu0 0.0
      %356 = vmatpush.msra.mxu0 0.0
      %357 = vmatpush.msra.mxu0 0.0
      %358 = vmatpush.msra.mxu0 0.0
      %359 = vmatpush.msra.mxu0 0.0
      %360 = vmatpush.msra.mxu0 0.0
      %361 = vmatpush.msra.mxu0 0.0
      %362 = vmatpush.msra.mxu0 0.0
      %363 = vmatpush.msra.mxu0 %v324
      %364 = vmatpush.msra.mxu0 %v307
      %365 = vmatmul.f32.gmra.mxu0 %v314
      %v366 = vpop.f32.mrf.mxu0
      %v367 = vadd.f32 0.0, %v366
      %368 = vmatmul.f32.gmra.mxu0 %v317
      %v369 = vpop.f32.mrf.mxu0
      %v370 = vadd.f32 0.0, %v369
      %371 = vdwg.mxu0
      %v372 = vadd.f32 %v344, %v367
      %373 = vadd.xlane.f32.xlu0 %v372
      %v374 = vpop.xlane.xlu0 %373
      %v375 = vsel %vm319, %v347, 0.0
      %v376 = vsel %vm319, %v370, 0.0
      %v377 = vadd.f32 %v375, %v376
      %378 = vadd.xlane.f32.xlu0 %v377
      %v379 = vpop.xlane.xlu0 %378
      %v380 = vrcp.pop 256.0
      %v381 = vmul.f32 256.0, %v380
      %v382 = vsub.f32 1.0, %v381
      %v383 = vmul.f32 %v380, %v382
      %v384 = vadd.f32 %v380, %v383
      %vm385 = vweird.f32 %v380
      %v386 = vsel %vm385, %v380, %v384
      %v387 = vmul.f32 %v374, %v386
      %v388 = vmul.f32 %v379, %v386
      %v389 = vmul.f32 %v344, %v344
      %v390 = vmul.f32 %v367, %v367
      %v391 = vmul.f32 %v347, %v347
      %v392 = vmul.f32 %v370, %v370
      %v393 = vadd.f32 %v389, %v390
      %394 = vadd.xlane.f32.xlu0 %v393
      %v395 = vpop.xlane.xlu0 %394
      %v396 = vsel %vm319, %v391, 0.0
      %v397 = vsel %vm319, %v392, 0.0
      %v398 = vadd.f32 %v396, %v397
      %399 = vadd.xlane.f32.xlu0 %v398
      %v400 = vpop.xlane.xlu0 %399
      %v401 = vmul.f32 %v395, %v386
      %v402 = vmul.f32 %v400, %v386
      %v403 = vsub.f32 %v344, %v387
      %v404 = vsub.f32 %v367, %v387
      %v405 = vsub.f32 %v347, %v388
      %v406 = vsub.f32 %v370, %v388
      %v407 = vmul.f32 %v387, %v387
      %v408 = vmul.f32 %v388, %v388
      %v409 = vsub.f32 %v401, %v407
      %v410 = vsub.f32 %v402, %v408
      %v411 = vadd.f32 %v409, 1e-05
      %v412 = vadd.f32 %v410, 1e-05
      %v413 = vrsqrt.pop %v411
      %v414 = vmul.f32 %v413, %v411
      %v415 = vmul.f32 %v414, %v413
      %v416 = vmul.f32 0.5, %v415
      %v417 = vsub.f32 1.5, %v416
      %v418 = vmul.f32 %v413, %v417
      %vm419 = vweird.f32 %v411
      %vm420 = vweird.f32 %v413
      %vm421 = vmor %vm419, %vm420
      %v422 = vsel %vm421, %v413, %v418
      %v423 = vrsqrt.pop %v412
      %v424 = vmul.f32 %v423, %v412
      %v425 = vmul.f32 %v424, %v423
      %v426 = vmul.f32 0.5, %v425
      %v427 = vsub.f32 1.5, %v426
      %v428 = vmul.f32 %v423, %v427
      %vm429 = vweird.f32 %v412
      %vm430 = vweird.f32 %v423
      %vm431 = vmor %vm429, %vm430
      %v432 = vsel %vm431, %v423, %v428
      %v433 = vmul.f32 %v403, %v422
      %v434 = vmul.f32 %v404, %v422
      %v435 = vmul.f32 %v405, %v432
      %v436 = vmul.f32 %v406, %v432
      %v437 = vmax.f32 %v433, 0.0
      %v438 = vmax.f32 %v434, 0.0
      %v439 = vmax.f32 %v435, 0.0
      %v440 = vmax.f32 %v436, 0.0
      %v441 = vld [vmem:[%s6] sm:$0xff]
      %v442 = vld [vmem:[%s6 + $0x8] sm:$0xff]
      %v443 = vld [vmem:[%s6 + $0x10] sm:$0xff]
      %v444 = vld [vmem:[%s6 + $0x18] sm:$0xff]
      %v445 = vld [vmem:[%s6 + $0x20] sm:$0xff]
      %v446 = vld [vmem:[%s6 + $0x28] sm:$0xff]
      %v447 = vld [vmem:[%s6 + $0x30] sm:$0xff]
      %v448 = vld [vmem:[%s6 + $0x38] sm:$0xff]
      %v449 = vld [vmem:[%s5] sm:$0xff]
      %v450 = vld [vmem:[%s5 + $0x8] sm:$0xff]
      %v451 = vld [vmem:[%s5 + $0x10] sm:$0xff]
      %v452 = vld [vmem:[%s5 + $0x18] sm:$0xff]
      %v453 = vld [vmem:[%s5 + $0x20] sm:$0xff]
      %v454 = vld [vmem:[%s5 + $0x28] sm:$0xff]
      %v455 = vld [vmem:[%s5 + $0x30] sm:$0xff]
      %v456 = vld [vmem:[%s5 + $0x38] sm:$0xff]
      %v457 = vld [vmem:[%s5 + $0x40] sm:$0xff]
      %v458 = vld [vmem:[%s5 + $0x48] sm:$0xff]
      %v459 = vld [vmem:[%s5 + $0x50] sm:$0xff]
      %v460 = vld [vmem:[%s5 + $0x58] sm:$0xff]
      %v461 = vld [vmem:[%s5 + $0x60] sm:$0xff]
      %v462 = vld [vmem:[%s5 + $0x68] sm:$0xff]
      %v463 = vld [vmem:[%s5 + $0x70] sm:$0xff]
      %v464 = vld [vmem:[%s5 + $0x78] sm:$0xff]
      %v465 = vld [vmem:[%s5 + $0x80] sm:$0xff]
      %v466 = vld [vmem:[%s5 + $0x88] sm:$0xff]
      %v467 = vld [vmem:[%s5 + $0x90] sm:$0xff]
      %v468 = vld [vmem:[%s5 + $0x98] sm:$0xff]
      %v469 = vld [vmem:[%s5 + $0xa0] sm:$0xff]
      %v470 = vld [vmem:[%s5 + $0xa8] sm:$0xff]
      %v471 = vld [vmem:[%s5 + $0xb0] sm:$0xff]
      %v472 = vld [vmem:[%s5 + $0xb8] sm:$0xff]
      %v473 = vld [vmem:[%s5 + $0xc0] sm:$0xff]
      %v474 = vld [vmem:[%s5 + $0xc8] sm:$0xff]
      %v475 = vld [vmem:[%s5 + $0xd0] sm:$0xff]
      %v476 = vld [vmem:[%s5 + $0xd8] sm:$0xff]
      %v477 = vld [vmem:[%s5 + $0xe0] sm:$0xff]
      %v478 = vld [vmem:[%s5 + $0xe8] sm:$0xff]
      %v479 = vld [vmem:[%s5 + $0xf0] sm:$0xff]
      %v480 = vld [vmem:[%s5 + $0xf8] sm:$0xff]
      %v481 = vld [vmem:[%s7] ss:$4 sm:$0x3]
      %s482 = scalar_lea.vmem %s7, 1
      %v483 = vld [vmem:[%s482] ss:$4 sm:$0x3]
      %484 = vst [vmem:[#allocation2] sm:$0x3] %v437
      %485 = vst [vmem:[#allocation2 + $0x8] sm:$0x3] %v438
      %v488 = vrot.slane %v437, 2
      %v489 = vrot.slane %v438, 2
      %492 = vrot.lane.b32.xlu0 %v488, 1
      %v493 = vpop.permute.xlu0 %492
      %494 = vrot.lane.b32.xlu0 %v489, 1
      %v495 = vpop.permute.xlu0 %494
      %v496 = vlaneseq
      %v497 = vand.u32 %v496, 127
      %vm498 = vcmp.lt.s32.totalorder %v497, 1
      %v499 = vsel %vm498, %v493, %v495
      %v500 = vsel %vm498, %v495, %v493
      %v502 = vperm.slane %v481, 0
      %v503 = vperm.slane %v481, 1
      %v506 = vmul.f32 %v500, %v502
      %v507 = vmul.f32 %v499, %v503
      %508 = vrot.lane.b32.xlu0 %v488, 127
      %v509 = vpop.permute.xlu0 %508
      %510 = vrot.lane.b32.xlu0 %v489, 127
      %v511 = vpop.permute.xlu0 %510
      %vm512 = vcmp.lt.s32.totalorder %v497, 127
      %v513 = vsel %vm512, %v509, %v511
      %v514 = vsel %vm512, %v511, %v509
      %v516 = vperm.slane %v483, 0
      %v517 = vperm.slane %v483, 1
      %v520 = vmul.f32 %v513, %v516
      %v521 = vmul.f32 %v514, %v517
      %v522 = vld [vmem:[%s4] sm:$0x3]
      %524 = vrot.lane.b32.xlu0 %v522, 126
      %v525 = vpop.permute.xlu0 %524
      %vm526 = vcmask 15360
      %v527 = vsel %vm526, %v525, 0
      %vm529 = vcmask 1041408
      %v530 = vsel %vm529, %v488, 0
      %v532 = vsel %vm529, %v489, 0
      %534 = vmatpush.msra.mxu0 0.0
      %535 = vmatpush.msra.mxu0 0.0
      %536 = vmatpush.msra.mxu0 0.0
      %537 = vmatpush.msra.mxu0 0.0
      %538 = vmatpush.msra.mxu0 0.0
      %539 = vmatpush.msra.mxu0 0.0
      %540 = vmatpush.msra.mxu0 0.0
      %541 = vmatpush.msra.mxu0 0.0
      %542 = vmatpush.msra.mxu0 0.0
      %543 = vmatpush.msra.mxu0 0.0
      %544 = vmatpush.msra.mxu0 0.0
      %545 = vmatpush.msra.mxu0 0.0
      %546 = vmatpush.msra.mxu0 0.0
      %547 = vmatpush.msra.mxu0 0.0
      %548 = vmatpush.msra.mxu0 0.0
      %549 = vmatpush.msra.mxu0 %v530
      %550 = vmatmul.f32.gmra.mxu0 %v527
      %v551 = vpop.f32.mrf.mxu0
      %v552 = vadd.f32 0.0, %v551
      %553 = vdwg.mxu0
      %554 = vmatpush.msra.mxu0 0.0
      %555 = vmatpush.msra.mxu0 0.0
      %556 = vmatpush.msra.mxu0 0.0
      %557 = vmatpush.msra.mxu0 0.0
      %558 = vmatpush.msra.mxu0 0.0
      %559 = vmatpush.msra.mxu0 0.0
      %560 = vmatpush.msra.mxu0 0.0
      %561 = vmatpush.msra.mxu0 0.0
      %562 = vmatpush.msra.mxu0 0.0
      %563 = vmatpush.msra.mxu0 0.0
      %564 = vmatpush.msra.mxu0 0.0
      %565 = vmatpush.msra.mxu0 0.0
      %566 = vmatpush.msra.mxu0 0.0
      %567 = vmatpush.msra.mxu0 0.0
      %568 = vmatpush.msra.mxu0 0.0
      %569 = vmatpush.msra.mxu0 %v532
      %570 = vmatmul.f32.gmra.mxu0 %v527
      %v571 = vpop.f32.mrf.mxu0
      %v572 = vadd.f32 0.0, %v571
      %573 = vdwg.mxu0
      %v574 = vsel %vm526, %v522, 0
      %v577 = vsel %vm529, %v506, 0
      %v580 = vsel %vm529, %v507, 0
      %582 = vmatpush.msra.mxu0 0.0
      %583 = vmatpush.msra.mxu0 0.0
      %584 = vmatpush.msra.mxu0 0.0
      %585 = vmatpush.msra.mxu0 0.0
      %586 = vmatpush.msra.mxu0 0.0
      %587 = vmatpush.msra.mxu0 0.0
      %588 = vmatpush.msra.mxu0 0.0
      %589 = vmatpush.msra.mxu0 0.0
      %590 = vmatpush.msra.mxu0 0.0
      %591 = vmatpush.msra.mxu0 0.0
      %592 = vmatpush.msra.mxu0 0.0
      %593 = vmatpush.msra.mxu0 0.0
      %594 = vmatpush.msra.mxu0 0.0
      %595 = vmatpush.msra.mxu0 0.0
      %596 = vmatpush.msra.mxu0 0.0
      %597 = vmatpush.msra.mxu0 %v577
      %598 = vmatmul.f32.gmra.mxu0 %v574
      %v599 = vpop.f32.mrf.mxu0
      %v600 = vadd.f32 %v552, %v599
      %601 = vdwg.mxu0
      %602 = vmatpush.msra.mxu0 0.0
      %603 = vmatpush.msra.mxu0 0.0
      %604 = vmatpush.msra.mxu0 0.0
      %605 = vmatpush.msra.mxu0 0.0
      %606 = vmatpush.msra.mxu0 0.0
      %607 = vmatpush.msra.mxu0 0.0
      %608 = vmatpush.msra.mxu0 0.0
      %609 = vmatpush.msra.mxu0 0.0
      %610 = vmatpush.msra.mxu0 0.0
      %611 = vmatpush.msra.mxu0 0.0
      %612 = vmatpush.msra.mxu0 0.0
      %613 = vmatpush.msra.mxu0 0.0
      %614 = vmatpush.msra.mxu0 0.0
      %615 = vmatpush.msra.mxu0 0.0
      %616 = vmatpush.msra.mxu0 0.0
      %617 = vmatpush.msra.mxu0 %v580
      %618 = vmatmul.f32.gmra.mxu0 %v574
      %v619 = vpop.f32.mrf.mxu0
      %v620 = vadd.f32 %v572, %v619
      %621 = vdwg.mxu0
      %622 = vrot.lane.b32.xlu0 %v522, 124
      %v623 = vpop.permute.xlu0 %622
      %v624 = vsel %vm526, %v623, 0
      %v627 = vsel %vm529, %v520, 0
      %v630 = vsel %vm529, %v521, 0
      %632 = vmatpush.msra.mxu0 0.0
      %633 = vmatpush.msra.mxu0 0.0
      %634 = vmatpush.msra.mxu0 0.0
      %635 = vmatpush.msra.mxu0 0.0
      %636 = vmatpush.msra.mxu0 0.0
      %637 = vmatpush.msra.mxu0 0.0
      %638 = vmatpush.msra.mxu0 0.0
      %639 = vmatpush.msra.mxu0 0.0
      %640 = vmatpush.msra.mxu0 0.0
      %641 = vmatpush.msra.mxu0 0.0
      %642 = vmatpush.msra.mxu0 0.0
      %643 = vmatpush.msra.mxu0 0.0
      %644 = vmatpush.msra.mxu0 0.0
      %645 = vmatpush.msra.mxu0 0.0
      %646 = vmatpush.msra.mxu0 0.0
      %647 = vmatpush.msra.mxu0 %v627
      %648 = vmatmul.f32.gmra.mxu0 %v624
      %v649 = vpop.f32.mrf.mxu0
      %v650 = vadd.f32 0.0, %v649
      %651 = vdwg.mxu0
      %652 = vmatpush.msra.mxu0 0.0
      %653 = vmatpush.msra.mxu0 0.0
      %654 = vmatpush.msra.mxu0 0.0
      %655 = vmatpush.msra.mxu0 0.0
      %656 = vmatpush.msra.mxu0 0.0
      %657 = vmatpush.msra.mxu0 0.0
      %658 = vmatpush.msra.mxu0 0.0
      %659 = vmatpush.msra.mxu0 0.0
      %660 = vmatpush.msra.mxu0 0.0
      %661 = vmatpush.msra.mxu0 0.0
      %662 = vmatpush.msra.mxu0 0.0
      %663 = vmatpush.msra.mxu0 0.0
      %664 = vmatpush.msra.mxu0 0.0
      %665 = vmatpush.msra.mxu0 0.0
      %666 = vmatpush.msra.mxu0 0.0
      %667 = vmatpush.msra.mxu0 %v630
      %668 = vmatmul.f32.gmra.mxu0 %v624
      %v669 = vpop.f32.mrf.mxu0
      %v670 = vadd.f32 0.0, %v669
      %671 = vdwg.mxu0
      %v672 = vadd.f32 %v600, %v650
      %v673 = vadd.f32 %v620, %v670
      %v674 = vsel %vm529, %v672, 0.0
      %v675 = vsel %vm529, %v673, 0.0
      %v676 = vadd.f32 %v674, %v675
      %677 = vadd.xlane.f32.xlu0 %v676
      %v678 = vpop.xlane.xlu0 %677
      %v679 = vmul.f32 %v678, %v386
      %v680 = vmul.f32 %v672, %v672
      %v681 = vmul.f32 %v673, %v673
      %v682 = vsel %vm529, %v680, 0.0
      %v683 = vsel %vm529, %v681, 0.0
      %v684 = vadd.f32 %v682, %v683
      %685 = vadd.xlane.f32.xlu0 %v684
      %v686 = vpop.xlane.xlu0 %685
      %v687 = vmul.f32 %v686, %v386
      %v688 = vsub.f32 %v672, %v679
      %v689 = vsub.f32 %v673, %v679
      %v690 = vmul.f32 %v679, %v679
      %v691 = vsub.f32 %v687, %v690
      %v692 = vadd.f32 %v691, 1e-05
      %v693 = vrsqrt.pop %v692
      %v694 = vmul.f32 %v693, %v692
      %v695 = vmul.f32 %v694, %v693
      %v696 = vmul.f32 0.5, %v695
      %v697 = vsub.f32 1.5, %v696
      %v698 = vmul.f32 %v693, %v697
      %vm699 = vweird.f32 %v692
      %vm700 = vweird.f32 %v693
      %vm701 = vmor %vm699, %vm700
      %v702 = vsel %vm701, %v693, %v698
      %v703 = vmul.f32 %v688, %v702
      %v704 = vmul.f32 %v689, %v702
      %v705 = vmax.f32 %v703, 0.0
      %v706 = vmax.f32 %v704, 0.0
      %v709 = vrot.slane %v705, 6
      %v710 = vrot.slane %v706, 6
      %713 = vst [vmem:[#allocation2] sm:$0xc] %v709
      %714 = vst [vmem:[#allocation2 + $0x8] sm:$0xc] %v710
      %v715 = vrot.slane %v705, 4
      %v716 = vrot.slane %v706, 4
      %v719 = vadd.f32 %v437, %v715
      %v720 = vadd.f32 %v438, %v716
      %v723 = vrot.slane %v719, 4
      %v724 = vrot.slane %v720, 4
      %727 = vrot.lane.b32.xlu0 %v723, 1
      %v728 = vpop.permute.xlu0 %727
      %729 = vrot.lane.b32.xlu0 %v724, 1
      %v730 = vpop.permute.xlu0 %729
      %v731 = vsel %vm498, %v728, %v730
      %v732 = vsel %vm498, %v730, %v728
      %v733 = vmul.f32 %v732, %v502
      %v734 = vmul.f32 %v731, %v503
      %735 = vrot.lane.b32.xlu0 %v723, 127
      %v736 = vpop.permute.xlu0 %735
      %737 = vrot.lane.b32.xlu0 %v724, 127
      %v738 = vpop.permute.xlu0 %737
      %v739 = vsel %vm512, %v736, %v738
      %v740 = vsel %vm512, %v738, %v736
      %v741 = vmul.f32 %v739, %v516
      %v742 = vmul.f32 %v740, %v517
      %v743 = vld [vmem:[%s4] sm:$0x3]
      %745 = vrot.lane.b32.xlu0 %v743, 120
      %v746 = vpop.permute.xlu0 %745
      %v747 = vsel %vm526, %v746, 0
      %v749 = vsel %vm529, %v723, 0
      %v751 = vsel %vm529, %v724, 0
      %753 = vmatpush.msra.mxu0 0.0
      %754 = vmatpush.msra.mxu0 0.0
      %755 = vmatpush.msra.mxu0 0.0
      %756 = vmatpush.msra.mxu0 0.0
      %757 = vmatpush.msra.mxu0 0.0
      %758 = vmatpush.msra.mxu0 0.0
      %759 = vmatpush.msra.mxu0 0.0
      %760 = vmatpush.msra.mxu0 0.0
      %761 = vmatpush.msra.mxu0 0.0
      %762 = vmatpush.msra.mxu0 0.0
      %763 = vmatpush.msra.mxu0 0.0
      %764 = vmatpush.msra.mxu0 0.0
      %765 = vmatpush.msra.mxu0 0.0
      %766 = vmatpush.msra.mxu0 0.0
      %767 = vmatpush.msra.mxu0 0.0
      %768 = vmatpush.msra.mxu0 %v749
      %769 = vmatmul.f32.gmra.mxu0 %v747
      %v770 = vpop.f32.mrf.mxu0
      %v771 = vadd.f32 0.0, %v770
      %772 = vdwg.mxu0
      %773 = vmatpush.msra.mxu0 0.0
      %774 = vmatpush.msra.mxu0 0.0
      %775 = vmatpush.msra.mxu0 0.0
      %776 = vmatpush.msra.mxu0 0.0
      %777 = vmatpush.msra.mxu0 0.0
      %778 = vmatpush.msra.mxu0 0.0
      %779 = vmatpush.msra.mxu0 0.0
      %780 = vmatpush.msra.mxu0 0.0
      %781 = vmatpush.msra.mxu0 0.0
      %782 = vmatpush.msra.mxu0 0.0
      %783 = vmatpush.msra.mxu0 0.0
      %784 = vmatpush.msra.mxu0 0.0
      %785 = vmatpush.msra.mxu0 0.0
      %786 = vmatpush.msra.mxu0 0.0
      %787 = vmatpush.msra.mxu0 0.0
      %788 = vmatpush.msra.mxu0 %v751
      %789 = vmatmul.f32.gmra.mxu0 %v747
      %v790 = vpop.f32.mrf.mxu0
      %v791 = vadd.f32 0.0, %v790
      %792 = vdwg.mxu0
      %793 = vrot.lane.b32.xlu0 %v743, 122
      %v794 = vpop.permute.xlu0 %793
      %v795 = vsel %vm526, %v794, 0
      %v798 = vsel %vm529, %v733, 0
      %v801 = vsel %vm529, %v734, 0
      %803 = vmatpush.msra.mxu0 0.0
      %804 = vmatpush.msra.mxu0 0.0
      %805 = vmatpush.msra.mxu0 0.0
      %806 = vmatpush.msra.mxu0 0.0
      %807 = vmatpush.msra.mxu0 0.0
      %808 = vmatpush.msra.mxu0 0.0
      %809 = vmatpush.msra.mxu0 0.0
      %810 = vmatpush.msra.mxu0 0.0
      %811 = vmatpush.msra.mxu0 0.0
      %812 = vmatpush.msra.mxu0 0.0
      %813 = vmatpush.msra.mxu0 0.0
      %814 = vmatpush.msra.mxu0 0.0
      %815 = vmatpush.msra.mxu0 0.0
      %816 = vmatpush.msra.mxu0 0.0
      %817 = vmatpush.msra.mxu0 0.0
      %818 = vmatpush.msra.mxu0 %v798
      %819 = vmatmul.f32.gmra.mxu0 %v795
      %v820 = vpop.f32.mrf.mxu0
      %v821 = vadd.f32 %v771, %v820
      %822 = vdwg.mxu0
      %823 = vmatpush.msra.mxu0 0.0
      %824 = vmatpush.msra.mxu0 0.0
      %825 = vmatpush.msra.mxu0 0.0
      %826 = vmatpush.msra.mxu0 0.0
      %827 = vmatpush.msra.mxu0 0.0
      %828 = vmatpush.msra.mxu0 0.0
      %829 = vmatpush.msra.mxu0 0.0
      %830 = vmatpush.msra.mxu0 0.0
      %831 = vmatpush.msra.mxu0 0.0
      %832 = vmatpush.msra.mxu0 0.0
      %833 = vmatpush.msra.mxu0 0.0
      %834 = vmatpush.msra.mxu0 0.0
      %835 = vmatpush.msra.mxu0 0.0
      %836 = vmatpush.msra.mxu0 0.0
      %837 = vmatpush.msra.mxu0 0.0
      %838 = vmatpush.msra.mxu0 %v801
      %839 = vmatmul.f32.gmra.mxu0 %v795
      %v840 = vpop.f32.mrf.mxu0
      %v841 = vadd.f32 %v791, %v840
      %842 = vdwg.mxu0
      %843 = vrot.lane.b32.xlu0 %v743, 118
      %v844 = vpop.permute.xlu0 %843
      %v845 = vsel %vm526, %v844, 0
      %v848 = vsel %vm529, %v741, 0
      %v851 = vsel %vm529, %v742, 0
      %853 = vmatpush.msra.mxu0 0.0
      %854 = vmatpush.msra.mxu0 0.0
      %855 = vmatpush.msra.mxu0 0.0
      %856 = vmatpush.msra.mxu0 0.0
      %857 = vmatpush.msra.mxu0 0.0
      %858 = vmatpush.msra.mxu0 0.0
      %859 = vmatpush.msra.mxu0 0.0
      %860 = vmatpush.msra.mxu0 0.0
      %861 = vmatpush.msra.mxu0 0.0
      %862 = vmatpush.msra.mxu0 0.0
      %863 = vmatpush.msra.mxu0 0.0
      %864 = vmatpush.msra.mxu0 0.0
      %865 = vmatpush.msra.mxu0 0.0
      %866 = vmatpush.msra.mxu0 0.0
      %867 = vmatpush.msra.mxu0 0.0
      %868 = vmatpush.msra.mxu0 %v848
      %869 = vmatmul.f32.gmra.mxu0 %v845
      %v870 = vpop.f32.mrf.mxu0
      %v871 = vadd.f32 0.0, %v870
      %872 = vdwg.mxu0
      %873 = vmatpush.msra.mxu0 0.0
      %874 = vmatpush.msra.mxu0 0.0
      %875 = vmatpush.msra.mxu0 0.0
      %876 = vmatpush.msra.mxu0 0.0
      %877 = vmatpush.msra.mxu0 0.0
      %878 = vmatpush.msra.mxu0 0.0
      %879 = vmatpush.msra.mxu0 0.0
      %880 = vmatpush.msra.mxu0 0.0
      %881 = vmatpush.msra.mxu0 0.0
      %882 = vmatpush.msra.mxu0 0.0
      %883 = vmatpush.msra.mxu0 0.0
      %884 = vmatpush.msra.mxu0 0.0
      %885 = vmatpush.msra.mxu0 0.0
      %886 = vmatpush.msra.mxu0 0.0
      %887 = vmatpush.msra.mxu0 0.0
      %888 = vmatpush.msra.mxu0 %v851
      %889 = vmatmul.f32.gmra.mxu0 %v845
      %v890 = vpop.f32.mrf.mxu0
      %v891 = vadd.f32 0.0, %v890
      %892 = vdwg.mxu0
      %v893 = vadd.f32 %v821, %v871
      %v894 = vadd.f32 %v841, %v891
      %v895 = vsel %vm529, %v893, 0.0
      %v896 = vsel %vm529, %v894, 0.0
      %v897 = vadd.f32 %v895, %v896
      %898 = vadd.xlane.f32.xlu0 %v897
      %v899 = vpop.xlane.xlu0 %898
      %v900 = vmul.f32 %v899, %v386
      %v901 = vmul.f32 %v893, %v893
      %v902 = vmul.f32 %v894, %v894
      %v903 = vsel %vm529, %v901, 0.0
      %v904 = vsel %vm529, %v902, 0.0
      %v905 = vadd.f32 %v903, %v904
      %906 = vadd.xlane.f32.xlu0 %v905
      %v907 = vpop.xlane.xlu0 %906
      %v908 = vmul.f32 %v907, %v386
      %v909 = vsub.f32 %v893, %v900
      %v910 = vsub.f32 %v894, %v900
      %v911 = vmul.f32 %v900, %v900
      %v912 = vsub.f32 %v908, %v911
      %v913 = vadd.f32 %v912, 1e-05
      %v914 = vrsqrt.pop %v913
      %v915 = vmul.f32 %v914, %v913
      %v916 = vmul.f32 %v915, %v914
      %v917 = vmul.f32 0.5, %v916
      %v918 = vsub.f32 1.5, %v917
      %v919 = vmul.f32 %v914, %v918
      %vm920 = vweird.f32 %v913
      %vm921 = vweird.f32 %v914
      %vm922 = vmor %vm920, %vm921
      %v923 = vsel %vm922, %v914, %v919
      %v924 = vmul.f32 %v909, %v923
      %v925 = vmul.f32 %v910, %v923
      %v926 = vmax.f32 %v924, 0.0
      %v927 = vmax.f32 %v925, 0.0
      %v930 = vrot.slane %v926, 4
      %v931 = vrot.slane %v927, 4
      %934 = vst [vmem:[#allocation2] sm:$0x30] %v930
      %935 = vst [vmem:[#allocation2 + $0x8] sm:$0x30] %v931
      %v936 = vrot.slane %v926, 2
      %v937 = vrot.slane %v927, 2
      %v940 = vadd.f32 %v437, %v936
      %v941 = vadd.f32 %v438, %v937
      %v944 = vrot.slane %v940, 6
      %v945 = vrot.slane %v941, 6
      %948 = vrot.lane.b32.xlu0 %v944, 1
      %v949 = vpop.permute.xlu0 %948
      %950 = vrot.lane.b32.xlu0 %v945, 1
      %v951 = vpop.permute.xlu0 %950
      %v952 = vsel %vm498, %v949, %v951
      %v953 = vsel %vm498, %v951, %v949
      %v954 = vmul.f32 %v953, %v502
      %v955 = vmul.f32 %v952, %v503
      %956 = vrot.lane.b32.xlu0 %v944, 127
      %v957 = vpop.permute.xlu0 %956
      %958 = vrot.lane.b32.xlu0 %v945, 127
      %v959 = vpop.permute.xlu0 %958
      %v960 = vsel %vm512, %v957, %v959
      %v961 = vsel %vm512, %v959, %v957
      %v962 = vmul.f32 %v960, %v516
      %v963 = vmul.f32 %v961, %v517
      %v964 = vld [vmem:[%s4] sm:$0x3]
      %966 = vrot.lane.b32.xlu0 %v964, 114
      %v967 = vpop.permute.xlu0 %966
      %v968 = vsel %vm526, %v967, 0
      %v970 = vsel %vm529, %v944, 0
      %v972 = vsel %vm529, %v945, 0
      %974 = vmatpush.msra.mxu0 0.0
      %975 = vmatpush.msra.mxu0 0.0
      %976 = vmatpush.msra.mxu0 0.0
      %977 = vmatpush.msra.mxu0 0.0
      %978 = vmatpush.msra.mxu0 0.0
      %979 = vmatpush.msra.mxu0 0.0
      %980 = vmatpush.msra.mxu0 0.0
      %981 = vmatpush.msra.mxu0 0.0
      %982 = vmatpush.msra.mxu0 0.0
      %983 = vmatpush.msra.mxu0 0.0
      %984 = vmatpush.msra.mxu0 0.0
      %985 = vmatpush.msra.mxu0 0.0
      %986 = vmatpush.msra.mxu0 0.0
      %987 = vmatpush.msra.mxu0 0.0
      %988 = vmatpush.msra.mxu0 0.0
      %989 = vmatpush.msra.mxu0 %v970
      %990 = vmatmul.f32.gmra.mxu0 %v968
      %v991 = vpop.f32.mrf.mxu0
      %v992 = vadd.f32 0.0, %v991
      %993 = vdwg.mxu0
      %994 = vmatpush.msra.mxu0 0.0
      %995 = vmatpush.msra.mxu0 0.0
      %996 = vmatpush.msra.mxu0 0.0
      %997 = vmatpush.msra.mxu0 0.0
      %998 = vmatpush.msra.mxu0 0.0
      %999 = vmatpush.msra.mxu0 0.0
      %1000 = vmatpush.msra.mxu0 0.0
      %1001 = vmatpush.msra.mxu0 0.0
      %1002 = vmatpush.msra.mxu0 0.0
      %1003 = vmatpush.msra.mxu0 0.0
      %1004 = vmatpush.msra.mxu0 0.0
      %1005 = vmatpush.msra.mxu0 0.0
      %1006 = vmatpush.msra.mxu0 0.0
      %1007 = vmatpush.msra.mxu0 0.0
      %1008 = vmatpush.msra.mxu0 0.0
      %1009 = vmatpush.msra.mxu0 %v972
      %1010 = vmatmul.f32.gmra.mxu0 %v968
      %v1011 = vpop.f32.mrf.mxu0
      %v1012 = vadd.f32 0.0, %v1011
      %1013 = vdwg.mxu0
      %1014 = vrot.lane.b32.xlu0 %v964, 116
      %v1015 = vpop.permute.xlu0 %1014
      %v1016 = vsel %vm526, %v1015, 0
      %v1019 = vsel %vm529, %v954, 0
      %v1022 = vsel %vm529, %v955, 0
      %1024 = vmatpush.msra.mxu0 0.0
      %1025 = vmatpush.msra.mxu0 0.0
      %1026 = vmatpush.msra.mxu0 0.0
      %1027 = vmatpush.msra.mxu0 0.0
      %1028 = vmatpush.msra.mxu0 0.0
      %1029 = vmatpush.msra.mxu0 0.0
      %1030 = vmatpush.msra.mxu0 0.0
      %1031 = vmatpush.msra.mxu0 0.0
      %1032 = vmatpush.msra.mxu0 0.0
      %1033 = vmatpush.msra.mxu0 0.0
      %1034 = vmatpush.msra.mxu0 0.0
      %1035 = vmatpush.msra.mxu0 0.0
      %1036 = vmatpush.msra.mxu0 0.0
      %1037 = vmatpush.msra.mxu0 0.0
      %1038 = vmatpush.msra.mxu0 0.0
      %1039 = vmatpush.msra.mxu0 %v1019
      %1040 = vmatmul.f32.gmra.mxu0 %v1016
      %v1041 = vpop.f32.mrf.mxu0
      %v1042 = vadd.f32 %v992, %v1041
      %1043 = vdwg.mxu0
      %1044 = vmatpush.msra.mxu0 0.0
      %1045 = vmatpush.msra.mxu0 0.0
      %1046 = vmatpush.msra.mxu0 0.0
      %1047 = vmatpush.msra.mxu0 0.0
      %1048 = vmatpush.msra.mxu0 0.0
      %1049 = vmatpush.msra.mxu0 0.0
      %1050 = vmatpush.msra.mxu0 0.0
      %1051 = vmatpush.msra.mxu0 0.0
      %1052 = vmatpush.msra.mxu0 0.0
      %1053 = vmatpush.msra.mxu0 0.0
      %1054 = vmatpush.msra.mxu0 0.0
      %1055 = vmatpush.msra.mxu0 0.0
      %1056 = vmatpush.msra.mxu0 0.0
      %1057 = vmatpush.msra.mxu0 0.0
      %1058 = vmatpush.msra.mxu0 0.0
      %1059 = vmatpush.msra.mxu0 %v1022
      %1060 = vmatmul.f32.gmra.mxu0 %v1016
      %v1061 = vpop.f32.mrf.mxu0
      %v1062 = vadd.f32 %v1012, %v1061
      %1063 = vdwg.mxu0
      %1064 = vrot.lane.b32.xlu0 %v964, 112
      %v1065 = vpop.permute.xlu0 %1064
      %v1066 = vsel %vm526, %v1065, 0
      %v1069 = vsel %vm529, %v962, 0
      %v1072 = vsel %vm529, %v963, 0
      %1074 = vmatpush.msra.mxu0 0.0
      %1075 = vmatpush.msra.mxu0 0.0
      %1076 = vmatpush.msra.mxu0 0.0
      %1077 = vmatpush.msra.mxu0 0.0
      %1078 = vmatpush.msra.mxu0 0.0
      %1079 = vmatpush.msra.mxu0 0.0
      %1080 = vmatpush.msra.mxu0 0.0
      %1081 = vmatpush.msra.mxu0 0.0
      %1082 = vmatpush.msra.mxu0 0.0
      %1083 = vmatpush.msra.mxu0 0.0
      %1084 = vmatpush.msra.mxu0 0.0
      %1085 = vmatpush.msra.mxu0 0.0
      %1086 = vmatpush.msra.mxu0 0.0
      %1087 = vmatpush.msra.mxu0 0.0
      %1088 = vmatpush.msra.mxu0 0.0
      %1089 = vmatpush.msra.mxu0 %v1069
      %1090 = vmatmul.f32.gmra.mxu0 %v1066
      %v1091 = vpop.f32.mrf.mxu0
      %v1092 = vadd.f32 0.0, %v1091
      %1093 = vdwg.mxu0
      %1094 = vmatpush.msra.mxu0 0.0
      %1095 = vmatpush.msra.mxu0 0.0
      %1096 = vmatpush.msra.mxu0 0.0
      %1097 = vmatpush.msra.mxu0 0.0
      %1098 = vmatpush.msra.mxu0 0.0
      %1099 = vmatpush.msra.mxu0 0.0
      %1100 = vmatpush.msra.mxu0 0.0
      %1101 = vmatpush.msra.mxu0 0.0
      %1102 = vmatpush.msra.mxu0 0.0
      %1103 = vmatpush.msra.mxu0 0.0
      %1104 = vmatpush.msra.mxu0 0.0
      %1105 = vmatpush.msra.mxu0 0.0
      %1106 = vmatpush.msra.mxu0 0.0
      %1107 = vmatpush.msra.mxu0 0.0
      %1108 = vmatpush.msra.mxu0 0.0
      %1109 = vmatpush.msra.mxu0 %v1072
      %1110 = vmatmul.f32.gmra.mxu0 %v1066
      %v1111 = vpop.f32.mrf.mxu0
      %v1112 = vadd.f32 0.0, %v1111
      %1113 = vdwg.mxu0
      %v1114 = vadd.f32 %v1042, %v1092
      %v1115 = vadd.f32 %v1062, %v1112
      %v1116 = vsel %vm529, %v1114, 0.0
      %v1117 = vsel %vm529, %v1115, 0.0
      %v1118 = vadd.f32 %v1116, %v1117
      %1119 = vadd.xlane.f32.xlu0 %v1118
      %v1120 = vpop.xlane.xlu0 %1119
      %v1121 = vmul.f32 %v1120, %v386
      %v1122 = vmul.f32 %v1114, %v1114
      %v1123 = vmul.f32 %v1115, %v1115
      %v1124 = vsel %vm529, %v1122, 0.0
      %v1125 = vsel %vm529, %v1123, 0.0
      %v1126 = vadd.f32 %v1124, %v1125
      %1127 = vadd.xlane.f32.xlu0 %v1126
      %v1128 = vpop.xlane.xlu0 %1127
      %v1129 = vmul.f32 %v1128, %v386
      %v1130 = vsub.f32 %v1114, %v1121
      %v1131 = vsub.f32 %v1115, %v1121
      %v1132 = vmul.f32 %v1121, %v1121
      %v1133 = vsub.f32 %v1129, %v1132
      %v1134 = vadd.f32 %v1133, 1e-05
      %v1135 = vrsqrt.pop %v1134
      %v1136 = vmul.f32 %v1135, %v1134
      %v1137 = vmul.f32 %v1136, %v1135
      %v1138 = vmul.f32 0.5, %v1137
      %v1139 = vsub.f32 1.5, %v1138
      %v1140 = vmul.f32 %v1135, %v1139
      %vm1141 = vweird.f32 %v1134
      %vm1142 = vweird.f32 %v1135
      %vm1143 = vmor %vm1141, %vm1142
      %v1144 = vsel %vm1143, %v1135, %v1140
      %v1145 = vmul.f32 %v1130, %v1144
      %v1146 = vmul.f32 %v1131, %v1144
      %v1147 = vmax.f32 %v1145, 0.0
      %v1148 = vmax.f32 %v1146, 0.0
      %v1151 = vrot.slane %v1147, 2
      %v1152 = vrot.slane %v1148, 2
      %1155 = vst [vmem:[#allocation2] sm:$0xc0] %v1151
      %1156 = vst [vmem:[#allocation2 + $0x8] sm:$0xc0] %v1152
      %v1157 = vadd.f32 %v439, %v1147
      %v1158 = vadd.f32 %v440, %v1148
      %1159 = vrot.lane.b32.xlu0 %v1157, 1
      %v1160 = vpop.permute.xlu0 %1159
      %1161 = vrot.lane.b32.xlu0 %v1158, 1
      %v1162 = vpop.permute.xlu0 %1161
      %v1163 = vsel %vm498, %v1160, %v1162
      %v1164 = vsel %vm498, %v1162, %v1160
      %v1165 = vmul.f32 %v1164, %v502
      %v1166 = vmul.f32 %v1163, %v503
      %1167 = vrot.lane.b32.xlu0 %v1157, 127
      %v1168 = vpop.permute.xlu0 %1167
      %1169 = vrot.lane.b32.xlu0 %v1158, 127
      %v1170 = vpop.permute.xlu0 %1169
      %v1171 = vsel %vm512, %v1168, %v1170
      %v1172 = vsel %vm512, %v1170, %v1168
      %v1173 = vmul.f32 %v1171, %v516
      %v1174 = vmul.f32 %v1172, %v517
      %v1175 = vld [vmem:[%s4] sm:$0x3]
      %1177 = vrot.lane.b32.xlu0 %v1175, 108
      %v1178 = vpop.permute.xlu0 %1177
      %v1179 = vsel %vm526, %v1178, 0
      %v1182 = vsel %vm529, %v1157, 0
      %v1185 = vsel %vm529, %v1158, 0
      %1187 = vmatpush.msra.mxu0 0.0
      %1188 = vmatpush.msra.mxu0 0.0
      %1189 = vmatpush.msra.mxu0 0.0
      %1190 = vmatpush.msra.mxu0 0.0
      %1191 = vmatpush.msra.mxu0 0.0
      %1192 = vmatpush.msra.mxu0 0.0
      %1193 = vmatpush.msra.mxu0 0.0
      %1194 = vmatpush.msra.mxu0 0.0
      %1195 = vmatpush.msra.mxu0 0.0
      %1196 = vmatpush.msra.mxu0 0.0
      %1197 = vmatpush.msra.mxu0 0.0
      %1198 = vmatpush.msra.mxu0 0.0
      %1199 = vmatpush.msra.mxu0 0.0
      %1200 = vmatpush.msra.mxu0 0.0
      %1201 = vmatpush.msra.mxu0 0.0
      %1202 = vmatpush.msra.mxu0 %v1182
      %1203 = vmatmul.f32.gmra.mxu0 %v1179
      %v1204 = vpop.f32.mrf.mxu0
      %v1205 = vadd.f32 0.0, %v1204
      %1206 = vdwg.mxu0
      %1207 = vmatpush.msra.mxu0 0.0
      %1208 = vmatpush.msra.mxu0 0.0
      %1209 = vmatpush.msra.mxu0 0.0
      %1210 = vmatpush.msra.mxu0 0.0
      %1211 = vmatpush.msra.mxu0 0.0
      %1212 = vmatpush.msra.mxu0 0.0
      %1213 = vmatpush.msra.mxu0 0.0
      %1214 = vmatpush.msra.mxu0 0.0
      %1215 = vmatpush.msra.mxu0 0.0
      %1216 = vmatpush.msra.mxu0 0.0
      %1217 = vmatpush.msra.mxu0 0.0
      %1218 = vmatpush.msra.mxu0 0.0
      %1219 = vmatpush.msra.mxu0 0.0
      %1220 = vmatpush.msra.mxu0 0.0
      %1221 = vmatpush.msra.mxu0 0.0
      %1222 = vmatpush.msra.mxu0 %v1185
      %1223 = vmatmul.f32.gmra.mxu0 %v1179
      %v1224 = vpop.f32.mrf.mxu0
      %v1225 = vadd.f32 0.0, %v1224
      %1226 = vdwg.mxu0
      %1227 = vrot.lane.b32.xlu0 %v1175, 110
      %v1228 = vpop.permute.xlu0 %1227
      %v1229 = vsel %vm526, %v1228, 0
      %v1232 = vsel %vm529, %v1165, 0
      %v1235 = vsel %vm529, %v1166, 0
      %1237 = vmatpush.msra.mxu0 0.0
      %1238 = vmatpush.msra.mxu0 0.0
      %1239 = vmatpush.msra.mxu0 0.0
      %1240 = vmatpush.msra.mxu0 0.0
      %1241 = vmatpush.msra.mxu0 0.0
      %1242 = vmatpush.msra.mxu0 0.0
      %1243 = vmatpush.msra.mxu0 0.0
      %1244 = vmatpush.msra.mxu0 0.0
      %1245 = vmatpush.msra.mxu0 0.0
      %1246 = vmatpush.msra.mxu0 0.0
      %1247 = vmatpush.msra.mxu0 0.0
      %1248 = vmatpush.msra.mxu0 0.0
      %1249 = vmatpush.msra.mxu0 0.0
      %1250 = vmatpush.msra.mxu0 0.0
      %1251 = vmatpush.msra.mxu0 0.0
      %1252 = vmatpush.msra.mxu0 %v1232
      %1253 = vmatmul.f32.gmra.mxu0 %v1229
      %v1254 = vpop.f32.mrf.mxu0
      %v1255 = vadd.f32 %v1205, %v1254
      %1256 = vdwg.mxu0
      %1257 = vmatpush.msra.mxu0 0.0
      %1258 = vmatpush.msra.mxu0 0.0
      %1259 = vmatpush.msra.mxu0 0.0
      %1260 = vmatpush.msra.mxu0 0.0
      %1261 = vmatpush.msra.mxu0 0.0
      %1262 = vmatpush.msra.mxu0 0.0
      %1263 = vmatpush.msra.mxu0 0.0
      %1264 = vmatpush.msra.mxu0 0.0
      %1265 = vmatpush.msra.mxu0 0.0
      %1266 = vmatpush.msra.mxu0 0.0
      %1267 = vmatpush.msra.mxu0 0.0
      %1268 = vmatpush.msra.mxu0 0.0
      %1269 = vmatpush.msra.mxu0 0.0
      %1270 = vmatpush.msra.mxu0 0.0
      %1271 = vmatpush.msra.mxu0 0.0
      %1272 = vmatpush.msra.mxu0 %v1235
      %1273 = vmatmul.f32.gmra.mxu0 %v1229
      %v1274 = vpop.f32.mrf.mxu0
      %v1275 = vadd.f32 %v1225, %v1274
      %1276 = vdwg.mxu0
      %1277 = vrot.lane.b32.xlu0 %v1175, 106
      %v1278 = vpop.permute.xlu0 %1277
      %v1279 = vsel %vm526, %v1278, 0
      %v1282 = vsel %vm529, %v1173, 0
      %v1285 = vsel %vm529, %v1174, 0
      %1287 = vmatpush.msra.mxu0 0.0
      %1288 = vmatpush.msra.mxu0 0.0
      %1289 = vmatpush.msra.mxu0 0.0
      %1290 = vmatpush.msra.mxu0 0.0
      %1291 = vmatpush.msra.mxu0 0.0
      %1292 = vmatpush.msra.mxu0 0.0
      %1293 = vmatpush.msra.mxu0 0.0
      %1294 = vmatpush.msra.mxu0 0.0
      %1295 = vmatpush.msra.mxu0 0.0
      %1296 = vmatpush.msra.mxu0 0.0
      %1297 = vmatpush.msra.mxu0 0.0
      %1298 = vmatpush.msra.mxu0 0.0
      %1299 = vmatpush.msra.mxu0 0.0
      %1300 = vmatpush.msra.mxu0 0.0
      %1301 = vmatpush.msra.mxu0 0.0
      %1302 = vmatpush.msra.mxu0 %v1282
      %1303 = vmatmul.f32.gmra.mxu0 %v1279
      %v1304 = vpop.f32.mrf.mxu0
      %v1305 = vadd.f32 0.0, %v1304
      %1306 = vdwg.mxu0
      %1307 = vmatpush.msra.mxu0 0.0
      %1308 = vmatpush.msra.mxu0 0.0
      %1309 = vmatpush.msra.mxu0 0.0
      %1310 = vmatpush.msra.mxu0 0.0
      %1311 = vmatpush.msra.mxu0 0.0
      %1312 = vmatpush.msra.mxu0 0.0
      %1313 = vmatpush.msra.mxu0 0.0
      %1314 = vmatpush.msra.mxu0 0.0
      %1315 = vmatpush.msra.mxu0 0.0
      %1316 = vmatpush.msra.mxu0 0.0
      %1317 = vmatpush.msra.mxu0 0.0
      %1318 = vmatpush.msra.mxu0 0.0
      %1319 = vmatpush.msra.mxu0 0.0
      %1320 = vmatpush.msra.mxu0 0.0
      %1321 = vmatpush.msra.mxu0 0.0
      %1322 = vmatpush.msra.mxu0 %v1285
      %1323 = vmatmul.f32.gmra.mxu0 %v1279
      %v1324 = vpop.f32.mrf.mxu0
      %v1325 = vadd.f32 0.0, %v1324
      %1326 = vdwg.mxu0
      %v1327 = vadd.f32 %v1255, %v1305
      %v1328 = vadd.f32 %v1275, %v1325
      %v1329 = vsel %vm529, %v1327, 0.0
      %v1330 = vsel %vm529, %v1328, 0.0
      %v1331 = vadd.f32 %v1329, %v1330
      %1332 = vadd.xlane.f32.xlu0 %v1331
      %v1333 = vpop.xlane.xlu0 %1332
      %v1334 = vmul.f32 %v1333, %v386
      %v1335 = vmul.f32 %v1327, %v1327
      %v1336 = vmul.f32 %v1328, %v1328
      %v1337 = vsel %vm529, %v1335, 0.0
      %v1338 = vsel %vm529, %v1336, 0.0
      %v1339 = vadd.f32 %v1337, %v1338
      %1340 = vadd.xlane.f32.xlu0 %v1339
      %v1341 = vpop.xlane.xlu0 %1340
      %v1342 = vmul.f32 %v1341, %v386
      %v1343 = vsub.f32 %v1327, %v1334
      %v1344 = vsub.f32 %v1328, %v1334
      %v1345 = vmul.f32 %v1334, %v1334
      %v1346 = vsub.f32 %v1342, %v1345
      %v1347 = vadd.f32 %v1346, 1e-05
      %v1348 = vrsqrt.pop %v1347
      %v1349 = vmul.f32 %v1348, %v1347
      %v1350 = vmul.f32 %v1349, %v1348
      %v1351 = vmul.f32 0.5, %v1350
      %v1352 = vsub.f32 1.5, %v1351
      %v1353 = vmul.f32 %v1348, %v1352
      %vm1354 = vweird.f32 %v1347
      %vm1355 = vweird.f32 %v1348
      %vm1356 = vmor %vm1354, %vm1355
      %v1357 = vsel %vm1356, %v1348, %v1353
      %v1358 = vmul.f32 %v1343, %v1357
      %v1359 = vmul.f32 %v1344, %v1357
      %v1360 = vmax.f32 %v1358, 0.0
      %v1361 = vmax.f32 %v1359, 0.0
      %1362 = vst [vmem:[#allocation2 + $0x10] sm:$0x3] %v1360
      %1363 = vst [vmem:[#allocation2 + $0x18] sm:$0x3] %v1361
      %v1366 = vrot.slane %v1360, 6
      %v1367 = vrot.slane %v1361, 6
      %v1370 = vadd.f32 %v439, %v1366
      %v1371 = vadd.f32 %v440, %v1367
      %v1374 = vrot.slane %v1370, 2
      %v1375 = vrot.slane %v1371, 2
      %1378 = vrot.lane.b32.xlu0 %v1374, 1
      %v1379 = vpop.permute.xlu0 %1378
      %1380 = vrot.lane.b32.xlu0 %v1375, 1
      %v1381 = vpop.permute.xlu0 %1380
      %v1382 = vsel %vm498, %v1379, %v1381
      %v1383 = vsel %vm498, %v1381, %v1379
      %v1384 = vmul.f32 %v1383, %v502
      %v1385 = vmul.f32 %v1382, %v503
      %1386 = vrot.lane.b32.xlu0 %v1374, 127
      %v1387 = vpop.permute.xlu0 %1386
      %1388 = vrot.lane.b32.xlu0 %v1375, 127
      %v1389 = vpop.permute.xlu0 %1388
      %v1390 = vsel %vm512, %v1387, %v1389
      %v1391 = vsel %vm512, %v1389, %v1387
      %v1392 = vmul.f32 %v1390, %v516
      %v1393 = vmul.f32 %v1391, %v517
      %v1394 = vld [vmem:[%s4] sm:$0x3]
      %1396 = vrot.lane.b32.xlu0 %v1394, 102
      %v1397 = vpop.permute.xlu0 %1396
      %v1398 = vsel %vm526, %v1397, 0
      %v1400 = vsel %vm529, %v1374, 0
      %v1402 = vsel %vm529, %v1375, 0
      %1404 = vmatpush.msra.mxu0 0.0
      %1405 = vmatpush.msra.mxu0 0.0
      %1406 = vmatpush.msra.mxu0 0.0
      %1407 = vmatpush.msra.mxu0 0.0
      %1408 = vmatpush.msra.mxu0 0.0
      %1409 = vmatpush.msra.mxu0 0.0
      %1410 = vmatpush.msra.mxu0 0.0
      %1411 = vmatpush.msra.mxu0 0.0
      %1412 = vmatpush.msra.mxu0 0.0
      %1413 = vmatpush.msra.mxu0 0.0
      %1414 = vmatpush.msra.mxu0 0.0
      %1415 = vmatpush.msra.mxu0 0.0
      %1416 = vmatpush.msra.mxu0 0.0
      %1417 = vmatpush.msra.mxu0 0.0
      %1418 = vmatpush.msra.mxu0 0.0
      %1419 = vmatpush.msra.mxu0 %v1400
      %1420 = vmatmul.f32.gmra.mxu0 %v1398
      %v1421 = vpop.f32.mrf.mxu0
      %v1422 = vadd.f32 0.0, %v1421
      %1423 = vdwg.mxu0
      %1424 = vmatpush.msra.mxu0 0.0
      %1425 = vmatpush.msra.mxu0 0.0
      %1426 = vmatpush.msra.mxu0 0.0
      %1427 = vmatpush.msra.mxu0 0.0
      %1428 = vmatpush.msra.mxu0 0.0
      %1429 = vmatpush.msra.mxu0 0.0
      %1430 = vmatpush.msra.mxu0 0.0
      %1431 = vmatpush.msra.mxu0 0.0
      %1432 = vmatpush.msra.mxu0 0.0
      %1433 = vmatpush.msra.mxu0 0.0
      %1434 = vmatpush.msra.mxu0 0.0
      %1435 = vmatpush.msra.mxu0 0.0
      %1436 = vmatpush.msra.mxu0 0.0
      %1437 = vmatpush.msra.mxu0 0.0
      %1438 = vmatpush.msra.mxu0 0.0
      %1439 = vmatpush.msra.mxu0 %v1402
      %1440 = vmatmul.f32.gmra.mxu0 %v1398
      %v1441 = vpop.f32.mrf.mxu0
      %v1442 = vadd.f32 0.0, %v1441
      %1443 = vdwg.mxu0
      %1444 = vrot.lane.b32.xlu0 %v1394, 104
      %v1445 = vpop.permute.xlu0 %1444
      %v1446 = vsel %vm526, %v1445, 0
      %v1449 = vsel %vm529, %v1384, 0
      %v1452 = vsel %vm529, %v1385, 0
      %1454 = vmatpush.msra.mxu0 0.0
      %1455 = vmatpush.msra.mxu0 0.0
      %1456 = vmatpush.msra.mxu0 0.0
      %1457 = vmatpush.msra.mxu0 0.0
      %1458 = vmatpush.msra.mxu0 0.0
      %1459 = vmatpush.msra.mxu0 0.0
      %1460 = vmatpush.msra.mxu0 0.0
      %1461 = vmatpush.msra.mxu0 0.0
      %1462 = vmatpush.msra.mxu0 0.0
      %1463 = vmatpush.msra.mxu0 0.0
      %1464 = vmatpush.msra.mxu0 0.0
      %1465 = vmatpush.msra.mxu0 0.0
      %1466 = vmatpush.msra.mxu0 0.0
      %1467 = vmatpush.msra.mxu0 0.0
      %1468 = vmatpush.msra.mxu0 0.0
      %1469 = vmatpush.msra.mxu0 %v1449
      %1470 = vmatmul.f32.gmra.mxu0 %v1446
      %v1471 = vpop.f32.mrf.mxu0
      %v1472 = vadd.f32 %v1422, %v1471
      %1473 = vdwg.mxu0
      %1474 = vmatpush.msra.mxu0 0.0
      %1475 = vmatpush.msra.mxu0 0.0
      %1476 = vmatpush.msra.mxu0 0.0
      %1477 = vmatpush.msra.mxu0 0.0
      %1478 = vmatpush.msra.mxu0 0.0
      %1479 = vmatpush.msra.mxu0 0.0
      %1480 = vmatpush.msra.mxu0 0.0
      %1481 = vmatpush.msra.mxu0 0.0
      %1482 = vmatpush.msra.mxu0 0.0
      %1483 = vmatpush.msra.mxu0 0.0
      %1484 = vmatpush.msra.mxu0 0.0
      %1485 = vmatpush.msra.mxu0 0.0
      %1486 = vmatpush.msra.mxu0 0.0
      %1487 = vmatpush.msra.mxu0 0.0
      %1488 = vmatpush.msra.mxu0 0.0
      %1489 = vmatpush.msra.mxu0 %v1452
      %1490 = vmatmul.f32.gmra.mxu0 %v1446
      %v1491 = vpop.f32.mrf.mxu0
      %v1492 = vadd.f32 %v1442, %v1491
      %1493 = vdwg.mxu0
      %1494 = vrot.lane.b32.xlu0 %v1394, 100
      %v1495 = vpop.permute.xlu0 %1494
      %v1496 = vsel %vm526, %v1495, 0
      %v1499 = vsel %vm529, %v1392, 0
      %v1502 = vsel %vm529, %v1393, 0
      %1504 = vmatpush.msra.mxu0 0.0
      %1505 = vmatpush.msra.mxu0 0.0
      %1506 = vmatpush.msra.mxu0 0.0
      %1507 = vmatpush.msra.mxu0 0.0
      %1508 = vmatpush.msra.mxu0 0.0
      %1509 = vmatpush.msra.mxu0 0.0
      %1510 = vmatpush.msra.mxu0 0.0
      %1511 = vmatpush.msra.mxu0 0.0
      %1512 = vmatpush.msra.mxu0 0.0
      %1513 = vmatpush.msra.mxu0 0.0
      %1514 = vmatpush.msra.mxu0 0.0
      %1515 = vmatpush.msra.mxu0 0.0
      %1516 = vmatpush.msra.mxu0 0.0
      %1517 = vmatpush.msra.mxu0 0.0
      %1518 = vmatpush.msra.mxu0 0.0
      %1519 = vmatpush.msra.mxu0 %v1499
      %1520 = vmatmul.f32.gmra.mxu0 %v1496
      %v1521 = vpop.f32.mrf.mxu0
      %v1522 = vadd.f32 0.0, %v1521
      %1523 = vdwg.mxu0
      %1524 = vmatpush.msra.mxu0 0.0
      %1525 = vmatpush.msra.mxu0 0.0
      %1526 = vmatpush.msra.mxu0 0.0
      %1527 = vmatpush.msra.mxu0 0.0
      %1528 = vmatpush.msra.mxu0 0.0
      %1529 = vmatpush.msra.mxu0 0.0
      %1530 = vmatpush.msra.mxu0 0.0
      %1531 = vmatpush.msra.mxu0 0.0
      %1532 = vmatpush.msra.mxu0 0.0
      %1533 = vmatpush.msra.mxu0 0.0
      %1534 = vmatpush.msra.mxu0 0.0
      %1535 = vmatpush.msra.mxu0 0.0
      %1536 = vmatpush.msra.mxu0 0.0
      %1537 = vmatpush.msra.mxu0 0.0
      %1538 = vmatpush.msra.mxu0 0.0
      %1539 = vmatpush.msra.mxu0 %v1502
      %1540 = vmatmul.f32.gmra.mxu0 %v1496
      %v1541 = vpop.f32.mrf.mxu0
      %v1542 = vadd.f32 0.0, %v1541
      %1543 = vdwg.mxu0
      %v1544 = vadd.f32 %v1472, %v1522
      %v1545 = vadd.f32 %v1492, %v1542
      %v1546 = vsel %vm529, %v1544, 0.0
      %v1547 = vsel %vm529, %v1545, 0.0
      %v1548 = vadd.f32 %v1546, %v1547
      %1549 = vadd.xlane.f32.xlu0 %v1548
      %v1550 = vpop.xlane.xlu0 %1549
      %v1551 = vmul.f32 %v1550, %v386
      %v1552 = vmul.f32 %v1544, %v1544
      %v1553 = vmul.f32 %v1545, %v1545
      %v1554 = vsel %vm529, %v1552, 0.0
      %v1555 = vsel %vm529, %v1553, 0.0
      %v1556 = vadd.f32 %v1554, %v1555
      %1557 = vadd.xlane.f32.xlu0 %v1556
      %v1558 = vpop.xlane.xlu0 %1557
      %v1559 = vmul.f32 %v1558, %v386
      %v1560 = vsub.f32 %v1544, %v1551
      %v1561 = vsub.f32 %v1545, %v1551
      %v1562 = vmul.f32 %v1551, %v1551
      %v1563 = vsub.f32 %v1559, %v1562
      %v1564 = vadd.f32 %v1563, 1e-05
      %v1565 = vrsqrt.pop %v1564
      %v1566 = vmul.f32 %v1565, %v1564
      %v1567 = vmul.f32 %v1566, %v1565
      %v1568 = vmul.f32 0.5, %v1567
      %v1569 = vsub.f32 1.5, %v1568
      %v1570 = vmul.f32 %v1565, %v1569
      %vm1571 = vweird.f32 %v1564
      %vm1572 = vweird.f32 %v1565
      %vm1573 = vmor %vm1571, %vm1572
      %v1574 = vsel %vm1573, %v1565, %v1570
      %v1575 = vmul.f32 %v1560, %v1574
      %v1576 = vmul.f32 %v1561, %v1574
      %v1577 = vmax.f32 %v1575, 0.0
      %v1578 = vmax.f32 %v1576, 0.0
      %v1581 = vrot.slane %v1577, 6
      %v1582 = vrot.slane %v1578, 6
      %1585 = vst [vmem:[#allocation2 + $0x10] sm:$0xc] %v1581
      %1586 = vst [vmem:[#allocation2 + $0x18] sm:$0xc] %v1582
      %v1587 = vld [vmem:[#allocation2] sm:$0xff]
      %v1588 = vld [vmem:[#allocation2 + $0x8] sm:$0xff]
      %v1589 = vld [vmem:[#allocation2 + $0x10] sm:$0xf]
      %v1590 = vld [vmem:[#allocation2 + $0x18] sm:$0xf]
      %v1591 = vld [vmem:[%s3] sm:$0xff]
      %v1592 = vld [vmem:[%s3 + $0x8] sm:$0xff]
      %v1593 = vld [vmem:[%s1] sm:$0xff]
      %v1594 = vld [vmem:[%s1 + $0x8] sm:$0xf]
      %v1595 = vld [vmem:[%s2] sm:$0xff]
      %v1596 = vld [vmem:[%s2 + $0x8] sm:$0xf]
      %1597 = vmatpush.msra.mxu0 %v464
      %1598 = vmatpush.msra.mxu0 %v463
      %1599 = vmatpush.msra.mxu0 %v462
      %1600 = vmatpush.msra.mxu0 %v461
      %1601 = vmatpush.msra.mxu0 %v460
      %1602 = vmatpush.msra.mxu0 %v459
      %1603 = vmatpush.msra.mxu0 %v458
      %1604 = vmatpush.msra.mxu0 %v457
      %1605 = vmatpush.msra.mxu0 %v456
      %1606 = vmatpush.msra.mxu0 %v455
      %1607 = vmatpush.msra.mxu0 %v454
      %1608 = vmatpush.msra.mxu0 %v453
      %1609 = vmatpush.msra.mxu0 %v452
      %1610 = vmatpush.msra.mxu0 %v451
      %1611 = vmatpush.msra.mxu0 %v450
      %1612 = vmatpush.msra.mxu0 %v449
      %1613 = vmatmul.f32.gmra.mxu0 %v1587
      %v1614 = vpop.f32.mrf.mxu0
      %v1615 = vadd.f32 0.0, %v1614
      %1616 = vmatmul.f32.gmra.mxu0 %v1589
      %v1617 = vpop.f32.mrf.mxu0
      %v1618 = vadd.f32 0.0, %v1617
      %1619 = vdwg.mxu0
      %1620 = vmatpush.msra.mxu0 %v480
      %1621 = vmatpush.msra.mxu0 %v479
      %1622 = vmatpush.msra.mxu0 %v478
      %1623 = vmatpush.msra.mxu0 %v477
      %1624 = vmatpush.msra.mxu0 %v476
      %1625 = vmatpush.msra.mxu0 %v475
      %1626 = vmatpush.msra.mxu0 %v474
      %1627 = vmatpush.msra.mxu0 %v473
      %1628 = vmatpush.msra.mxu0 %v472
      %1629 = vmatpush.msra.mxu0 %v471
      %1630 = vmatpush.msra.mxu0 %v470
      %1631 = vmatpush.msra.mxu0 %v469
      %1632 = vmatpush.msra.mxu0 %v468
      %1633 = vmatpush.msra.mxu0 %v467
      %1634 = vmatpush.msra.mxu0 %v466
      %1635 = vmatpush.msra.mxu0 %v465
      %1636 = vmatmul.f32.gmra.mxu0 %v1588
      %v1637 = vpop.f32.mrf.mxu0
      %v1638 = vadd.f32 %v1615, %v1637
      %1639 = vmatmul.f32.gmra.mxu0 %v1590
      %v1640 = vpop.f32.mrf.mxu0
      %v1641 = vadd.f32 %v1618, %v1640
      %1642 = vdwg.mxu0
      %v1644 = vsel %vm312, %v1591, 0
      %v1647 = vsel %vm312, %v1592, 0
      %v1650 = vsel %vm319, %v1641, 0
      %1652 = vmatpush.msra.mxu0 0.0
      %1653 = vmatpush.msra.mxu0 0.0
      %1654 = vmatpush.msra.mxu0 0.0
      %1655 = vmatpush.msra.mxu0 0.0
      %1656 = vmatpush.msra.mxu0 0.0
      %1657 = vmatpush.msra.mxu0 0.0
      %1658 = vmatpush.msra.mxu0 0.0
      %1659 = vmatpush.msra.mxu0 0.0
      %1660 = vmatpush.msra.mxu0 0.0
      %1661 = vmatpush.msra.mxu0 0.0
      %1662 = vmatpush.msra.mxu0 0.0
      %1663 = vmatpush.msra.mxu0 0.0
      %1664 = vmatpush.msra.mxu0 0.0
      %1665 = vmatpush.msra.mxu0 0.0
      %1666 = vmatpush.msra.mxu0 %v1650
      %1667 = vmatpush.msra.mxu0 %v1638
      %1668 = vmatmul.f32.gmra.mxu0 %v1644
      %v1669 = vpop.f32.mrf.mxu0
      %v1670 = vadd.f32 0.0, %v1669
      %1671 = vmatmul.f32.gmra.mxu0 %v1647
      %v1672 = vpop.f32.mrf.mxu0
      %v1673 = vadd.f32 0.0, %v1672
      %1674 = vdwg.mxu0
      %vm1675 = vcmask 261120
      %v1676 = vsel %vm1675, %v1670, 0.0
      %1677 = vadd.xlane.f32.xlu0 %v1676
      %v1678 = vpop.xlane.xlu0 %1677
      %v1679 = vsel %vm1675, %v1673, 0.0
      %1680 = vadd.xlane.f32.xlu0 %v1679
      %v1681 = vpop.xlane.xlu0 %1680
      %v1682 = vrcp.pop 32.0
      %v1683 = vmul.f32 32.0, %v1682
      %v1684 = vsub.f32 1.0, %v1683
      %v1685 = vmul.f32 %v1682, %v1684
      %v1686 = vadd.f32 %v1682, %v1685
      %vm1687 = vweird.f32 %v1682
      %v1688 = vsel %vm1687, %v1682, %v1686
      %v1689 = vmul.f32 %v1678, %v1688
      %v1690 = vmul.f32 %v1681, %v1688
      %v1691 = vmul.f32 %v1670, %v1670
      %v1692 = vmul.f32 %v1673, %v1673
      %v1693 = vsel %vm1675, %v1691, 0.0
      %1694 = vadd.xlane.f32.xlu0 %v1693
      %v1695 = vpop.xlane.xlu0 %1694
      %v1696 = vsel %vm1675, %v1692, 0.0
      %1697 = vadd.xlane.f32.xlu0 %v1696
      %v1698 = vpop.xlane.xlu0 %1697
      %v1699 = vmul.f32 %v1695, %v1688
      %v1700 = vmul.f32 %v1698, %v1688
      %v1701 = vsub.f32 %v1670, %v1689
      %v1702 = vsub.f32 %v1673, %v1690
      %v1703 = vmul.f32 %v1689, %v1689
      %v1704 = vmul.f32 %v1690, %v1690
      %v1705 = vsub.f32 %v1699, %v1703
      %v1706 = vsub.f32 %v1700, %v1704
      %v1707 = vadd.f32 %v1705, 1e-05
      %v1708 = vadd.f32 %v1706, 1e-05
      %v1709 = vrsqrt.pop %v1707
      %v1710 = vmul.f32 %v1709, %v1707
      %v1711 = vmul.f32 %v1710, %v1709
      %v1712 = vmul.f32 0.5, %v1711
      %v1713 = vsub.f32 1.5, %v1712
      %v1714 = vmul.f32 %v1709, %v1713
      %vm1715 = vweird.f32 %v1707
      %vm1716 = vweird.f32 %v1709
      %vm1717 = vmor %vm1715, %vm1716
      %v1718 = vsel %vm1717, %v1709, %v1714
      %v1719 = vrsqrt.pop %v1708
      %v1720 = vmul.f32 %v1719, %v1708
      %v1721 = vmul.f32 %v1720, %v1719
      %v1722 = vmul.f32 0.5, %v1721
      %v1723 = vsub.f32 1.5, %v1722
      %v1724 = vmul.f32 %v1719, %v1723
      %vm1725 = vweird.f32 %v1708
      %vm1726 = vweird.f32 %v1719
      %vm1727 = vmor %vm1725, %vm1726
      %v1728 = vsel %vm1727, %v1719, %v1724
      %v1729 = vmul.f32 %v1701, %v1718
      %v1730 = vmul.f32 %v1702, %v1728
      %v1731 = vadd.f32 %v1729, 3.0
      %v1732 = vadd.f32 %v1730, 3.0
      %v1733 = vmax.f32 %v1731, 0.0
      %v1734 = vmax.f32 %v1732, 0.0
      %v1735 = vmin.f32 %v1733, 6.0
      %v1736 = vmin.f32 %v1734, 6.0
      %v1737 = vmul.f32 %v1729, %v1735
      %v1738 = vmul.f32 %v1730, %v1736
      %v1739 = vmul.f32 %v1737, 0.16666667
      %v1740 = vmul.f32 %v1738, 0.16666667
      %1742 = vset.pattern.permute.xlu0 2
      %1743 = vperm.xlu0 %1742, %v1595
      %v1744 = vpop.permute.xlu0 %1743
      %1747 = vset.pattern.permute.xlu0 2
      %1748 = vperm.xlu0 %1747, %v1596
      %v1749 = vpop.permute.xlu0 %1748
      %1753 = vrot.lane.b32.xlu0 %v1593, 92
      %v1754 = vpop.permute.xlu0 %1753
      %1755 = vrot.lane.b32.xlu0 %v1594, 92
      %v1756 = vpop.permute.xlu0 %1755
      %vm1757 = vcmask 130048
      %v1758 = vsel %vm1757, %v1754, 0
      %v1760 = vsel %vm1757, %v1756, 0
      %1762 = vmatpush.msra.mxu0 0.0
      %1763 = vmatpush.msra.mxu0 0.0
      %1764 = vmatpush.msra.mxu0 0.0
      %1765 = vmatpush.msra.mxu0 0.0
      %1766 = vmatpush.msra.mxu0 0.0
      %1767 = vmatpush.msra.mxu0 0.0
      %1768 = vmatpush.msra.mxu0 0.0
      %1769 = vmatpush.msra.mxu0 0.0
      %1770 = vmatpush.msra.mxu0 0.0
      %1771 = vmatpush.msra.mxu0 0.0
      %1772 = vmatpush.msra.mxu0 0.0
      %1773 = vmatpush.msra.mxu0 0.0
      %1774 = vmatpush.msra.mxu0 0.0
      %1775 = vmatpush.msra.mxu0 0.0
      %1776 = vmatpush.msra.mxu0 %v1740
      %1777 = vmatpush.msra.mxu0 %v1739
      %1778 = vmatmul.f32.gmra.mxu0 %v1758
      %v1779 = vpop.f32.mrf.mxu0
      %v1780 = vadd.f32 %v1744, %v1779
      %1781 = vmatmul.f32.gmra.mxu0 %v1760
      %v1782 = vpop.f32.mrf.mxu0
      %v1783 = vadd.f32 %v1749, %v1782
      %1784 = vdwg.mxu0
      %v1785 = vxor.u32 %v1780, 2147483648
      %v1786 = vxor.u32 %v1783, 2147483648
      %v1787 = vmul.f32 %v1785, 1.442695
      %v1788 = vpow.pop %v1787
      %v1789 = vmul.f32 %v1786, 1.442695
      %v1790 = vpow.pop %v1789
      %v1791 = vadd.f32 %v1788, 1.0
      %v1792 = vadd.f32 %v1790, 1.0
      %v1793 = vrcp.pop %v1791
      %v1794 = vmul.f32 %v1791, %v1793
      %v1795 = vsub.f32 1.0, %v1794
      %v1796 = vmul.f32 %v1793, %v1795
      %v1797 = vadd.f32 %v1793, %v1796
      %vm1798 = vweird.f32 %v1791
      %vm1799 = vweird.f32 %v1793
      %vm1800 = vmor %vm1798, %vm1799
      %v1801 = vsel %vm1800, %v1793, %v1797
      %v1802 = vand.u32 2147483647, %v1791
      %vm1803 = vcmp.eq.f32.partialorder %v1802, 8.507059e+37
      %v1804 = vand.u32 %v1791, 2147483648
      %v1805 = vor.u32 1.1754944e-38, %v1804
      %v1806 = vsel %vm1803, %v1805, %v1801
      %v1807 = vmul.f32 1.0, %v1806
      %v1808 = vrcp.pop %v1792
      %v1809 = vmul.f32 %v1792, %v1808
      %v1810 = vsub.f32 1.0, %v1809
      %v1811 = vmul.f32 %v1808, %v1810
      %v1812 = vadd.f32 %v1808, %v1811
      %vm1813 = vweird.f32 %v1792
      %vm1814 = vweird.f32 %v1808
      %vm1815 = vmor %vm1813, %vm1814
      %v1816 = vsel %vm1815, %v1808, %v1812
      %v1817 = vand.u32 2147483647, %v1792
      %vm1818 = vcmp.eq.f32.partialorder %v1817, 8.507059e+37
      %v1819 = vand.u32 %v1792, 2147483648
      %v1820 = vor.u32 1.1754944e-38, %v1819
      %v1821 = vsel %vm1818, %v1820, %v1816
      %v1822 = vmul.f32 1.0, %v1821
      %1823 = vset.pattern.permute.xlu0 3
      %1824 = vperm.xlu0 %1823, %v1595
      %v1825 = vpop.permute.xlu0 %1824
      %1827 = vset.pattern.permute.xlu0 3
      %1828 = vperm.xlu0 %1827, %v1596
      %v1829 = vpop.permute.xlu0 %1828
      %1831 = vrot.lane.b32.xlu0 %v1593, 76
      %v1832 = vpop.permute.xlu0 %1831
      %1833 = vrot.lane.b32.xlu0 %v1594, 76
      %v1834 = vpop.permute.xlu0 %1833
      %1837 = vrot.lane.b32.xlu0 %v1739, 112
      %v1838 = vpop.permute.xlu0 %1837
      %1839 = vrot.lane.b32.xlu0 %v1740, 112
      %v1840 = vpop.permute.xlu0 %1839
      %v1843 = vsel %vm1757, %v1832, 0
      %v1845 = vsel %vm1757, %v1834, 0
      %1847 = vmatpush.msra.mxu0 0.0
      %1848 = vmatpush.msra.mxu0 0.0
      %1849 = vmatpush.msra.mxu0 0.0
      %1850 = vmatpush.msra.mxu0 0.0
      %1851 = vmatpush.msra.mxu0 0.0
      %1852 = vmatpush.msra.mxu0 0.0
      %1853 = vmatpush.msra.mxu0 0.0
      %1854 = vmatpush.msra.mxu0 0.0
      %1855 = vmatpush.msra.mxu0 0.0
      %1856 = vmatpush.msra.mxu0 0.0
      %1857 = vmatpush.msra.mxu0 0.0
      %1858 = vmatpush.msra.mxu0 0.0
      %1859 = vmatpush.msra.mxu0 0.0
      %1860 = vmatpush.msra.mxu0 0.0
      %1861 = vmatpush.msra.mxu0 %v1840
      %1862 = vmatpush.msra.mxu0 %v1838
      %1863 = vmatmul.f32.gmra.mxu0 %v1843
      %v1864 = vpop.f32.mrf.mxu0
      %v1865 = vadd.f32 %v1825, %v1864
      %1866 = vmatmul.f32.gmra.mxu0 %v1845
      %v1867 = vpop.f32.mrf.mxu0
      %v1868 = vadd.f32 %v1829, %v1867
      %1869 = vdwg.mxu0
      %v1870 = vxor.u32 %v1865, 2147483648
      %v1871 = vxor.u32 %v1868, 2147483648
      %v1872 = vmul.f32 %v1870, 1.442695
      %v1873 = vpow.pop %v1872
      %v1874 = vmul.f32 %v1871, 1.442695
      %v1875 = vpow.pop %v1874
      %v1876 = vadd.f32 %v1873, 1.0
      %v1877 = vadd.f32 %v1875, 1.0
      %v1878 = vrcp.pop %v1876
      %v1879 = vmul.f32 %v1876, %v1878
      %v1880 = vsub.f32 1.0, %v1879
      %v1881 = vmul.f32 %v1878, %v1880
      %v1882 = vadd.f32 %v1878, %v1881
      %vm1883 = vweird.f32 %v1876
      %vm1884 = vweird.f32 %v1878
      %vm1885 = vmor %vm1883, %vm1884
      %v1886 = vsel %vm1885, %v1878, %v1882
      %v1887 = vand.u32 2147483647, %v1876
      %vm1888 = vcmp.eq.f32.partialorder %v1887, 8.507059e+37
      %v1889 = vand.u32 %v1876, 2147483648
      %v1890 = vor.u32 1.1754944e-38, %v1889
      %v1891 = vsel %vm1888, %v1890, %v1886
      %v1892 = vmul.f32 1.0, %v1891
      %v1893 = vrcp.pop %v1877
      %v1894 = vmul.f32 %v1877, %v1893
      %v1895 = vsub.f32 1.0, %v1894
      %v1896 = vmul.f32 %v1893, %v1895
      %v1897 = vadd.f32 %v1893, %v1896
      %vm1898 = vweird.f32 %v1877
      %vm1899 = vweird.f32 %v1893
      %vm1900 = vmor %vm1898, %vm1899
      %v1901 = vsel %vm1900, %v1893, %v1897
      %v1902 = vand.u32 2147483647, %v1877
      %vm1903 = vcmp.eq.f32.partialorder %v1902, 8.507059e+37
      %v1904 = vand.u32 %v1877, 2147483648
      %v1905 = vor.u32 1.1754944e-38, %v1904
      %v1906 = vsel %vm1903, %v1905, %v1901
      %v1907 = vmul.f32 1.0, %v1906
      %v1909 = vsel %vm1757, %v1892, 0
      %v1912 = vsel %vm1757, %v1907, 0
      %1914 = vmatpush.msra.mxu0 0.0
      %1915 = vmatpush.msra.mxu0 0.0
      %1916 = vmatpush.msra.mxu0 0.0
      %1917 = vmatpush.msra.mxu0 0.0
      %1918 = vmatpush.msra.mxu0 0.0
      %1919 = vmatpush.msra.mxu0 0.0
      %1920 = vmatpush.msra.mxu0 0.0
      %1921 = vmatpush.msra.mxu0 0.0
      %1922 = vmatpush.msra.mxu0 0.0
      %1923 = vmatpush.msra.mxu0 0.0
      %1924 = vmatpush.msra.mxu0 0.0
      %1925 = vmatpush.msra.mxu0 0.0
      %1926 = vmatpush.msra.mxu0 0.0
      %1927 = vmatpush.msra.mxu0 0.0
      %1928 = vmatpush.msra.mxu0 %v447
      %1929 = vmatpush.msra.mxu0 %v445
      %1930 = vmatmul.f32.gmra.mxu0 %v1909
      %v1931 = vpop.f32.mrf.mxu0
      %v1932 = vadd.f32 0.0, %v1931
      %1933 = vmatmul.f32.gmra.mxu0 %v1912
      %v1934 = vpop.f32.mrf.mxu0
      %v1935 = vadd.f32 0.0, %v1934
      %1936 = vdwg.mxu0
      %1937 = vmatpush.msra.mxu0 0.0
      %1938 = vmatpush.msra.mxu0 0.0
      %1939 = vmatpush.msra.mxu0 0.0
      %1940 = vmatpush.msra.mxu0 0.0
      %1941 = vmatpush.msra.mxu0 0.0
      %1942 = vmatpush.msra.mxu0 0.0
      %1943 = vmatpush.msra.mxu0 0.0
      %1944 = vmatpush.msra.mxu0 0.0
      %1945 = vmatpush.msra.mxu0 0.0
      %1946 = vmatpush.msra.mxu0 0.0
      %1947 = vmatpush.msra.mxu0 0.0
      %1948 = vmatpush.msra.mxu0 0.0
      %1949 = vmatpush.msra.mxu0 0.0
      %1950 = vmatpush.msra.mxu0 0.0
      %1951 = vmatpush.msra.mxu0 %v448
      %1952 = vmatpush.msra.mxu0 %v446
      %1953 = vmatmul.f32.gmra.mxu0 %v1909
      %v1954 = vpop.f32.mrf.mxu0
      %v1955 = vadd.f32 0.0, %v1954
      %1956 = vmatmul.f32.gmra.mxu0 %v1912
      %v1957 = vpop.f32.mrf.mxu0
      %v1958 = vadd.f32 0.0, %v1957
      %1959 = vdwg.mxu0
      %v1960 = vmul.f32 %v1587, %v1932
      %v1961 = vmul.f32 %v1588, %v1955
      %v1962 = vmul.f32 %v1589, %v1935
      %v1963 = vmul.f32 %v1590, %v1958
      %v1965 = vsel %vm1757, %v1807, 0
      %v1968 = vsel %vm1757, %v1822, 0
      %1970 = vmatpush.msra.mxu0 0.0
      %1971 = vmatpush.msra.mxu0 0.0
      %1972 = vmatpush.msra.mxu0 0.0
      %1973 = vmatpush.msra.mxu0 0.0
      %1974 = vmatpush.msra.mxu0 0.0
      %1975 = vmatpush.msra.mxu0 0.0
      %1976 = vmatpush.msra.mxu0 0.0
      %1977 = vmatpush.msra.mxu0 0.0
      %1978 = vmatpush.msra.mxu0 0.0
      %1979 = vmatpush.msra.mxu0 0.0
      %1980 = vmatpush.msra.mxu0 0.0
      %1981 = vmatpush.msra.mxu0 0.0
      %1982 = vmatpush.msra.mxu0 0.0
      %1983 = vmatpush.msra.mxu0 0.0
      %1984 = vmatpush.msra.mxu0 %v443
      %1985 = vmatpush.msra.mxu0 %v441
      %1986 = vmatmul.f32.gmra.mxu0 %v1965
      %v1987 = vpop.f32.mrf.mxu0
      %v1988 = vadd.f32 0.0, %v1987
      %1989 = vmatmul.f32.gmra.mxu0 %v1968
      %v1990 = vpop.f32.mrf.mxu0
      %v1991 = vadd.f32 0.0, %v1990
      %1992 = vdwg.mxu0
      %1993 = vmatpush.msra.mxu0 0.0
      %1994 = vmatpush.msra.mxu0 0.0
      %1995 = vmatpush.msra.mxu0 0.0
      %1996 = vmatpush.msra.mxu0 0.0
      %1997 = vmatpush.msra.mxu0 0.0
      %1998 = vmatpush.msra.mxu0 0.0
      %1999 = vmatpush.msra.mxu0 0.0
      %2000 = vmatpush.msra.mxu0 0.0
      %2001 = vmatpush.msra.mxu0 0.0
      %2002 = vmatpush.msra.mxu0 0.0
      %2003 = vmatpush.msra.mxu0 0.0
      %2004 = vmatpush.msra.mxu0 0.0
      %2005 = vmatpush.msra.mxu0 0.0
      %2006 = vmatpush.msra.mxu0 0.0
      %2007 = vmatpush.msra.mxu0 %v444
      %2008 = vmatpush.msra.mxu0 %v442
      %2009 = vmatmul.f32.gmra.mxu0 %v1965
      %v2010 = vpop.f32.mrf.mxu0
      %v2011 = vadd.f32 0.0, %v2010
      %2012 = vmatmul.f32.gmra.mxu0 %v1968
      %v2013 = vpop.f32.mrf.mxu0
      %v2014 = vadd.f32 0.0, %v2013
      %2015 = vdwg.mxu0
      %v2016 = vmul.f32 %v1960, %v1988
      %v2017 = vmul.f32 %v1961, %v2011
      %v2018 = vmul.f32 %v1962, %v1991
      %v2019 = vmul.f32 %v1963, %v2014
      %v2020 = vadd.f32 %v2016, %v1587
      %v2021 = vadd.f32 %v2017, %v1588
      %v2022 = vadd.f32 %v2018, %v1589
      %v2023 = vadd.f32 %v2019, %v1590
      %2024 = vset.pattern.permute.xlu0 0
      %2025 = vperm.xlu0 %2024, %v1595
      %v2026 = vpop.permute.xlu0 %2025
      %2028 = vset.pattern.permute.xlu0 0
      %2029 = vperm.xlu0 %2028, %v1596
      %v2030 = vpop.permute.xlu0 %2029
      %2032 = vrot.lane.b32.xlu0 %v1593, 116
      %v2033 = vpop.permute.xlu0 %2032
      %2034 = vrot.lane.b32.xlu0 %v1594, 116
      %v2035 = vpop.permute.xlu0 %2034
      %v2036 = vsel %vm312, %v2033, 0
      %v2038 = vsel %vm312, %v2035, 0
      %v2041 = vsel %vm319, %v2022, 0
      %v2044 = vsel %vm319, %v2023, 0
      %2046 = vmatpush.msra.mxu0 0.0
      %2047 = vmatpush.msra.mxu0 0.0
      %2048 = vmatpush.msra.mxu0 0.0
      %2049 = vmatpush.msra.mxu0 0.0
      %2050 = vmatpush.msra.mxu0 0.0
      %2051 = vmatpush.msra.mxu0 0.0
      %2052 = vmatpush.msra.mxu0 0.0
      %2053 = vmatpush.msra.mxu0 0.0
      %2054 = vmatpush.msra.mxu0 0.0
      %2055 = vmatpush.msra.mxu0 0.0
      %2056 = vmatpush.msra.mxu0 0.0
      %2057 = vmatpush.msra.mxu0 0.0
      %2058 = vmatpush.msra.mxu0 0.0
      %2059 = vmatpush.msra.mxu0 0.0
      %2060 = vmatpush.msra.mxu0 %v2041
      %2061 = vmatpush.msra.mxu0 %v2020
      %2062 = vmatmul.f32.gmra.mxu0 %v2036
      %v2063 = vpop.f32.mrf.mxu0
      %v2064 = vadd.f32 %v2026, %v2063
      %2065 = vmatmul.f32.gmra.mxu0 %v2038
      %v2066 = vpop.f32.mrf.mxu0
      %v2067 = vadd.f32 %v2030, %v2066
      %2068 = vdwg.mxu0
      %2069 = vmatpush.msra.mxu0 0.0
      %2070 = vmatpush.msra.mxu0 0.0
      %2071 = vmatpush.msra.mxu0 0.0
      %2072 = vmatpush.msra.mxu0 0.0
      %2073 = vmatpush.msra.mxu0 0.0
      %2074 = vmatpush.msra.mxu0 0.0
      %2075 = vmatpush.msra.mxu0 0.0
      %2076 = vmatpush.msra.mxu0 0.0
      %2077 = vmatpush.msra.mxu0 0.0
      %2078 = vmatpush.msra.mxu0 0.0
      %2079 = vmatpush.msra.mxu0 0.0
      %2080 = vmatpush.msra.mxu0 0.0
      %2081 = vmatpush.msra.mxu0 0.0
      %2082 = vmatpush.msra.mxu0 0.0
      %2083 = vmatpush.msra.mxu0 %v2044
      %2084 = vmatpush.msra.mxu0 %v2021
      %2085 = vmatmul.f32.gmra.mxu0 %v2036
      %v2086 = vpop.f32.mrf.mxu0
      %v2087 = vadd.f32 %v2026, %v2086
      %2088 = vmatmul.f32.gmra.mxu0 %v2038
      %v2089 = vpop.f32.mrf.mxu0
      %v2090 = vadd.f32 %v2030, %v2089
      %2091 = vdwg.mxu0
      %s2092 = scalar_lea.vmem %s7, 2
      %v2093 = vld [vmem:[%s2092] ss:$4 sm:$0x3]
      %s2094 = scalar_lea.vmem %s7, 3
      %v2095 = vld [vmem:[%s2094] ss:$4 sm:$0x3]
      %2096 = vst [vmem:[#allocation2] sm:$0x3] %v2064
      %2097 = vst [vmem:[#allocation2 + $0x8] sm:$0x3] %v2087
      %v2100 = vrot.slane %v2064, 2
      %v2101 = vrot.slane %v2087, 2
      %2104 = vrot.lane.b32.xlu0 %v2100, 16
      %v2105 = vpop.permute.xlu0 %2104
      %2106 = vrot.lane.b32.xlu0 %v2101, 16
      %v2107 = vpop.permute.xlu0 %2106
      %vm2108 = vcmp.lt.s32.totalorder %v497, 16
      %v2109 = vsel %vm2108, %v2105, %v2107
      %v2110 = vsel %vm2108, %v2107, %v2105
      %v2112 = vperm.slane %v2093, 0
      %v2113 = vperm.slane %v2093, 1
      %v2116 = vmul.f32 %v2110, %v2112
      %v2117 = vmul.f32 %v2109, %v2113
      %2118 = vrot.lane.b32.xlu0 %v2100, 112
      %v2119 = vpop.permute.xlu0 %2118
      %2120 = vrot.lane.b32.xlu0 %v2101, 112
      %v2121 = vpop.permute.xlu0 %2120
      %vm2122 = vcmp.lt.s32.totalorder %v497, 112
      %v2123 = vsel %vm2122, %v2119, %v2121
      %v2124 = vsel %vm2122, %v2121, %v2119
      %v2126 = vperm.slane %v2095, 0
      %v2127 = vperm.slane %v2095, 1
      %v2130 = vmul.f32 %v2123, %v2126
      %v2131 = vmul.f32 %v2124, %v2127
      %v2132 = vld [vmem:[%s4] sm:$0x3]
      %2134 = vrot.lane.b32.xlu0 %v2132, 96
      %v2135 = vpop.permute.xlu0 %2134
      %v2136 = vsel %vm526, %v2135, 0
      %v2138 = vsel %vm529, %v2100, 0
      %v2140 = vsel %vm529, %v2101, 0
      %2142 = vmatpush.msra.mxu0 0.0
      %2143 = vmatpush.msra.mxu0 0.0
      %2144 = vmatpush.msra.mxu0 0.0
      %2145 = vmatpush.msra.mxu0 0.0
      %2146 = vmatpush.msra.mxu0 0.0
      %2147 = vmatpush.msra.mxu0 0.0
      %2148 = vmatpush.msra.mxu0 0.0
      %2149 = vmatpush.msra.mxu0 0.0
      %2150 = vmatpush.msra.mxu0 0.0
      %2151 = vmatpush.msra.mxu0 0.0
      %2152 = vmatpush.msra.mxu0 0.0
      %2153 = vmatpush.msra.mxu0 0.0
      %2154 = vmatpush.msra.mxu0 0.0
      %2155 = vmatpush.msra.mxu0 0.0
      %2156 = vmatpush.msra.mxu0 0.0
      %2157 = vmatpush.msra.mxu0 %v2138
      %2158 = vmatmul.f32.gmra.mxu0 %v2136
      %v2159 = vpop.f32.mrf.mxu0
      %v2160 = vadd.f32 0.0, %v2159
      %2161 = vdwg.mxu0
      %2162 = vmatpush.msra.mxu0 0.0
      %2163 = vmatpush.msra.mxu0 0.0
      %2164 = vmatpush.msra.mxu0 0.0
      %2165 = vmatpush.msra.mxu0 0.0
      %2166 = vmatpush.msra.mxu0 0.0
      %2167 = vmatpush.msra.mxu0 0.0
      %2168 = vmatpush.msra.mxu0 0.0
      %2169 = vmatpush.msra.mxu0 0.0
      %2170 = vmatpush.msra.mxu0 0.0
      %2171 = vmatpush.msra.mxu0 0.0
      %2172 = vmatpush.msra.mxu0 0.0
      %2173 = vmatpush.msra.mxu0 0.0
      %2174 = vmatpush.msra.mxu0 0.0
      %2175 = vmatpush.msra.mxu0 0.0
      %2176 = vmatpush.msra.mxu0 0.0
      %2177 = vmatpush.msra.mxu0 %v2140
      %2178 = vmatmul.f32.gmra.mxu0 %v2136
      %v2179 = vpop.f32.mrf.mxu0
      %v2180 = vadd.f32 0.0, %v2179
      %2181 = vdwg.mxu0
      %2182 = vrot.lane.b32.xlu0 %v2132, 98
      %v2183 = vpop.permute.xlu0 %2182
      %v2184 = vsel %vm526, %v2183, 0
      %v2187 = vsel %vm529, %v2116, 0
      %v2190 = vsel %vm529, %v2117, 0
      %2192 = vmatpush.msra.mxu0 0.0
      %2193 = vmatpush.msra.mxu0 0.0
      %2194 = vmatpush.msra.mxu0 0.0
      %2195 = vmatpush.msra.mxu0 0.0
      %2196 = vmatpush.msra.mxu0 0.0
      %2197 = vmatpush.msra.mxu0 0.0
      %2198 = vmatpush.msra.mxu0 0.0
      %2199 = vmatpush.msra.mxu0 0.0
      %2200 = vmatpush.msra.mxu0 0.0
      %2201 = vmatpush.msra.mxu0 0.0
      %2202 = vmatpush.msra.mxu0 0.0
      %2203 = vmatpush.msra.mxu0 0.0
      %2204 = vmatpush.msra.mxu0 0.0
      %2205 = vmatpush.msra.mxu0 0.0
      %2206 = vmatpush.msra.mxu0 0.0
      %2207 = vmatpush.msra.mxu0 %v2187
      %2208 = vmatmul.f32.gmra.mxu0 %v2184
      %v2209 = vpop.f32.mrf.mxu0
      %v2210 = vadd.f32 %v2160, %v2209
      %2211 = vdwg.mxu0
      %2212 = vmatpush.msra.mxu0 0.0
      %2213 = vmatpush.msra.mxu0 0.0
      %2214 = vmatpush.msra.mxu0 0.0
      %2215 = vmatpush.msra.mxu0 0.0
      %2216 = vmatpush.msra.mxu0 0.0
      %2217 = vmatpush.msra.mxu0 0.0
      %2218 = vmatpush.msra.mxu0 0.0
      %2219 = vmatpush.msra.mxu0 0.0
      %2220 = vmatpush.msra.mxu0 0.0
      %2221 = vmatpush.msra.mxu0 0.0
      %2222 = vmatpush.msra.mxu0 0.0
      %2223 = vmatpush.msra.mxu0 0.0
      %2224 = vmatpush.msra.mxu0 0.0
      %2225 = vmatpush.msra.mxu0 0.0
      %2226 = vmatpush.msra.mxu0 0.0
      %2227 = vmatpush.msra.mxu0 %v2190
      %2228 = vmatmul.f32.gmra.mxu0 %v2184
      %v2229 = vpop.f32.mrf.mxu0
      %v2230 = vadd.f32 %v2180, %v2229
      %2231 = vdwg.mxu0
      %2232 = vrot.lane.b32.xlu0 %v2132, 94
      %v2233 = vpop.permute.xlu0 %2232
      %v2234 = vsel %vm526, %v2233, 0
      %v2237 = vsel %vm529, %v2130, 0
      %v2240 = vsel %vm529, %v2131, 0
      %2242 = vmatpush.msra.mxu0 0.0
      %2243 = vmatpush.msra.mxu0 0.0
      %2244 = vmatpush.msra.mxu0 0.0
      %2245 = vmatpush.msra.mxu0 0.0
      %2246 = vmatpush.msra.mxu0 0.0
      %2247 = vmatpush.msra.mxu0 0.0
      %2248 = vmatpush.msra.mxu0 0.0
      %2249 = vmatpush.msra.mxu0 0.0
      %2250 = vmatpush.msra.mxu0 0.0
      %2251 = vmatpush.msra.mxu0 0.0
      %2252 = vmatpush.msra.mxu0 0.0
      %2253 = vmatpush.msra.mxu0 0.0
      %2254 = vmatpush.msra.mxu0 0.0
      %2255 = vmatpush.msra.mxu0 0.0
      %2256 = vmatpush.msra.mxu0 0.0
      %2257 = vmatpush.msra.mxu0 %v2237
      %2258 = vmatmul.f32.gmra.mxu0 %v2234
      %v2259 = vpop.f32.mrf.mxu0
      %v2260 = vadd.f32 0.0, %v2259
      %2261 = vdwg.mxu0
      %2262 = vmatpush.msra.mxu0 0.0
      %2263 = vmatpush.msra.mxu0 0.0
      %2264 = vmatpush.msra.mxu0 0.0
      %2265 = vmatpush.msra.mxu0 0.0
      %2266 = vmatpush.msra.mxu0 0.0
      %2267 = vmatpush.msra.mxu0 0.0
      %2268 = vmatpush.msra.mxu0 0.0
      %2269 = vmatpush.msra.mxu0 0.0
      %2270 = vmatpush.msra.mxu0 0.0
      %2271 = vmatpush.msra.mxu0 0.0
      %2272 = vmatpush.msra.mxu0 0.0
      %2273 = vmatpush.msra.mxu0 0.0
      %2274 = vmatpush.msra.mxu0 0.0
      %2275 = vmatpush.msra.mxu0 0.0
      %2276 = vmatpush.msra.mxu0 0.0
      %2277 = vmatpush.msra.mxu0 %v2240
      %2278 = vmatmul.f32.gmra.mxu0 %v2234
      %v2279 = vpop.f32.mrf.mxu0
      %v2280 = vadd.f32 0.0, %v2279
      %2281 = vdwg.mxu0
      %v2282 = vadd.f32 %v2210, %v2260
      %v2283 = vadd.f32 %v2230, %v2280
      %v2284 = vsel %vm529, %v2282, 0.0
      %v2285 = vsel %vm529, %v2283, 0.0
      %v2286 = vadd.f32 %v2284, %v2285
      %2287 = vadd.xlane.f32.xlu0 %v2286
      %v2288 = vpop.xlane.xlu0 %2287
      %v2289 = vmul.f32 %v2288, %v386
      %v2290 = vmul.f32 %v2282, %v2282
      %v2291 = vmul.f32 %v2283, %v2283
      %v2292 = vsel %vm529, %v2290, 0.0
      %v2293 = vsel %vm529, %v2291, 0.0
      %v2294 = vadd.f32 %v2292, %v2293
      %2295 = vadd.xlane.f32.xlu0 %v2294
      %v2296 = vpop.xlane.xlu0 %2295
      %v2297 = vmul.f32 %v2296, %v386
      %v2298 = vsub.f32 %v2282, %v2289
      %v2299 = vsub.f32 %v2283, %v2289
      %v2300 = vmul.f32 %v2289, %v2289
      %v2301 = vsub.f32 %v2297, %v2300
      %v2302 = vadd.f32 %v2301, 1e-05
      %v2303 = vrsqrt.pop %v2302
      %v2304 = vmul.f32 %v2303, %v2302
      %v2305 = vmul.f32 %v2304, %v2303
      %v2306 = vmul.f32 0.5, %v2305
      %v2307 = vsub.f32 1.5, %v2306
      %v2308 = vmul.f32 %v2303, %v2307
      %vm2309 = vweird.f32 %v2302
      %vm2310 = vweird.f32 %v2303
      %vm2311 = vmor %vm2309, %vm2310
      %v2312 = vsel %vm2311, %v2303, %v2308
      %v2313 = vmul.f32 %v2298, %v2312
      %v2314 = vmul.f32 %v2299, %v2312
      %v2315 = vmax.f32 %v2313, 0.0
      %v2316 = vmax.f32 %v2314, 0.0
      %v2319 = vrot.slane %v2315, 6
      %v2320 = vrot.slane %v2316, 6
      %2323 = vst [vmem:[#allocation2] sm:$0xc] %v2319
      %2324 = vst [vmem:[#allocation2 + $0x8] sm:$0xc] %v2320
      %v2325 = vrot.slane %v2315, 4
      %v2326 = vrot.slane %v2316, 4
      %v2329 = vadd.f32 %v2064, %v2325
      %v2330 = vadd.f32 %v2087, %v2326
      %v2333 = vrot.slane %v2329, 4
      %v2334 = vrot.slane %v2330, 4
      %2337 = vrot.lane.b32.xlu0 %v2333, 16
      %v2338 = vpop.permute.xlu0 %2337
      %2339 = vrot.lane.b32.xlu0 %v2334, 16
      %v2340 = vpop.permute.xlu0 %2339
      %v2341 = vsel %vm2108, %v2338, %v2340
      %v2342 = vsel %vm2108, %v2340, %v2338
      %v2343 = vmul.f32 %v2342, %v2112
      %v2344 = vmul.f32 %v2341, %v2113
      %2345 = vrot.lane.b32.xlu0 %v2333, 112
      %v2346 = vpop.permute.xlu0 %2345
      %2347 = vrot.lane.b32.xlu0 %v2334, 112
      %v2348 = vpop.permute.xlu0 %2347
      %v2349 = vsel %vm2122, %v2346, %v2348
      %v2350 = vsel %vm2122, %v2348, %v2346
      %v2351 = vmul.f32 %v2349, %v2126
      %v2352 = vmul.f32 %v2350, %v2127
      %v2353 = vld [vmem:[%s4] sm:$0x3]
      %2355 = vrot.lane.b32.xlu0 %v2353, 90
      %v2356 = vpop.permute.xlu0 %2355
      %v2357 = vsel %vm526, %v2356, 0
      %v2359 = vsel %vm529, %v2333, 0
      %v2361 = vsel %vm529, %v2334, 0
      %2363 = vmatpush.msra.mxu0 0.0
      %2364 = vmatpush.msra.mxu0 0.0
      %2365 = vmatpush.msra.mxu0 0.0
      %2366 = vmatpush.msra.mxu0 0.0
      %2367 = vmatpush.msra.mxu0 0.0
      %2368 = vmatpush.msra.mxu0 0.0
      %2369 = vmatpush.msra.mxu0 0.0
      %2370 = vmatpush.msra.mxu0 0.0
      %2371 = vmatpush.msra.mxu0 0.0
      %2372 = vmatpush.msra.mxu0 0.0
      %2373 = vmatpush.msra.mxu0 0.0
      %2374 = vmatpush.msra.mxu0 0.0
      %2375 = vmatpush.msra.mxu0 0.0
      %2376 = vmatpush.msra.mxu0 0.0
      %2377 = vmatpush.msra.mxu0 0.0
      %2378 = vmatpush.msra.mxu0 %v2359
      %2379 = vmatmul.f32.gmra.mxu0 %v2357
      %v2380 = vpop.f32.mrf.mxu0
      %v2381 = vadd.f32 0.0, %v2380
      %2382 = vdwg.mxu0
      %2383 = vmatpush.msra.mxu0 0.0
      %2384 = vmatpush.msra.mxu0 0.0
      %2385 = vmatpush.msra.mxu0 0.0
      %2386 = vmatpush.msra.mxu0 0.0
      %2387 = vmatpush.msra.mxu0 0.0
      %2388 = vmatpush.msra.mxu0 0.0
      %2389 = vmatpush.msra.mxu0 0.0
      %2390 = vmatpush.msra.mxu0 0.0
      %2391 = vmatpush.msra.mxu0 0.0
      %2392 = vmatpush.msra.mxu0 0.0
      %2393 = vmatpush.msra.mxu0 0.0
      %2394 = vmatpush.msra.mxu0 0.0
      %2395 = vmatpush.msra.mxu0 0.0
      %2396 = vmatpush.msra.mxu0 0.0
      %2397 = vmatpush.msra.mxu0 0.0
      %2398 = vmatpush.msra.mxu0 %v2361
      %2399 = vmatmul.f32.gmra.mxu0 %v2357
      %v2400 = vpop.f32.mrf.mxu0
      %v2401 = vadd.f32 0.0, %v2400
      %2402 = vdwg.mxu0
      %2403 = vrot.lane.b32.xlu0 %v2353, 92
      %v2404 = vpop.permute.xlu0 %2403
      %v2405 = vsel %vm526, %v2404, 0
      %v2408 = vsel %vm529, %v2343, 0
      %v2411 = vsel %vm529, %v2344, 0
      %2413 = vmatpush.msra.mxu0 0.0
      %2414 = vmatpush.msra.mxu0 0.0
      %2415 = vmatpush.msra.mxu0 0.0
      %2416 = vmatpush.msra.mxu0 0.0
      %2417 = vmatpush.msra.mxu0 0.0
      %2418 = vmatpush.msra.mxu0 0.0
      %2419 = vmatpush.msra.mxu0 0.0
      %2420 = vmatpush.msra.mxu0 0.0
      %2421 = vmatpush.msra.mxu0 0.0
      %2422 = vmatpush.msra.mxu0 0.0
      %2423 = vmatpush.msra.mxu0 0.0
      %2424 = vmatpush.msra.mxu0 0.0
      %2425 = vmatpush.msra.mxu0 0.0
      %2426 = vmatpush.msra.mxu0 0.0
      %2427 = vmatpush.msra.mxu0 0.0
      %2428 = vmatpush.msra.mxu0 %v2408
      %2429 = vmatmul.f32.gmra.mxu0 %v2405
      %v2430 = vpop.f32.mrf.mxu0
      %v2431 = vadd.f32 %v2381, %v2430
      %2432 = vdwg.mxu0
      %2433 = vmatpush.msra.mxu0 0.0
      %2434 = vmatpush.msra.mxu0 0.0
      %2435 = vmatpush.msra.mxu0 0.0
      %2436 = vmatpush.msra.mxu0 0.0
      %2437 = vmatpush.msra.mxu0 0.0
      %2438 = vmatpush.msra.mxu0 0.0
      %2439 = vmatpush.msra.mxu0 0.0
      %2440 = vmatpush.msra.mxu0 0.0
      %2441 = vmatpush.msra.mxu0 0.0
      %2442 = vmatpush.msra.mxu0 0.0
      %2443 = vmatpush.msra.mxu0 0.0
      %2444 = vmatpush.msra.mxu0 0.0
      %2445 = vmatpush.msra.mxu0 0.0
      %2446 = vmatpush.msra.mxu0 0.0
      %2447 = vmatpush.msra.mxu0 0.0
      %2448 = vmatpush.msra.mxu0 %v2411
      %2449 = vmatmul.f32.gmra.mxu0 %v2405
      %v2450 = vpop.f32.mrf.mxu0
      %v2451 = vadd.f32 %v2401, %v2450
      %2452 = vdwg.mxu0
      %2453 = vrot.lane.b32.xlu0 %v2353, 88
      %v2454 = vpop.permute.xlu0 %2453
      %v2455 = vsel %vm526, %v2454, 0
      %v2458 = vsel %vm529, %v2351, 0
      %v2461 = vsel %vm529, %v2352, 0
      %2463 = vmatpush.msra.mxu0 0.0
      %2464 = vmatpush.msra.mxu0 0.0
      %2465 = vmatpush.msra.mxu0 0.0
      %2466 = vmatpush.msra.mxu0 0.0
      %2467 = vmatpush.msra.mxu0 0.0
      %2468 = vmatpush.msra.mxu0 0.0
      %2469 = vmatpush.msra.mxu0 0.0
      %2470 = vmatpush.msra.mxu0 0.0
      %2471 = vmatpush.msra.mxu0 0.0
      %2472 = vmatpush.msra.mxu0 0.0
      %2473 = vmatpush.msra.mxu0 0.0
      %2474 = vmatpush.msra.mxu0 0.0
      %2475 = vmatpush.msra.mxu0 0.0
      %2476 = vmatpush.msra.mxu0 0.0
      %2477 = vmatpush.msra.mxu0 0.0
      %2478 = vmatpush.msra.mxu0 %v2458
      %2479 = vmatmul.f32.gmra.mxu0 %v2455
      %v2480 = vpop.f32.mrf.mxu0
      %v2481 = vadd.f32 0.0, %v2480
      %2482 = vdwg.mxu0
      %2483 = vmatpush.msra.mxu0 0.0
      %2484 = vmatpush.msra.mxu0 0.0
      %2485 = vmatpush.msra.mxu0 0.0
      %2486 = vmatpush.msra.mxu0 0.0
      %2487 = vmatpush.msra.mxu0 0.0
      %2488 = vmatpush.msra.mxu0 0.0
      %2489 = vmatpush.msra.mxu0 0.0
      %2490 = vmatpush.msra.mxu0 0.0
      %2491 = vmatpush.msra.mxu0 0.0
      %2492 = vmatpush.msra.mxu0 0.0
      %2493 = vmatpush.msra.mxu0 0.0
      %2494 = vmatpush.msra.mxu0 0.0
      %2495 = vmatpush.msra.mxu0 0.0
      %2496 = vmatpush.msra.mxu0 0.0
      %2497 = vmatpush.msra.mxu0 0.0
      %2498 = vmatpush.msra.mxu0 %v2461
      %2499 = vmatmul.f32.gmra.mxu0 %v2455
      %v2500 = vpop.f32.mrf.mxu0
      %v2501 = vadd.f32 0.0, %v2500
      %2502 = vdwg.mxu0
      %v2503 = vadd.f32 %v2431, %v2481
      %v2504 = vadd.f32 %v2451, %v2501
      %v2505 = vsel %vm529, %v2503, 0.0
      %v2506 = vsel %vm529, %v2504, 0.0
      %v2507 = vadd.f32 %v2505, %v2506
      %2508 = vadd.xlane.f32.xlu0 %v2507
      %v2509 = vpop.xlane.xlu0 %2508
      %v2510 = vmul.f32 %v2509, %v386
      %v2511 = vmul.f32 %v2503, %v2503
      %v2512 = vmul.f32 %v2504, %v2504
      %v2513 = vsel %vm529, %v2511, 0.0
      %v2514 = vsel %vm529, %v2512, 0.0
      %v2515 = vadd.f32 %v2513, %v2514
      %2516 = vadd.xlane.f32.xlu0 %v2515
      %v2517 = vpop.xlane.xlu0 %2516
      %v2518 = vmul.f32 %v2517, %v386
      %v2519 = vsub.f32 %v2503, %v2510
      %v2520 = vsub.f32 %v2504, %v2510
      %v2521 = vmul.f32 %v2510, %v2510
      %v2522 = vsub.f32 %v2518, %v2521
      %v2523 = vadd.f32 %v2522, 1e-05
      %v2524 = vrsqrt.pop %v2523
      %v2525 = vmul.f32 %v2524, %v2523
      %v2526 = vmul.f32 %v2525, %v2524
      %v2527 = vmul.f32 0.5, %v2526
      %v2528 = vsub.f32 1.5, %v2527
      %v2529 = vmul.f32 %v2524, %v2528
      %vm2530 = vweird.f32 %v2523
      %vm2531 = vweird.f32 %v2524
      %vm2532 = vmor %vm2530, %vm2531
      %v2533 = vsel %vm2532, %v2524, %v2529
      %v2534 = vmul.f32 %v2519, %v2533
      %v2535 = vmul.f32 %v2520, %v2533
      %v2536 = vmax.f32 %v2534, 0.0
      %v2537 = vmax.f32 %v2535, 0.0
      %v2540 = vrot.slane %v2536, 4
      %v2541 = vrot.slane %v2537, 4
      %2544 = vst [vmem:[#allocation2] sm:$0x30] %v2540
      %2545 = vst [vmem:[#allocation2 + $0x8] sm:$0x30] %v2541
      %v2546 = vrot.slane %v2536, 2
      %v2547 = vrot.slane %v2537, 2
      %v2550 = vadd.f32 %v2064, %v2546
      %v2551 = vadd.f32 %v2087, %v2547
      %v2554 = vrot.slane %v2550, 6
      %v2555 = vrot.slane %v2551, 6
      %2558 = vrot.lane.b32.xlu0 %v2554, 16
      %v2559 = vpop.permute.xlu0 %2558
      %2560 = vrot.lane.b32.xlu0 %v2555, 16
      %v2561 = vpop.permute.xlu0 %2560
      %v2562 = vsel %vm2108, %v2559, %v2561
      %v2563 = vsel %vm2108, %v2561, %v2559
      %v2564 = vmul.f32 %v2563, %v2112
      %v2565 = vmul.f32 %v2562, %v2113
      %2566 = vrot.lane.b32.xlu0 %v2554, 112
      %v2567 = vpop.permute.xlu0 %2566
      %2568 = vrot.lane.b32.xlu0 %v2555, 112
      %v2569 = vpop.permute.xlu0 %2568
      %v2570 = vsel %vm2122, %v2567, %v2569
      %v2571 = vsel %vm2122, %v2569, %v2567
      %v2572 = vmul.f32 %v2570, %v2126
      %v2573 = vmul.f32 %v2571, %v2127
      %v2574 = vld [vmem:[%s4] sm:$0x3]
      %2576 = vrot.lane.b32.xlu0 %v2574, 84
      %v2577 = vpop.permute.xlu0 %2576
      %v2578 = vsel %vm526, %v2577, 0
      %v2580 = vsel %vm529, %v2554, 0
      %v2582 = vsel %vm529, %v2555, 0
      %2584 = vmatpush.msra.mxu0 0.0
      %2585 = vmatpush.msra.mxu0 0.0
      %2586 = vmatpush.msra.mxu0 0.0
      %2587 = vmatpush.msra.mxu0 0.0
      %2588 = vmatpush.msra.mxu0 0.0
      %2589 = vmatpush.msra.mxu0 0.0
      %2590 = vmatpush.msra.mxu0 0.0
      %2591 = vmatpush.msra.mxu0 0.0
      %2592 = vmatpush.msra.mxu0 0.0
      %2593 = vmatpush.msra.mxu0 0.0
      %2594 = vmatpush.msra.mxu0 0.0
      %2595 = vmatpush.msra.mxu0 0.0
      %2596 = vmatpush.msra.mxu0 0.0
      %2597 = vmatpush.msra.mxu0 0.0
      %2598 = vmatpush.msra.mxu0 0.0
      %2599 = vmatpush.msra.mxu0 %v2580
      %2600 = vmatmul.f32.gmra.mxu0 %v2578
      %v2601 = vpop.f32.mrf.mxu0
      %v2602 = vadd.f32 0.0, %v2601
      %2603 = vdwg.mxu0
      %2604 = vmatpush.msra.mxu0 0.0
      %2605 = vmatpush.msra.mxu0 0.0
      %2606 = vmatpush.msra.mxu0 0.0
      %2607 = vmatpush.msra.mxu0 0.0
      %2608 = vmatpush.msra.mxu0 0.0
      %2609 = vmatpush.msra.mxu0 0.0
      %2610 = vmatpush.msra.mxu0 0.0
      %2611 = vmatpush.msra.mxu0 0.0
      %2612 = vmatpush.msra.mxu0 0.0
      %2613 = vmatpush.msra.mxu0 0.0
      %2614 = vmatpush.msra.mxu0 0.0
      %2615 = vmatpush.msra.mxu0 0.0
      %2616 = vmatpush.msra.mxu0 0.0
      %2617 = vmatpush.msra.mxu0 0.0
      %2618 = vmatpush.msra.mxu0 0.0
      %2619 = vmatpush.msra.mxu0 %v2582
      %2620 = vmatmul.f32.gmra.mxu0 %v2578
      %v2621 = vpop.f32.mrf.mxu0
      %v2622 = vadd.f32 0.0, %v2621
      %2623 = vdwg.mxu0
      %2624 = vrot.lane.b32.xlu0 %v2574, 86
      %v2625 = vpop.permute.xlu0 %2624
      %v2626 = vsel %vm526, %v2625, 0
      %v2629 = vsel %vm529, %v2564, 0
      %v2632 = vsel %vm529, %v2565, 0
      %2634 = vmatpush.msra.mxu0 0.0
      %2635 = vmatpush.msra.mxu0 0.0
      %2636 = vmatpush.msra.mxu0 0.0
      %2637 = vmatpush.msra.mxu0 0.0
      %2638 = vmatpush.msra.mxu0 0.0
      %2639 = vmatpush.msra.mxu0 0.0
      %2640 = vmatpush.msra.mxu0 0.0
      %2641 = vmatpush.msra.mxu0 0.0
      %2642 = vmatpush.msra.mxu0 0.0
      %2643 = vmatpush.msra.mxu0 0.0
      %2644 = vmatpush.msra.mxu0 0.0
      %2645 = vmatpush.msra.mxu0 0.0
      %2646 = vmatpush.msra.mxu0 0.0
      %2647 = vmatpush.msra.mxu0 0.0
      %2648 = vmatpush.msra.mxu0 0.0
      %2649 = vmatpush.msra.mxu0 %v2629
      %2650 = vmatmul.f32.gmra.mxu0 %v2626
      %v2651 = vpop.f32.mrf.mxu0
      %v2652 = vadd.f32 %v2602, %v2651
      %2653 = vdwg.mxu0
      %2654 = vmatpush.msra.mxu0 0.0
      %2655 = vmatpush.msra.mxu0 0.0
      %2656 = vmatpush.msra.mxu0 0.0
      %2657 = vmatpush.msra.mxu0 0.0
      %2658 = vmatpush.msra.mxu0 0.0
      %2659 = vmatpush.msra.mxu0 0.0
      %2660 = vmatpush.msra.mxu0 0.0
      %2661 = vmatpush.msra.mxu0 0.0
      %2662 = vmatpush.msra.mxu0 0.0
      %2663 = vmatpush.msra.mxu0 0.0
      %2664 = vmatpush.msra.mxu0 0.0
      %2665 = vmatpush.msra.mxu0 0.0
      %2666 = vmatpush.msra.mxu0 0.0
      %2667 = vmatpush.msra.mxu0 0.0
      %2668 = vmatpush.msra.mxu0 0.0
      %2669 = vmatpush.msra.mxu0 %v2632
      %2670 = vmatmul.f32.gmra.mxu0 %v2626
      %v2671 = vpop.f32.mrf.mxu0
      %v2672 = vadd.f32 %v2622, %v2671
      %2673 = vdwg.mxu0
      %2674 = vrot.lane.b32.xlu0 %v2574, 82
      %v2675 = vpop.permute.xlu0 %2674
      %v2676 = vsel %vm526, %v2675, 0
      %v2679 = vsel %vm529, %v2572, 0
      %v2682 = vsel %vm529, %v2573, 0
      %2684 = vmatpush.msra.mxu0 0.0
      %2685 = vmatpush.msra.mxu0 0.0
      %2686 = vmatpush.msra.mxu0 0.0
      %2687 = vmatpush.msra.mxu0 0.0
      %2688 = vmatpush.msra.mxu0 0.0
      %2689 = vmatpush.msra.mxu0 0.0
      %2690 = vmatpush.msra.mxu0 0.0
      %2691 = vmatpush.msra.mxu0 0.0
      %2692 = vmatpush.msra.mxu0 0.0
      %2693 = vmatpush.msra.mxu0 0.0
      %2694 = vmatpush.msra.mxu0 0.0
      %2695 = vmatpush.msra.mxu0 0.0
      %2696 = vmatpush.msra.mxu0 0.0
      %2697 = vmatpush.msra.mxu0 0.0
      %2698 = vmatpush.msra.mxu0 0.0
      %2699 = vmatpush.msra.mxu0 %v2679
      %2700 = vmatmul.f32.gmra.mxu0 %v2676
      %v2701 = vpop.f32.mrf.mxu0
      %v2702 = vadd.f32 0.0, %v2701
      %2703 = vdwg.mxu0
      %2704 = vmatpush.msra.mxu0 0.0
      %2705 = vmatpush.msra.mxu0 0.0
      %2706 = vmatpush.msra.mxu0 0.0
      %2707 = vmatpush.msra.mxu0 0.0
      %2708 = vmatpush.msra.mxu0 0.0
      %2709 = vmatpush.msra.mxu0 0.0
      %2710 = vmatpush.msra.mxu0 0.0
      %2711 = vmatpush.msra.mxu0 0.0
      %2712 = vmatpush.msra.mxu0 0.0
      %2713 = vmatpush.msra.mxu0 0.0
      %2714 = vmatpush.msra.mxu0 0.0
      %2715 = vmatpush.msra.mxu0 0.0
      %2716 = vmatpush.msra.mxu0 0.0
      %2717 = vmatpush.msra.mxu0 0.0
      %2718 = vmatpush.msra.mxu0 0.0
      %2719 = vmatpush.msra.mxu0 %v2682
      %2720 = vmatmul.f32.gmra.mxu0 %v2676
      %v2721 = vpop.f32.mrf.mxu0
      %v2722 = vadd.f32 0.0, %v2721
      %2723 = vdwg.mxu0
      %v2724 = vadd.f32 %v2652, %v2702
      %v2725 = vadd.f32 %v2672, %v2722
      %v2726 = vsel %vm529, %v2724, 0.0
      %v2727 = vsel %vm529, %v2725, 0.0
      %v2728 = vadd.f32 %v2726, %v2727
      %2729 = vadd.xlane.f32.xlu0 %v2728
      %v2730 = vpop.xlane.xlu0 %2729
      %v2731 = vmul.f32 %v2730, %v386
      %v2732 = vmul.f32 %v2724, %v2724
      %v2733 = vmul.f32 %v2725, %v2725
      %v2734 = vsel %vm529, %v2732, 0.0
      %v2735 = vsel %vm529, %v2733, 0.0
      %v2736 = vadd.f32 %v2734, %v2735
      %2737 = vadd.xlane.f32.xlu0 %v2736
      %v2738 = vpop.xlane.xlu0 %2737
      %v2739 = vmul.f32 %v2738, %v386
      %v2740 = vsub.f32 %v2724, %v2731
      %v2741 = vsub.f32 %v2725, %v2731
      %v2742 = vmul.f32 %v2731, %v2731
      %v2743 = vsub.f32 %v2739, %v2742
      %v2744 = vadd.f32 %v2743, 1e-05
      %v2745 = vrsqrt.pop %v2744
      %v2746 = vmul.f32 %v2745, %v2744
      %v2747 = vmul.f32 %v2746, %v2745
      %v2748 = vmul.f32 0.5, %v2747
      %v2749 = vsub.f32 1.5, %v2748
      %v2750 = vmul.f32 %v2745, %v2749
      %vm2751 = vweird.f32 %v2744
      %vm2752 = vweird.f32 %v2745
      %vm2753 = vmor %vm2751, %vm2752
      %v2754 = vsel %vm2753, %v2745, %v2750
      %v2755 = vmul.f32 %v2740, %v2754
      %v2756 = vmul.f32 %v2741, %v2754
      %v2757 = vmax.f32 %v2755, 0.0
      %v2758 = vmax.f32 %v2756, 0.0
      %v2761 = vrot.slane %v2757, 2
      %v2762 = vrot.slane %v2758, 2
      %2765 = vst [vmem:[#allocation2] sm:$0xc0] %v2761
      %2766 = vst [vmem:[#allocation2 + $0x8] sm:$0xc0] %v2762
      %v2767 = vadd.f32 %v2067, %v2757
      %v2768 = vadd.f32 %v2090, %v2758
      %2769 = vrot.lane.b32.xlu0 %v2767, 16
      %v2770 = vpop.permute.xlu0 %2769
      %2771 = vrot.lane.b32.xlu0 %v2768, 16
      %v2772 = vpop.permute.xlu0 %2771
      %v2773 = vsel %vm2108, %v2770, %v2772
      %v2774 = vsel %vm2108, %v2772, %v2770
      %v2775 = vmul.f32 %v2774, %v2112
      %v2776 = vmul.f32 %v2773, %v2113
      %2777 = vrot.lane.b32.xlu0 %v2767, 112
      %v2778 = vpop.permute.xlu0 %2777
      %2779 = vrot.lane.b32.xlu0 %v2768, 112
      %v2780 = vpop.permute.xlu0 %2779
      %v2781 = vsel %vm2122, %v2778, %v2780
      %v2782 = vsel %vm2122, %v2780, %v2778
      %v2783 = vmul.f32 %v2781, %v2126
      %v2784 = vmul.f32 %v2782, %v2127
      %v2785 = vld [vmem:[%s4] sm:$0x3]
      %2787 = vrot.lane.b32.xlu0 %v2785, 78
      %v2788 = vpop.permute.xlu0 %2787
      %v2789 = vsel %vm526, %v2788, 0
      %v2792 = vsel %vm529, %v2767, 0
      %v2795 = vsel %vm529, %v2768, 0
      %2797 = vmatpush.msra.mxu0 0.0
      %2798 = vmatpush.msra.mxu0 0.0
      %2799 = vmatpush.msra.mxu0 0.0
      %2800 = vmatpush.msra.mxu0 0.0
      %2801 = vmatpush.msra.mxu0 0.0
      %2802 = vmatpush.msra.mxu0 0.0
      %2803 = vmatpush.msra.mxu0 0.0
      %2804 = vmatpush.msra.mxu0 0.0
      %2805 = vmatpush.msra.mxu0 0.0
      %2806 = vmatpush.msra.mxu0 0.0
      %2807 = vmatpush.msra.mxu0 0.0
      %2808 = vmatpush.msra.mxu0 0.0
      %2809 = vmatpush.msra.mxu0 0.0
      %2810 = vmatpush.msra.mxu0 0.0
      %2811 = vmatpush.msra.mxu0 0.0
      %2812 = vmatpush.msra.mxu0 %v2792
      %2813 = vmatmul.f32.gmra.mxu0 %v2789
      %v2814 = vpop.f32.mrf.mxu0
      %v2815 = vadd.f32 0.0, %v2814
      %2816 = vdwg.mxu0
      %2817 = vmatpush.msra.mxu0 0.0
      %2818 = vmatpush.msra.mxu0 0.0
      %2819 = vmatpush.msra.mxu0 0.0
      %2820 = vmatpush.msra.mxu0 0.0
      %2821 = vmatpush.msra.mxu0 0.0
      %2822 = vmatpush.msra.mxu0 0.0
      %2823 = vmatpush.msra.mxu0 0.0
      %2824 = vmatpush.msra.mxu0 0.0
      %2825 = vmatpush.msra.mxu0 0.0
      %2826 = vmatpush.msra.mxu0 0.0
      %2827 = vmatpush.msra.mxu0 0.0
      %2828 = vmatpush.msra.mxu0 0.0
      %2829 = vmatpush.msra.mxu0 0.0
      %2830 = vmatpush.msra.mxu0 0.0
      %2831 = vmatpush.msra.mxu0 0.0
      %2832 = vmatpush.msra.mxu0 %v2795
      %2833 = vmatmul.f32.gmra.mxu0 %v2789
      %v2834 = vpop.f32.mrf.mxu0
      %v2835 = vadd.f32 0.0, %v2834
      %2836 = vdwg.mxu0
      %2837 = vrot.lane.b32.xlu0 %v2785, 80
      %v2838 = vpop.permute.xlu0 %2837
      %v2839 = vsel %vm526, %v2838, 0
      %v2842 = vsel %vm529, %v2775, 0
      %v2845 = vsel %vm529, %v2776, 0
      %2847 = vmatpush.msra.mxu0 0.0
      %2848 = vmatpush.msra.mxu0 0.0
      %2849 = vmatpush.msra.mxu0 0.0
      %2850 = vmatpush.msra.mxu0 0.0
      %2851 = vmatpush.msra.mxu0 0.0
      %2852 = vmatpush.msra.mxu0 0.0
      %2853 = vmatpush.msra.mxu0 0.0
      %2854 = vmatpush.msra.mxu0 0.0
      %2855 = vmatpush.msra.mxu0 0.0
      %2856 = vmatpush.msra.mxu0 0.0
      %2857 = vmatpush.msra.mxu0 0.0
      %2858 = vmatpush.msra.mxu0 0.0
      %2859 = vmatpush.msra.mxu0 0.0
      %2860 = vmatpush.msra.mxu0 0.0
      %2861 = vmatpush.msra.mxu0 0.0
      %2862 = vmatpush.msra.mxu0 %v2842
      %2863 = vmatmul.f32.gmra.mxu0 %v2839
      %v2864 = vpop.f32.mrf.mxu0
      %v2865 = vadd.f32 %v2815, %v2864
      %2866 = vdwg.mxu0
      %2867 = vmatpush.msra.mxu0 0.0
      %2868 = vmatpush.msra.mxu0 0.0
      %2869 = vmatpush.msra.mxu0 0.0
      %2870 = vmatpush.msra.mxu0 0.0
      %2871 = vmatpush.msra.mxu0 0.0
      %2872 = vmatpush.msra.mxu0 0.0
      %2873 = vmatpush.msra.mxu0 0.0
      %2874 = vmatpush.msra.mxu0 0.0
      %2875 = vmatpush.msra.mxu0 0.0
      %2876 = vmatpush.msra.mxu0 0.0
      %2877 = vmatpush.msra.mxu0 0.0
      %2878 = vmatpush.msra.mxu0 0.0
      %2879 = vmatpush.msra.mxu0 0.0
      %2880 = vmatpush.msra.mxu0 0.0
      %2881 = vmatpush.msra.mxu0 0.0
      %2882 = vmatpush.msra.mxu0 %v2845
      %2883 = vmatmul.f32.gmra.mxu0 %v2839
      %v2884 = vpop.f32.mrf.mxu0
      %v2885 = vadd.f32 %v2835, %v2884
      %2886 = vdwg.mxu0
      %2887 = vrot.lane.b32.xlu0 %v2785, 76
      %v2888 = vpop.permute.xlu0 %2887
      %v2889 = vsel %vm526, %v2888, 0
      %v2892 = vsel %vm529, %v2783, 0
      %v2895 = vsel %vm529, %v2784, 0
      %2897 = vmatpush.msra.mxu0 0.0
      %2898 = vmatpush.msra.mxu0 0.0
      %2899 = vmatpush.msra.mxu0 0.0
      %2900 = vmatpush.msra.mxu0 0.0
      %2901 = vmatpush.msra.mxu0 0.0
      %2902 = vmatpush.msra.mxu0 0.0
      %2903 = vmatpush.msra.mxu0 0.0
      %2904 = vmatpush.msra.mxu0 0.0
      %2905 = vmatpush.msra.mxu0 0.0
      %2906 = vmatpush.msra.mxu0 0.0
      %2907 = vmatpush.msra.mxu0 0.0
      %2908 = vmatpush.msra.mxu0 0.0
      %2909 = vmatpush.msra.mxu0 0.0
      %2910 = vmatpush.msra.mxu0 0.0
      %2911 = vmatpush.msra.mxu0 0.0
      %2912 = vmatpush.msra.mxu0 %v2892
      %2913 = vmatmul.f32.gmra.mxu0 %v2889
      %v2914 = vpop.f32.mrf.mxu0
      %v2915 = vadd.f32 0.0, %v2914
      %2916 = vdwg.mxu0
      %2917 = vmatpush.msra.mxu0 0.0
      %2918 = vmatpush.msra.mxu0 0.0
      %2919 = vmatpush.msra.mxu0 0.0
      %2920 = vmatpush.msra.mxu0 0.0
      %2921 = vmatpush.msra.mxu0 0.0
      %2922 = vmatpush.msra.mxu0 0.0
      %2923 = vmatpush.msra.mxu0 0.0
      %2924 = vmatpush.msra.mxu0 0.0
      %2925 = vmatpush.msra.mxu0 0.0
      %2926 = vmatpush.msra.mxu0 0.0
      %2927 = vmatpush.msra.mxu0 0.0
      %2928 = vmatpush.msra.mxu0 0.0
      %2929 = vmatpush.msra.mxu0 0.0
      %2930 = vmatpush.msra.mxu0 0.0
      %2931 = vmatpush.msra.mxu0 0.0
      %2932 = vmatpush.msra.mxu0 %v2895
      %2933 = vmatmul.f32.gmra.mxu0 %v2889
      %v2934 = vpop.f32.mrf.mxu0
      %v2935 = vadd.f32 0.0, %v2934
      %2936 = vdwg.mxu0
      %v2937 = vadd.f32 %v2865, %v2915
      %v2938 = vadd.f32 %v2885, %v2935
      %v2939 = vsel %vm529, %v2937, 0.0
      %v2940 = vsel %vm529, %v2938, 0.0
      %v2941 = vadd.f32 %v2939, %v2940
      %2942 = vadd.xlane.f32.xlu0 %v2941
      %v2943 = vpop.xlane.xlu0 %2942
      %v2944 = vmul.f32 %v2943, %v386
      %v2945 = vmul.f32 %v2937, %v2937
      %v2946 = vmul.f32 %v2938, %v2938
      %v2947 = vsel %vm529, %v2945, 0.0
      %v2948 = vsel %vm529, %v2946, 0.0
      %v2949 = vadd.f32 %v2947, %v2948
      %2950 = vadd.xlane.f32.xlu0 %v2949
      %v2951 = vpop.xlane.xlu0 %2950
      %v2952 = vmul.f32 %v2951, %v386
      %v2953 = vsub.f32 %v2937, %v2944
      %v2954 = vsub.f32 %v2938, %v2944
      %v2955 = vmul.f32 %v2944, %v2944
      %v2956 = vsub.f32 %v2952, %v2955
      %v2957 = vadd.f32 %v2956, 1e-05
      %v2958 = vrsqrt.pop %v2957
      %v2959 = vmul.f32 %v2958, %v2957
      %v2960 = vmul.f32 %v2959, %v2958
      %v2961 = vmul.f32 0.5, %v2960
      %v2962 = vsub.f32 1.5, %v2961
      %v2963 = vmul.f32 %v2958, %v2962
      %vm2964 = vweird.f32 %v2957
      %vm2965 = vweird.f32 %v2958
      %vm2966 = vmor %vm2964, %vm2965
      %v2967 = vsel %vm2966, %v2958, %v2963
      %v2968 = vmul.f32 %v2953, %v2967
      %v2969 = vmul.f32 %v2954, %v2967
      %v2970 = vmax.f32 %v2968, 0.0
      %v2971 = vmax.f32 %v2969, 0.0
      %2972 = vst [vmem:[#allocation2 + $0x10] sm:$0x3] %v2970
      %2973 = vst [vmem:[#allocation2 + $0x18] sm:$0x3] %v2971
      %v2976 = vrot.slane %v2970, 6
      %v2977 = vrot.slane %v2971, 6
      %v2980 = vadd.f32 %v2067, %v2976
      %v2981 = vadd.f32 %v2090, %v2977
      %v2984 = vrot.slane %v2980, 2
      %v2985 = vrot.slane %v2981, 2
      %2988 = vrot.lane.b32.xlu0 %v2984, 16
      %v2989 = vpop.permute.xlu0 %2988
      %2990 = vrot.lane.b32.xlu0 %v2985, 16
      %v2991 = vpop.permute.xlu0 %2990
      %v2992 = vsel %vm2108, %v2989, %v2991
      %v2993 = vsel %vm2108, %v2991, %v2989
      %v2994 = vmul.f32 %v2993, %v2112
      %v2995 = vmul.f32 %v2992, %v2113
      %2996 = vrot.lane.b32.xlu0 %v2984, 112
      %v2997 = vpop.permute.xlu0 %2996
      %2998 = vrot.lane.b32.xlu0 %v2985, 112
      %v2999 = vpop.permute.xlu0 %2998
      %v3000 = vsel %vm2122, %v2997, %v2999
      %v3001 = vsel %vm2122, %v2999, %v2997
      %v3002 = vmul.f32 %v3000, %v2126
      %v3003 = vmul.f32 %v3001, %v2127
      %v3004 = vld [vmem:[%s4] sm:$0x3]
      %3006 = vrot.lane.b32.xlu0 %v3004, 72
      %v3007 = vpop.permute.xlu0 %3006
      %v3008 = vsel %vm526, %v3007, 0
      %v3010 = vsel %vm529, %v2984, 0
      %v3012 = vsel %vm529, %v2985, 0
      %3014 = vmatpush.msra.mxu0 0.0
      %3015 = vmatpush.msra.mxu0 0.0
      %3016 = vmatpush.msra.mxu0 0.0
      %3017 = vmatpush.msra.mxu0 0.0
      %3018 = vmatpush.msra.mxu0 0.0
      %3019 = vmatpush.msra.mxu0 0.0
      %3020 = vmatpush.msra.mxu0 0.0
      %3021 = vmatpush.msra.mxu0 0.0
      %3022 = vmatpush.msra.mxu0 0.0
      %3023 = vmatpush.msra.mxu0 0.0
      %3024 = vmatpush.msra.mxu0 0.0
      %3025 = vmatpush.msra.mxu0 0.0
      %3026 = vmatpush.msra.mxu0 0.0
      %3027 = vmatpush.msra.mxu0 0.0
      %3028 = vmatpush.msra.mxu0 0.0
      %3029 = vmatpush.msra.mxu0 %v3010
      %3030 = vmatmul.f32.gmra.mxu0 %v3008
      %v3031 = vpop.f32.mrf.mxu0
      %v3032 = vadd.f32 0.0, %v3031
      %3033 = vdwg.mxu0
      %3034 = vmatpush.msra.mxu0 0.0
      %3035 = vmatpush.msra.mxu0 0.0
      %3036 = vmatpush.msra.mxu0 0.0
      %3037 = vmatpush.msra.mxu0 0.0
      %3038 = vmatpush.msra.mxu0 0.0
      %3039 = vmatpush.msra.mxu0 0.0
      %3040 = vmatpush.msra.mxu0 0.0
      %3041 = vmatpush.msra.mxu0 0.0
      %3042 = vmatpush.msra.mxu0 0.0
      %3043 = vmatpush.msra.mxu0 0.0
      %3044 = vmatpush.msra.mxu0 0.0
      %3045 = vmatpush.msra.mxu0 0.0
      %3046 = vmatpush.msra.mxu0 0.0
      %3047 = vmatpush.msra.mxu0 0.0
      %3048 = vmatpush.msra.mxu0 0.0
      %3049 = vmatpush.msra.mxu0 %v3012
      %3050 = vmatmul.f32.gmra.mxu0 %v3008
      %v3051 = vpop.f32.mrf.mxu0
      %v3052 = vadd.f32 0.0, %v3051
      %3053 = vdwg.mxu0
      %3054 = vrot.lane.b32.xlu0 %v3004, 74
      %v3055 = vpop.permute.xlu0 %3054
      %v3056 = vsel %vm526, %v3055, 0
      %v3059 = vsel %vm529, %v2994, 0
      %v3062 = vsel %vm529, %v2995, 0
      %3064 = vmatpush.msra.mxu0 0.0
      %3065 = vmatpush.msra.mxu0 0.0
      %3066 = vmatpush.msra.mxu0 0.0
      %3067 = vmatpush.msra.mxu0 0.0
      %3068 = vmatpush.msra.mxu0 0.0
      %3069 = vmatpush.msra.mxu0 0.0
      %3070 = vmatpush.msra.mxu0 0.0
      %3071 = vmatpush.msra.mxu0 0.0
      %3072 = vmatpush.msra.mxu0 0.0
      %3073 = vmatpush.msra.mxu0 0.0
      %3074 = vmatpush.msra.mxu0 0.0
      %3075 = vmatpush.msra.mxu0 0.0
      %3076 = vmatpush.msra.mxu0 0.0
      %3077 = vmatpush.msra.mxu0 0.0
      %3078 = vmatpush.msra.mxu0 0.0
      %3079 = vmatpush.msra.mxu0 %v3059
      %3080 = vmatmul.f32.gmra.mxu0 %v3056
      %v3081 = vpop.f32.mrf.mxu0
      %v3082 = vadd.f32 %v3032, %v3081
      %3083 = vdwg.mxu0
      %3084 = vmatpush.msra.mxu0 0.0
      %3085 = vmatpush.msra.mxu0 0.0
      %3086 = vmatpush.msra.mxu0 0.0
      %3087 = vmatpush.msra.mxu0 0.0
      %3088 = vmatpush.msra.mxu0 0.0
      %3089 = vmatpush.msra.mxu0 0.0
      %3090 = vmatpush.msra.mxu0 0.0
      %3091 = vmatpush.msra.mxu0 0.0
      %3092 = vmatpush.msra.mxu0 0.0
      %3093 = vmatpush.msra.mxu0 0.0
      %3094 = vmatpush.msra.mxu0 0.0
      %3095 = vmatpush.msra.mxu0 0.0
      %3096 = vmatpush.msra.mxu0 0.0
      %3097 = vmatpush.msra.mxu0 0.0
      %3098 = vmatpush.msra.mxu0 0.0
      %3099 = vmatpush.msra.mxu0 %v3062
      %3100 = vmatmul.f32.gmra.mxu0 %v3056
      %v3101 = vpop.f32.mrf.mxu0
      %v3102 = vadd.f32 %v3052, %v3101
      %3103 = vdwg.mxu0
      %3104 = vrot.lane.b32.xlu0 %v3004, 70
      %v3105 = vpop.permute.xlu0 %3104
      %v3106 = vsel %vm526, %v3105, 0
      %v3109 = vsel %vm529, %v3002, 0
      %v3112 = vsel %vm529, %v3003, 0
      %3114 = vmatpush.msra.mxu0 0.0
      %3115 = vmatpush.msra.mxu0 0.0
      %3116 = vmatpush.msra.mxu0 0.0
      %3117 = vmatpush.msra.mxu0 0.0
      %3118 = vmatpush.msra.mxu0 0.0
      %3119 = vmatpush.msra.mxu0 0.0
      %3120 = vmatpush.msra.mxu0 0.0
      %3121 = vmatpush.msra.mxu0 0.0
      %3122 = vmatpush.msra.mxu0 0.0
      %3123 = vmatpush.msra.mxu0 0.0
      %3124 = vmatpush.msra.mxu0 0.0
      %3125 = vmatpush.msra.mxu0 0.0
      %3126 = vmatpush.msra.mxu0 0.0
      %3127 = vmatpush.msra.mxu0 0.0
      %3128 = vmatpush.msra.mxu0 0.0
      %3129 = vmatpush.msra.mxu0 %v3109
      %3130 = vmatmul.f32.gmra.mxu0 %v3106
      %v3131 = vpop.f32.mrf.mxu0
      %v3132 = vadd.f32 0.0, %v3131
      %3133 = vdwg.mxu0
      %3134 = vmatpush.msra.mxu0 0.0
      %3135 = vmatpush.msra.mxu0 0.0
      %3136 = vmatpush.msra.mxu0 0.0
      %3137 = vmatpush.msra.mxu0 0.0
      %3138 = vmatpush.msra.mxu0 0.0
      %3139 = vmatpush.msra.mxu0 0.0
      %3140 = vmatpush.msra.mxu0 0.0
      %3141 = vmatpush.msra.mxu0 0.0
      %3142 = vmatpush.msra.mxu0 0.0
      %3143 = vmatpush.msra.mxu0 0.0
      %3144 = vmatpush.msra.mxu0 0.0
      %3145 = vmatpush.msra.mxu0 0.0
      %3146 = vmatpush.msra.mxu0 0.0
      %3147 = vmatpush.msra.mxu0 0.0
      %3148 = vmatpush.msra.mxu0 0.0
      %3149 = vmatpush.msra.mxu0 %v3112
      %3150 = vmatmul.f32.gmra.mxu0 %v3106
      %v3151 = vpop.f32.mrf.mxu0
      %v3152 = vadd.f32 0.0, %v3151
      %3153 = vdwg.mxu0
      %v3154 = vadd.f32 %v3082, %v3132
      %v3155 = vadd.f32 %v3102, %v3152
      %v3156 = vsel %vm529, %v3154, 0.0
      %v3157 = vsel %vm529, %v3155, 0.0
      %v3158 = vadd.f32 %v3156, %v3157
      %3159 = vadd.xlane.f32.xlu0 %v3158
      %v3160 = vpop.xlane.xlu0 %3159
      %v3161 = vmul.f32 %v3160, %v386
      %v3162 = vmul.f32 %v3154, %v3154
      %v3163 = vmul.f32 %v3155, %v3155
      %v3164 = vsel %vm529, %v3162, 0.0
      %v3165 = vsel %vm529, %v3163, 0.0
      %v3166 = vadd.f32 %v3164, %v3165
      %3167 = vadd.xlane.f32.xlu0 %v3166
      %v3168 = vpop.xlane.xlu0 %3167
      %v3169 = vmul.f32 %v3168, %v386
      %v3170 = vsub.f32 %v3154, %v3161
      %v3171 = vsub.f32 %v3155, %v3161
      %v3172 = vmul.f32 %v3161, %v3161
      %v3173 = vsub.f32 %v3169, %v3172
      %v3174 = vadd.f32 %v3173, 1e-05
      %v3175 = vrsqrt.pop %v3174
      %v3176 = vmul.f32 %v3175, %v3174
      %v3177 = vmul.f32 %v3176, %v3175
      %v3178 = vmul.f32 0.5, %v3177
      %v3179 = vsub.f32 1.5, %v3178
      %v3180 = vmul.f32 %v3175, %v3179
      %vm3181 = vweird.f32 %v3174
      %vm3182 = vweird.f32 %v3175
      %vm3183 = vmor %vm3181, %vm3182
      %v3184 = vsel %vm3183, %v3175, %v3180
      %v3185 = vmul.f32 %v3170, %v3184
      %v3186 = vmul.f32 %v3171, %v3184
      %v3187 = vmax.f32 %v3185, 0.0
      %v3188 = vmax.f32 %v3186, 0.0
      %v3191 = vrot.slane %v3187, 6
      %v3192 = vrot.slane %v3188, 6
      %3195 = vst [vmem:[#allocation2 + $0x10] sm:$0xc] %v3191
      %3196 = vst [vmem:[#allocation2 + $0x18] sm:$0xc] %v3192
      %v3197 = vld [vmem:[#allocation2] sm:$0xff]
      %v3198 = vld [vmem:[#allocation2 + $0x8] sm:$0xff]
      %v3199 = vld [vmem:[#allocation2 + $0x10] sm:$0xf]
      %v3200 = vld [vmem:[#allocation2 + $0x18] sm:$0xf]
      %v3201 = vld [vmem:[%s3] sm:$0xff]
      %v3202 = vld [vmem:[%s3 + $0x8] sm:$0xff]
      %v3203 = vld [vmem:[%s1] sm:$0xff]
      %v3204 = vld [vmem:[%s1 + $0x8] sm:$0xf]
      %v3205 = vld [vmem:[%s2] sm:$0xff]
      %v3206 = vld [vmem:[%s2 + $0x8] sm:$0xf]
      %3207 = vmatpush.msra.mxu0 %v464
      %3208 = vmatpush.msra.mxu0 %v463
      %3209 = vmatpush.msra.mxu0 %v462
      %3210 = vmatpush.msra.mxu0 %v461
      %3211 = vmatpush.msra.mxu0 %v460
      %3212 = vmatpush.msra.mxu0 %v459
      %3213 = vmatpush.msra.mxu0 %v458
      %3214 = vmatpush.msra.mxu0 %v457
      %3215 = vmatpush.msra.mxu0 %v456
      %3216 = vmatpush.msra.mxu0 %v455
      %3217 = vmatpush.msra.mxu0 %v454
      %3218 = vmatpush.msra.mxu0 %v453
      %3219 = vmatpush.msra.mxu0 %v452
      %3220 = vmatpush.msra.mxu0 %v451
      %3221 = vmatpush.msra.mxu0 %v450
      %3222 = vmatpush.msra.mxu0 %v449
      %3223 = vmatmul.f32.gmra.mxu0 %v3197
      %v3224 = vpop.f32.mrf.mxu0
      %v3225 = vadd.f32 0.0, %v3224
      %3226 = vmatmul.f32.gmra.mxu0 %v3199
      %v3227 = vpop.f32.mrf.mxu0
      %v3228 = vadd.f32 0.0, %v3227
      %3229 = vdwg.mxu0
      %3230 = vmatpush.msra.mxu0 %v480
      %3231 = vmatpush.msra.mxu0 %v479
      %3232 = vmatpush.msra.mxu0 %v478
      %3233 = vmatpush.msra.mxu0 %v477
      %3234 = vmatpush.msra.mxu0 %v476
      %3235 = vmatpush.msra.mxu0 %v475
      %3236 = vmatpush.msra.mxu0 %v474
      %3237 = vmatpush.msra.mxu0 %v473
      %3238 = vmatpush.msra.mxu0 %v472
      %3239 = vmatpush.msra.mxu0 %v471
      %3240 = vmatpush.msra.mxu0 %v470
      %3241 = vmatpush.msra.mxu0 %v469
      %3242 = vmatpush.msra.mxu0 %v468
      %3243 = vmatpush.msra.mxu0 %v467
      %3244 = vmatpush.msra.mxu0 %v466
      %3245 = vmatpush.msra.mxu0 %v465
      %3246 = vmatmul.f32.gmra.mxu0 %v3198
      %v3247 = vpop.f32.mrf.mxu0
      %v3248 = vadd.f32 %v3225, %v3247
      %3249 = vmatmul.f32.gmra.mxu0 %v3200
      %v3250 = vpop.f32.mrf.mxu0
      %v3251 = vadd.f32 %v3228, %v3250
      %3252 = vdwg.mxu0
      %3255 = vrot.lane.b32.xlu0 %v3201, 116
      %v3256 = vpop.permute.xlu0 %3255
      %3257 = vrot.lane.b32.xlu0 %v3202, 116
      %v3258 = vpop.permute.xlu0 %3257
      %v3259 = vsel %vm312, %v3256, 0
      %v3261 = vsel %vm312, %v3258, 0
      %v3264 = vsel %vm319, %v3251, 0
      %3266 = vmatpush.msra.mxu0 0.0
      %3267 = vmatpush.msra.mxu0 0.0
      %3268 = vmatpush.msra.mxu0 0.0
      %3269 = vmatpush.msra.mxu0 0.0
      %3270 = vmatpush.msra.mxu0 0.0
      %3271 = vmatpush.msra.mxu0 0.0
      %3272 = vmatpush.msra.mxu0 0.0
      %3273 = vmatpush.msra.mxu0 0.0
      %3274 = vmatpush.msra.mxu0 0.0
      %3275 = vmatpush.msra.mxu0 0.0
      %3276 = vmatpush.msra.mxu0 0.0
      %3277 = vmatpush.msra.mxu0 0.0
      %3278 = vmatpush.msra.mxu0 0.0
      %3279 = vmatpush.msra.mxu0 0.0
      %3280 = vmatpush.msra.mxu0 %v3264
      %3281 = vmatpush.msra.mxu0 %v3248
      %3282 = vmatmul.f32.gmra.mxu0 %v3259
      %v3283 = vpop.f32.mrf.mxu0
      %v3284 = vadd.f32 0.0, %v3283
      %3285 = vmatmul.f32.gmra.mxu0 %v3261
      %v3286 = vpop.f32.mrf.mxu0
      %v3287 = vadd.f32 0.0, %v3286
      %3288 = vdwg.mxu0
      %v3289 = vsel %vm1675, %v3284, 0.0
      %3290 = vadd.xlane.f32.xlu0 %v3289
      %v3291 = vpop.xlane.xlu0 %3290
      %v3292 = vsel %vm1675, %v3287, 0.0
      %3293 = vadd.xlane.f32.xlu0 %v3292
      %v3294 = vpop.xlane.xlu0 %3293
      %v3295 = vmul.f32 %v3291, %v1688
      %v3296 = vmul.f32 %v3294, %v1688
      %v3297 = vmul.f32 %v3284, %v3284
      %v3298 = vmul.f32 %v3287, %v3287
      %v3299 = vsel %vm1675, %v3297, 0.0
      %3300 = vadd.xlane.f32.xlu0 %v3299
      %v3301 = vpop.xlane.xlu0 %3300
      %v3302 = vsel %vm1675, %v3298, 0.0
      %3303 = vadd.xlane.f32.xlu0 %v3302
      %v3304 = vpop.xlane.xlu0 %3303
      %v3305 = vmul.f32 %v3301, %v1688
      %v3306 = vmul.f32 %v3304, %v1688
      %v3307 = vsub.f32 %v3284, %v3295
      %v3308 = vsub.f32 %v3287, %v3296
      %v3309 = vmul.f32 %v3295, %v3295
      %v3310 = vmul.f32 %v3296, %v3296
      %v3311 = vsub.f32 %v3305, %v3309
      %v3312 = vsub.f32 %v3306, %v3310
      %v3313 = vadd.f32 %v3311, 1e-05
      %v3314 = vadd.f32 %v3312, 1e-05
      %v3315 = vrsqrt.pop %v3313
      %v3316 = vmul.f32 %v3315, %v3313
      %v3317 = vmul.f32 %v3316, %v3315
      %v3318 = vmul.f32 0.5, %v3317
      %v3319 = vsub.f32 1.5, %v3318
      %v3320 = vmul.f32 %v3315, %v3319
      %vm3321 = vweird.f32 %v3313
      %vm3322 = vweird.f32 %v3315
      %vm3323 = vmor %vm3321, %vm3322
      %v3324 = vsel %vm3323, %v3315, %v3320
      %v3325 = vrsqrt.pop %v3314
      %v3326 = vmul.f32 %v3325, %v3314
      %v3327 = vmul.f32 %v3326, %v3325
      %v3328 = vmul.f32 0.5, %v3327
      %v3329 = vsub.f32 1.5, %v3328
      %v3330 = vmul.f32 %v3325, %v3329
      %vm3331 = vweird.f32 %v3314
      %vm3332 = vweird.f32 %v3325
      %vm3333 = vmor %vm3331, %vm3332
      %v3334 = vsel %vm3333, %v3325, %v3330
      %v3335 = vmul.f32 %v3307, %v3324
      %v3336 = vmul.f32 %v3308, %v3334
      %v3337 = vadd.f32 %v3335, 3.0
      %v3338 = vadd.f32 %v3336, 3.0
      %v3339 = vmax.f32 %v3337, 0.0
      %v3340 = vmax.f32 %v3338, 0.0
      %v3341 = vmin.f32 %v3339, 6.0
      %v3342 = vmin.f32 %v3340, 6.0
      %v3343 = vmul.f32 %v3335, %v3341
      %v3344 = vmul.f32 %v3336, %v3342
      %v3345 = vmul.f32 %v3343, 0.16666667
      %v3346 = vmul.f32 %v3344, 0.16666667
      %3348 = vset.pattern.permute.xlu0 4
      %3349 = vperm.xlu0 %3348, %v3205
      %v3350 = vpop.permute.xlu0 %3349
      %3353 = vset.pattern.permute.xlu0 4
      %3354 = vperm.xlu0 %3353, %v3206
      %v3355 = vpop.permute.xlu0 %3354
      %3359 = vrot.lane.b32.xlu0 %v3203, 60
      %v3360 = vpop.permute.xlu0 %3359
      %3361 = vrot.lane.b32.xlu0 %v3204, 60
      %v3362 = vpop.permute.xlu0 %3361
      %v3363 = vsel %vm1757, %v3360, 0
      %v3365 = vsel %vm1757, %v3362, 0
      %3367 = vmatpush.msra.mxu0 0.0
      %3368 = vmatpush.msra.mxu0 0.0
      %3369 = vmatpush.msra.mxu0 0.0
      %3370 = vmatpush.msra.mxu0 0.0
      %3371 = vmatpush.msra.mxu0 0.0
      %3372 = vmatpush.msra.mxu0 0.0
      %3373 = vmatpush.msra.mxu0 0.0
      %3374 = vmatpush.msra.mxu0 0.0
      %3375 = vmatpush.msra.mxu0 0.0
      %3376 = vmatpush.msra.mxu0 0.0
      %3377 = vmatpush.msra.mxu0 0.0
      %3378 = vmatpush.msra.mxu0 0.0
      %3379 = vmatpush.msra.mxu0 0.0
      %3380 = vmatpush.msra.mxu0 0.0
      %3381 = vmatpush.msra.mxu0 %v3346
      %3382 = vmatpush.msra.mxu0 %v3345
      %3383 = vmatmul.f32.gmra.mxu0 %v3363
      %v3384 = vpop.f32.mrf.mxu0
      %v3385 = vadd.f32 %v3350, %v3384
      %3386 = vmatmul.f32.gmra.mxu0 %v3365
      %v3387 = vpop.f32.mrf.mxu0
      %v3388 = vadd.f32 %v3355, %v3387
      %3389 = vdwg.mxu0
      %v3390 = vxor.u32 %v3385, 2147483648
      %v3391 = vxor.u32 %v3388, 2147483648
      %v3392 = vmul.f32 %v3390, 1.442695
      %v3393 = vpow.pop %v3392
      %v3394 = vmul.f32 %v3391, 1.442695
      %v3395 = vpow.pop %v3394
      %v3396 = vadd.f32 %v3393, 1.0
      %v3397 = vadd.f32 %v3395, 1.0
      %v3398 = vrcp.pop %v3396
      %v3399 = vmul.f32 %v3396, %v3398
      %v3400 = vsub.f32 1.0, %v3399
      %v3401 = vmul.f32 %v3398, %v3400
      %v3402 = vadd.f32 %v3398, %v3401
      %vm3403 = vweird.f32 %v3396
      %vm3404 = vweird.f32 %v3398
      %vm3405 = vmor %vm3403, %vm3404
      %v3406 = vsel %vm3405, %v3398, %v3402
      %v3407 = vand.u32 2147483647, %v3396
      %vm3408 = vcmp.eq.f32.partialorder %v3407, 8.507059e+37
      %v3409 = vand.u32 %v3396, 2147483648
      %v3410 = vor.u32 1.1754944e-38, %v3409
      %v3411 = vsel %vm3408, %v3410, %v3406
      %v3412 = vmul.f32 1.0, %v3411
      %v3413 = vrcp.pop %v3397
      %v3414 = vmul.f32 %v3397, %v3413
      %v3415 = vsub.f32 1.0, %v3414
      %v3416 = vmul.f32 %v3413, %v3415
      %v3417 = vadd.f32 %v3413, %v3416
      %vm3418 = vweird.f32 %v3397
      %vm3419 = vweird.f32 %v3413
      %vm3420 = vmor %vm3418, %vm3419
      %v3421 = vsel %vm3420, %v3413, %v3417
      %v3422 = vand.u32 2147483647, %v3397
      %vm3423 = vcmp.eq.f32.partialorder %v3422, 8.507059e+37
      %v3424 = vand.u32 %v3397, 2147483648
      %v3425 = vor.u32 1.1754944e-38, %v3424
      %v3426 = vsel %vm3423, %v3425, %v3421
      %v3427 = vmul.f32 1.0, %v3426
      %3428 = vset.pattern.permute.xlu0 5
      %3429 = vperm.xlu0 %3428, %v3205
      %v3430 = vpop.permute.xlu0 %3429
      %3432 = vset.pattern.permute.xlu0 5
      %3433 = vperm.xlu0 %3432, %v3206
      %v3434 = vpop.permute.xlu0 %3433
      %3436 = vrot.lane.b32.xlu0 %v3203, 44
      %v3437 = vpop.permute.xlu0 %3436
      %3438 = vrot.lane.b32.xlu0 %v3204, 44
      %v3439 = vpop.permute.xlu0 %3438
      %3442 = vrot.lane.b32.xlu0 %v3345, 112
      %v3443 = vpop.permute.xlu0 %3442
      %3444 = vrot.lane.b32.xlu0 %v3346, 112
      %v3445 = vpop.permute.xlu0 %3444
      %v3448 = vsel %vm1757, %v3437, 0
      %v3450 = vsel %vm1757, %v3439, 0
      %3452 = vmatpush.msra.mxu0 0.0
      %3453 = vmatpush.msra.mxu0 0.0
      %3454 = vmatpush.msra.mxu0 0.0
      %3455 = vmatpush.msra.mxu0 0.0
      %3456 = vmatpush.msra.mxu0 0.0
      %3457 = vmatpush.msra.mxu0 0.0
      %3458 = vmatpush.msra.mxu0 0.0
      %3459 = vmatpush.msra.mxu0 0.0
      %3460 = vmatpush.msra.mxu0 0.0
      %3461 = vmatpush.msra.mxu0 0.0
      %3462 = vmatpush.msra.mxu0 0.0
      %3463 = vmatpush.msra.mxu0 0.0
      %3464 = vmatpush.msra.mxu0 0.0
      %3465 = vmatpush.msra.mxu0 0.0
      %3466 = vmatpush.msra.mxu0 %v3445
      %3467 = vmatpush.msra.mxu0 %v3443
      %3468 = vmatmul.f32.gmra.mxu0 %v3448
      %v3469 = vpop.f32.mrf.mxu0
      %v3470 = vadd.f32 %v3430, %v3469
      %3471 = vmatmul.f32.gmra.mxu0 %v3450
      %v3472 = vpop.f32.mrf.mxu0
      %v3473 = vadd.f32 %v3434, %v3472
      %3474 = vdwg.mxu0
      %v3475 = vxor.u32 %v3470, 2147483648
      %v3476 = vxor.u32 %v3473, 2147483648
      %v3477 = vmul.f32 %v3475, 1.442695
      %v3478 = vpow.pop %v3477
      %v3479 = vmul.f32 %v3476, 1.442695
      %v3480 = vpow.pop %v3479
      %v3481 = vadd.f32 %v3478, 1.0
      %v3482 = vadd.f32 %v3480, 1.0
      %v3483 = vrcp.pop %v3481
      %v3484 = vmul.f32 %v3481, %v3483
      %v3485 = vsub.f32 1.0, %v3484
      %v3486 = vmul.f32 %v3483, %v3485
      %v3487 = vadd.f32 %v3483, %v3486
      %vm3488 = vweird.f32 %v3481
      %vm3489 = vweird.f32 %v3483
      %vm3490 = vmor %vm3488, %vm3489
      %v3491 = vsel %vm3490, %v3483, %v3487
      %v3492 = vand.u32 2147483647, %v3481
      %vm3493 = vcmp.eq.f32.partialorder %v3492, 8.507059e+37
      %v3494 = vand.u32 %v3481, 2147483648
      %v3495 = vor.u32 1.1754944e-38, %v3494
      %v3496 = vsel %vm3493, %v3495, %v3491
      %v3497 = vmul.f32 1.0, %v3496
      %v3498 = vrcp.pop %v3482
      %v3499 = vmul.f32 %v3482, %v3498
      %v3500 = vsub.f32 1.0, %v3499
      %v3501 = vmul.f32 %v3498, %v3500
      %v3502 = vadd.f32 %v3498, %v3501
      %vm3503 = vweird.f32 %v3482
      %vm3504 = vweird.f32 %v3498
      %vm3505 = vmor %vm3503, %vm3504
      %v3506 = vsel %vm3505, %v3498, %v3502
      %v3507 = vand.u32 2147483647, %v3482
      %vm3508 = vcmp.eq.f32.partialorder %v3507, 8.507059e+37
      %v3509 = vand.u32 %v3482, 2147483648
      %v3510 = vor.u32 1.1754944e-38, %v3509
      %v3511 = vsel %vm3508, %v3510, %v3506
      %v3512 = vmul.f32 1.0, %v3511
      %v3514 = vsel %vm1757, %v3497, 0
      %v3517 = vsel %vm1757, %v3512, 0
      %3519 = vmatpush.msra.mxu0 0.0
      %3520 = vmatpush.msra.mxu0 0.0
      %3521 = vmatpush.msra.mxu0 0.0
      %3522 = vmatpush.msra.mxu0 0.0
      %3523 = vmatpush.msra.mxu0 0.0
      %3524 = vmatpush.msra.mxu0 0.0
      %3525 = vmatpush.msra.mxu0 0.0
      %3526 = vmatpush.msra.mxu0 0.0
      %3527 = vmatpush.msra.mxu0 0.0
      %3528 = vmatpush.msra.mxu0 0.0
      %3529 = vmatpush.msra.mxu0 0.0
      %3530 = vmatpush.msra.mxu0 0.0
      %3531 = vmatpush.msra.mxu0 0.0
      %3532 = vmatpush.msra.mxu0 0.0
      %3533 = vmatpush.msra.mxu0 %v447
      %3534 = vmatpush.msra.mxu0 %v445
      %3535 = vmatmul.f32.gmra.mxu0 %v3514
      %v3536 = vpop.f32.mrf.mxu0
      %v3537 = vadd.f32 0.0, %v3536
      %3538 = vmatmul.f32.gmra.mxu0 %v3517
      %v3539 = vpop.f32.mrf.mxu0
      %v3540 = vadd.f32 0.0, %v3539
      %3541 = vdwg.mxu0
      %3542 = vmatpush.msra.mxu0 0.0
      %3543 = vmatpush.msra.mxu0 0.0
      %3544 = vmatpush.msra.mxu0 0.0
      %3545 = vmatpush.msra.mxu0 0.0
      %3546 = vmatpush.msra.mxu0 0.0
      %3547 = vmatpush.msra.mxu0 0.0
      %3548 = vmatpush.msra.mxu0 0.0
      %3549 = vmatpush.msra.mxu0 0.0
      %3550 = vmatpush.msra.mxu0 0.0
      %3551 = vmatpush.msra.mxu0 0.0
      %3552 = vmatpush.msra.mxu0 0.0
      %3553 = vmatpush.msra.mxu0 0.0
      %3554 = vmatpush.msra.mxu0 0.0
      %3555 = vmatpush.msra.mxu0 0.0
      %3556 = vmatpush.msra.mxu0 %v448
      %3557 = vmatpush.msra.mxu0 %v446
      %3558 = vmatmul.f32.gmra.mxu0 %v3514
      %v3559 = vpop.f32.mrf.mxu0
      %v3560 = vadd.f32 0.0, %v3559
      %3561 = vmatmul.f32.gmra.mxu0 %v3517
      %v3562 = vpop.f32.mrf.mxu0
      %v3563 = vadd.f32 0.0, %v3562
      %3564 = vdwg.mxu0
      %v3565 = vmul.f32 %v3197, %v3537
      %v3566 = vmul.f32 %v3198, %v3560
      %v3567 = vmul.f32 %v3199, %v3540
      %v3568 = vmul.f32 %v3200, %v3563
      %v3570 = vsel %vm1757, %v3412, 0
      %v3573 = vsel %vm1757, %v3427, 0
      %3575 = vmatpush.msra.mxu0 0.0
      %3576 = vmatpush.msra.mxu0 0.0
      %3577 = vmatpush.msra.mxu0 0.0
      %3578 = vmatpush.msra.mxu0 0.0
      %3579 = vmatpush.msra.mxu0 0.0
      %3580 = vmatpush.msra.mxu0 0.0
      %3581 = vmatpush.msra.mxu0 0.0
      %3582 = vmatpush.msra.mxu0 0.0
      %3583 = vmatpush.msra.mxu0 0.0
      %3584 = vmatpush.msra.mxu0 0.0
      %3585 = vmatpush.msra.mxu0 0.0
      %3586 = vmatpush.msra.mxu0 0.0
      %3587 = vmatpush.msra.mxu0 0.0
      %3588 = vmatpush.msra.mxu0 0.0
      %3589 = vmatpush.msra.mxu0 %v443
      %3590 = vmatpush.msra.mxu0 %v441
      %3591 = vmatmul.f32.gmra.mxu0 %v3570
      %v3592 = vpop.f32.mrf.mxu0
      %v3593 = vadd.f32 0.0, %v3592
      %3594 = vmatmul.f32.gmra.mxu0 %v3573
      %v3595 = vpop.f32.mrf.mxu0
      %v3596 = vadd.f32 0.0, %v3595
      %3597 = vdwg.mxu0
      %3598 = vmatpush.msra.mxu0 0.0
      %3599 = vmatpush.msra.mxu0 0.0
      %3600 = vmatpush.msra.mxu0 0.0
      %3601 = vmatpush.msra.mxu0 0.0
      %3602 = vmatpush.msra.mxu0 0.0
      %3603 = vmatpush.msra.mxu0 0.0
      %3604 = vmatpush.msra.mxu0 0.0
      %3605 = vmatpush.msra.mxu0 0.0
      %3606 = vmatpush.msra.mxu0 0.0
      %3607 = vmatpush.msra.mxu0 0.0
      %3608 = vmatpush.msra.mxu0 0.0
      %3609 = vmatpush.msra.mxu0 0.0
      %3610 = vmatpush.msra.mxu0 0.0
      %3611 = vmatpush.msra.mxu0 0.0
      %3612 = vmatpush.msra.mxu0 %v444
      %3613 = vmatpush.msra.mxu0 %v442
      %3614 = vmatmul.f32.gmra.mxu0 %v3570
      %v3615 = vpop.f32.mrf.mxu0
      %v3616 = vadd.f32 0.0, %v3615
      %3617 = vmatmul.f32.gmra.mxu0 %v3573
      %v3618 = vpop.f32.mrf.mxu0
      %v3619 = vadd.f32 0.0, %v3618
      %3620 = vdwg.mxu0
      %v3621 = vmul.f32 %v3565, %v3593
      %v3622 = vmul.f32 %v3566, %v3616
      %v3623 = vmul.f32 %v3567, %v3596
      %v3624 = vmul.f32 %v3568, %v3619
      %v3625 = vadd.f32 %v3621, %v3197
      %v3626 = vadd.f32 %v3622, %v3198
      %v3627 = vadd.f32 %v3623, %v3199
      %v3628 = vadd.f32 %v3624, %v3200
      %3629 = vset.pattern.permute.xlu0 1
      %3630 = vperm.xlu0 %3629, %v3205
      %v3631 = vpop.permute.xlu0 %3630
      %3633 = vset.pattern.permute.xlu0 1
      %3634 = vperm.xlu0 %3633, %v3206
      %v3635 = vpop.permute.xlu0 %3634
      %3637 = vrot.lane.b32.xlu0 %v3203, 104
      %v3638 = vpop.permute.xlu0 %3637
      %3639 = vrot.lane.b32.xlu0 %v3204, 104
      %v3640 = vpop.permute.xlu0 %3639
      %v3641 = vsel %vm312, %v3638, 0
      %v3643 = vsel %vm312, %v3640, 0
      %v3646 = vsel %vm319, %v3627, 0
      %v3649 = vsel %vm319, %v3628, 0
      %3651 = vmatpush.msra.mxu0 0.0
      %3652 = vmatpush.msra.mxu0 0.0
      %3653 = vmatpush.msra.mxu0 0.0
      %3654 = vmatpush.msra.mxu0 0.0
      %3655 = vmatpush.msra.mxu0 0.0
      %3656 = vmatpush.msra.mxu0 0.0
      %3657 = vmatpush.msra.mxu0 0.0
      %3658 = vmatpush.msra.mxu0 0.0
      %3659 = vmatpush.msra.mxu0 0.0
      %3660 = vmatpush.msra.mxu0 0.0
      %3661 = vmatpush.msra.mxu0 0.0
      %3662 = vmatpush.msra.mxu0 0.0
      %3663 = vmatpush.msra.mxu0 0.0
      %3664 = vmatpush.msra.mxu0 0.0
      %3665 = vmatpush.msra.mxu0 %v3646
      %3666 = vmatpush.msra.mxu0 %v3625
      %3667 = vmatmul.f32.gmra.mxu0 %v3641
      %v3668 = vpop.f32.mrf.mxu0
      %v3669 = vadd.f32 %v3631, %v3668
      %3670 = vmatmul.f32.gmra.mxu0 %v3643
      %v3671 = vpop.f32.mrf.mxu0
      %v3672 = vadd.f32 %v3635, %v3671
      %3673 = vdwg.mxu0
      %3674 = vmatpush.msra.mxu0 0.0
      %3675 = vmatpush.msra.mxu0 0.0
      %3676 = vmatpush.msra.mxu0 0.0
      %3677 = vmatpush.msra.mxu0 0.0
      %3678 = vmatpush.msra.mxu0 0.0
      %3679 = vmatpush.msra.mxu0 0.0
      %3680 = vmatpush.msra.mxu0 0.0
      %3681 = vmatpush.msra.mxu0 0.0
      %3682 = vmatpush.msra.mxu0 0.0
      %3683 = vmatpush.msra.mxu0 0.0
      %3684 = vmatpush.msra.mxu0 0.0
      %3685 = vmatpush.msra.mxu0 0.0
      %3686 = vmatpush.msra.mxu0 0.0
      %3687 = vmatpush.msra.mxu0 0.0
      %3688 = vmatpush.msra.mxu0 %v3649
      %3689 = vmatpush.msra.mxu0 %v3626
      %3690 = vmatmul.f32.gmra.mxu0 %v3641
      %v3691 = vpop.f32.mrf.mxu0
      %v3692 = vadd.f32 %v3631, %v3691
      %3693 = vmatmul.f32.gmra.mxu0 %v3643
      %v3694 = vpop.f32.mrf.mxu0
      %v3695 = vadd.f32 %v3635, %v3694
      %3696 = vdwg.mxu0
      %v3697 = vadd.f32 %v3669, %v306
      %v3698 = vadd.f32 %v3692, %v307
      %v3699 = vadd.f32 %v3672, %v308
      %v3700 = vadd.f32 %v3695, %v309
      %v3701 = vadd.f32 %v3697, %v2064
      %v3702 = vadd.f32 %v3698, %v2087
      %v3703 = vadd.f32 %v3699, %v2067
      %v3704 = vadd.f32 %v3700, %v2090
      %v3705 = vmax.f32 %v3701, 0.0
      %v3706 = vmax.f32 %v3702, 0.0
      %v3707 = vmax.f32 %v3703, 0.0
      %v3708 = vmax.f32 %v3704, 0.0
      %3709 = vst [vmem:[%s305] sm:$0xff] %v3705
      %3710 = vst [vmem:[%s305 + $0x8] sm:$0xff] %v3706
      %3711 = vst [vmem:[%s305 + $0x10] sm:$0xf] %v3707
      %3712 = vst [vmem:[%s305 + $0x18] sm:$0xf] %v3708
      %p3713 = scmp.lt.s32.totalorder %s19, 1
      %s3714 = scalar_select %p3713, %s19, 1
      %s3715 = smul.addr %s3714, 4
      %s3716 = smul.addr %s3715, 8
      %s3717 = scalar_lea.vmem %s8, %s3716
      // Predicated region
      $region53: #{double_conv_forward.1} parent=51 // pred_check
        %p3718 = pneg %p210
      $region54: #{double_conv_forward.1} parent=51 // pred_check_branch
        %3720 = sbr.rel (%p3718) target = $region56
      $region55: #{double_conv_forward.1} parent=51 // pred_region
        _
      $region56: #{double_conv_forward.1} parent=51 // pred_fallthru
        _
    $region52: #{double_conv_forward.1} parent=5 // pred_fallthru
      _
    %p3721 = scmp.le.s32.totalorder 2, %s14
    // Predicated region
    $region57: #{double_conv_forward.1} parent=5 // pred_check
      %p3722 = pneg %p3721
    $region58: #{double_conv_forward.1} parent=5 // pred_check_branch
      %3724 = sbr.rel (%p3722) target = $region60
    $region59: #{double_conv_forward.1} parent=5 // pred_region
      %s3725 = ssub.s32 %s14, 2
      // Predicated region
      $region61: #{double_conv_forward.1} parent=59 // pred_check
        %p3726 = pneg %p216
      $region62: #{double_conv_forward.1} parent=59 // pred_check_branch
        %3728 = sbr.rel (%p3726) target = $region64
      $region63: #{double_conv_forward.1} parent=59 // pred_region
        %p3729 = scmp.lt.s32.totalorder %s20, 1
        %s3730 = scalar_select %p3729, %s20, 1
        %s3731 = smul.addr %s3730, 4
        %s3732 = smul.addr %s3731, 8
        %s3733 = scalar_lea.vmem %s8, %s3732
      $region64: #{double_conv_forward.1} parent=59 // pred_fallthru
        _
    $region60: #{double_conv_forward.1} parent=5 // pred_fallthru
      _
  $region6: #{double_conv_forward.1} parent=0 // loop_footer
    %s18 = sadd.s32 1, %s14
  $region7: #{double_conv_forward.1} parent=0 // loop_footer_branch
    %13 = sbr.rel target = $region3
  $region8: #{double_conv_forward.1} parent=0 // loop_exit
    _

</llo_original>
